<compile_context>
chip_gen: v7x
topology: tpu7x:2x2x1
jax: 0.10.0
libtpu: 0.0.40
codegen_flags: <defaults>
</compile_context>

<pallas_src>
import math

import jax
import jax.numpy as jnp
from jax import lax
from jax.experimental import pallas as pl
from jax.experimental.pallas import tpu as pltpu

LANE = 128
SUBLANE = 8
GATE_PERM = (0, 1, 3, 2)  # new gate order [i, f, o, g] <- PyTorch [i, f, g, o]


def _round_up(n, m):
    return pl.cdiv(n, m) * m


def _largest_divisor_at_most(n, cap):
    cap = min(n, cap)
    for d in range(cap, 0, -1):
        if n % d == 0:
            return d
    return 1


def make_lstm_kernel(num_layers: int, Hp: int):
    """Stacked-LSTM kernel over one (batch_chunk, time_chunk) grid cell."""

    def kernel(x_ref, h0_ref, c0_ref, *rest):
        n_w = 2 * num_layers                      # (W_cat, bias) per layer
        w_refs = rest[:n_w]
        y_ref, hn_ref, cn_ref = rest[n_w:n_w + 3]
        h_sc, c_sc = rest[n_w + 3:]

        t = pl.program_id(1)                      # time-chunk index (inner axis)
        Tc = x_ref.shape[0]

        @pl.when(t == 0)
        def _():
            h_sc[...] = h0_ref[...]
            c_sc[...] = c0_ref[...]

        # Hoist (loop-invariant) weight/bias loads out of the time loop.
        w_vals = [w_refs[2 * l][...] for l in range(num_layers)]      # bf16
        b_vals = [w_refs[2 * l + 1][...] for l in range(num_layers)]  # f32

        def step(tt, carry):
            x_t = x_ref[tt]                       # (Bc, INp) f32
            for l in range(num_layers):
                h_prev = h_sc[l]                  # (Bc, Hp) f32
                c_prev = c_sc[l]                  # (Bc, Hp) f32
                # Single fused MXU matmul per layer: [x_t, h_prev] @ [Wih^T; Whh^T]
                xh = jnp.concatenate([x_t, h_prev], axis=-1).astype(jnp.bfloat16)
                gates = jnp.dot(xh, w_vals[l],
                                preferred_element_type=jnp.float32) + b_vals[l]
                # Gate order [i, f, o, g]: one contiguous sigmoid, one tanh.
                sig = jax.nn.sigmoid(gates[:, : 3 * Hp])
                g_g = jnp.tanh(gates[:, 3 * Hp:])
                i_g = sig[:, 0 * Hp:1 * Hp]
                f_g = sig[:, 1 * Hp:2 * Hp]
                o_g = sig[:, 2 * Hp:3 * Hp]
                c_new = f_g * c_prev + i_g * g_g
                h_new = o_g * jnp.tanh(c_new)
                h_sc[l] = h_new
                c_sc[l] = c_new
                x_t = h_new
            y_ref[tt] = x_t                        # lane-dense (Bc, Hp) store
            return carry

        lax.fori_loop(0, Tc, step, 0, unroll=True)

        @pl.when(t == pl.num_programs(1) - 1)
        def _():
            hn_ref[...] = h_sc[...]
            cn_ref[...] = c_sc[...]

    return kernel


def _pack_layer(wih_T, whh_T, bias, in_lp, Hp):
    """Pad + reorder gates + stack [W_ih^T; W_hh^T]; weights cast to bf16."""
    in_l = wih_T.shape[0]
    H = whh_T.shape[0]
    w_cat = jnp.zeros((in_lp + Hp, 4 * Hp), jnp.float32)
    b_p = jnp.zeros((1, 4 * Hp), jnp.float32)
    for new_k, og in enumerate(GATE_PERM):
        w_cat = w_cat.at[:in_l, new_k * Hp:new_k * Hp + H].set(
            wih_T[:, og * H:(og + 1) * H])
        w_cat = w_cat.at[in_lp:in_lp + H, new_k * Hp:new_k * Hp + H].set(
            whh_T[:, og * H:(og + 1) * H])
        b_p = b_p.at[:, new_k * Hp:new_k * Hp + H].set(
            bias[:, og * H:(og + 1) * H])
    return w_cat.astype(jnp.bfloat16), b_p


def rnndni_forward(x, h0, c0, params, *, time_chunk=32, batch_chunk=None):
    """RNNdni.forward (LSTM) via Pallas.

    x      : (T, B, input_size) f32   (time-major, batch_first=False)
    h0, c0 : (L, B, H) f32
    params : list per layer of (W_ih^T (in_l,4H), W_hh^T (H,4H), bias (1,4H)),
             PyTorch gate order [i, f, g, o], bias = b_ih + b_hh.
    returns: output (T, B, H), (h_n, c_n) each (L, B, H)
    """
    T, B, IN = x.shape
    L, _, H = h0.shape

    Hp = _round_up(H, LANE)
    INp = _round_up(IN, LANE)
    Bp = _round_up(B, SUBLANE)
    Tc = _largest_divisor_at_most(T, time_chunk)

    # Batch chunking (megacore on v7x): one chunk by default.
    if batch_chunk is not None and batch_chunk >= SUBLANE and Bp % batch_chunk == 0:
        Bc = batch_chunk
    else:
        Bc = Bp

    # Zero-pad inputs to (8,128)-aligned tiles.  Zero weight/bias padding keeps
    # the padded hidden columns exactly zero through the recurrence.
    x_p = jnp.zeros((T, Bp, INp), jnp.float32).at[:, :B, :IN].set(x)
    h0_p = jnp.zeros((L, Bp, Hp), jnp.float32).at[:, :B, :H].set(h0)
    c0_p = jnp.zeros((L, Bp, Hp), jnp.float32).at[:, :B, :H].set(c0)

    weight_args = []
    weight_specs = []
    for l, (wih_T, whh_T, b) in enumerate(params):
        in_lp = INp if l == 0 else Hp
        w_cat, b_p = _pack_layer(wih_T, whh_T, b, in_lp, Hp)
        weight_args += [w_cat, b_p]
        weight_specs += [
            pl.BlockSpec(w_cat.shape, lambda bi, ti: (0, 0)),
            pl.BlockSpec(b_p.shape, lambda bi, ti: (0, 0)),
        ]

    in_specs = [
        pl.BlockSpec((Tc, Bc, INp), lambda bi, ti: (ti, bi, 0)),   # x chunk
        pl.BlockSpec((L, Bc, Hp), lambda bi, ti: (0, bi, 0)),      # h0
        pl.BlockSpec((L, Bc, Hp), lambda bi, ti: (0, bi, 0)),      # c0
    ] + weight_specs

    out_shape = (
        jax.ShapeDtypeStruct((T, Bp, Hp), jnp.float32),
        jax.ShapeDtypeStruct((L, Bp, Hp), jnp.float32),
        jax.ShapeDtypeStruct((L, Bp, Hp), jnp.float32),
    )
    out_specs = (
        pl.BlockSpec((Tc, Bc, Hp), lambda bi, ti: (ti, bi, 0)),    # y (lane-dense)
        pl.BlockSpec((L, Bc, Hp), lambda bi, ti: (0, bi, 0)),      # h_n
        pl.BlockSpec((L, Bc, Hp), lambda bi, ti: (0, bi, 0)),      # c_n
    )

    kernel = make_lstm_kernel(L, Hp)

    y_p, hn_p, cn_p = pl.pallas_call(
        kernel,
        out_shape=out_shape,
        grid_spec=pltpu.PrefetchScalarGridSpec(
            num_scalar_prefetch=0,
            grid=(Bp // Bc, T // Tc),
            in_specs=in_specs,
            out_specs=out_specs,
            scratch_shapes=[
                pltpu.VMEM((L, Bc, Hp), jnp.float32),   # h state
                pltpu.VMEM((L, Bc, Hp), jnp.float32),   # c state
            ],
        ),
        compiler_params=pltpu.CompilerParams(
            # batch chunks independent (megacore on v7x); time is a recurrence.
            dimension_semantics=("parallel", "arbitrary"),
            vmem_limit_bytes=64 * 1024 * 1024,
        ),
    )(x_p, h0_p, c0_p, *weight_args)

    return y_p[:, :B, :H], (hn_p[:, :B, :H], cn_p[:, :B, :H])


def lstm_reference(x, h0, c0, params):
    """Pure-JAX f32 reference (mirrors torch.nn.LSTM forward, dropout=0)."""
    L, B, H = h0.shape

    def step(carry, x_t):
        h, c = carry
        inp = x_t
        new_h, new_c = [], []
        for l in range(L):
            wih_T, whh_T, b = params[l]
            gates = inp @ wih_T + h[l] @ whh_T + b
            i_g = jax.nn.sigmoid(gates[:, 0 * H:1 * H])
            f_g = jax.nn.sigmoid(gates[:, 1 * H:2 * H])
            g_g = jnp.tanh(gates[:, 2 * H:3 * H])
            o_g = jax.nn.sigmoid(gates[:, 3 * H:4 * H])
            c_l = f_g * c[l] + i_g * g_g
            h_l = o_g * jnp.tanh(c_l)
            new_h.append(h_l)
            new_c.append(c_l)
            inp = h_l
        return (jnp.stack(new_h), jnp.stack(new_c)), inp

    (hn, cn), ys = lax.scan(step, (h0, c0), x)
    return ys, (hn, cn)


def init_lstm_params(key, input_size, hidden_size, num_layers):
    """Deterministic init mimicking PyTorch LSTM: U(-1/sqrt(H), 1/sqrt(H))."""
    H = hidden_size
    bound = 1.0 / math.sqrt(H)
    params = []
    for l in range(num_layers):
        in_l = input_size if l == 0 else H
        key, k1, k2, k3, k4 = jax.random.split(key, 5)
        w_ih = jax.random.uniform(k1, (4 * H, in_l), jnp.float32, -bound, bound)
        w_hh = jax.random.uniform(k2, (4 * H, H), jnp.float32, -bound, bound)
        b_ih = jax.random.uniform(k3, (4 * H,), jnp.float32, -bound, bound)
        b_hh = jax.random.uniform(k4, (4 * H,), jnp.float32, -bound, bound)
        params.append((w_ih.T, w_hh.T, (b_ih + b_hh).reshape(1, 4 * H)))
    return params


if __name__ == "__main__":
    # Small shapes consistent with RNNdni(input_size, hidden_size, num_layers, 'LSTM')
    seq_len = 8
    batch = 4
    input_size = 16
    hidden_size = 32
    num_layers = 2

    key = jax.random.PRNGKey(0)
    kx, kh, kc, kp = jax.random.split(key, 4)

    x = jax.random.normal(kx, (seq_len, batch, input_size), jnp.float32)
    # RNNdni.init_hidden: zeros (num_layers, batch, hidden_size) for h0 and c0
    h0 = jnp.zeros((num_layers, batch, hidden_size), jnp.float32)
    c0 = jnp.zeros((num_layers, batch, hidden_size), jnp.float32)

    params = init_lstm_params(kp, input_size, hidden_size, num_layers)

    y, (hn, cn) = rnndni_forward(x, h0, c0, params)
    jax.block_until_ready((y, hn, cn))

    y_ref, (hn_ref, cn_ref) = lstm_reference(x, h0, c0, params)
    # bf16 MXU inputs (f32 accumulation) -> loosened tolerance vs f32 reference.
    assert jnp.allclose(y, y_ref, atol=2e-2, rtol=2e-2)
    assert jnp.allclose(hn, hn_ref, atol=2e-2, rtol=2e-2)
    assert jnp.allclose(cn, cn_ref, atol=2e-2, rtol=2e-2)

    print("KERNEL_OK")
</pallas_src>

<mosaic_0001>
module attributes {stable_mosaic.version = 11 : i64} {
  func.func @kernel(%arg0: i32, %arg1: i32, %arg2: memref<8x8x128xf32, #tpu.memory_space<vmem>>, %arg3: memref<2x8x128xf32, #tpu.memory_space<vmem>>, %arg4: memref<2x8x128xf32, #tpu.memory_space<vmem>>, %arg5: memref<256x512xbf16, #tpu.memory_space<vmem>>, %arg6: memref<1x512xf32, #tpu.memory_space<vmem>>, %arg7: memref<256x512xbf16, #tpu.memory_space<vmem>>, %arg8: memref<1x512xf32, #tpu.memory_space<vmem>>, %arg9: memref<8x8x128xf32, #tpu.memory_space<vmem>>, %arg10: memref<2x8x128xf32, #tpu.memory_space<vmem>>, %arg11: memref<2x8x128xf32, #tpu.memory_space<vmem>>, %arg12: memref<2x8x128xf32, #tpu.memory_space<vmem>>, %arg13: memref<2x8x128xf32, #tpu.memory_space<vmem>>) attributes {dimension_semantics = [#tpu.dimension_semantics<parallel>, #tpu.dimension_semantics<arbitrary>], iteration_bounds = array<i64: 1, 1>, scalar_prefetch = 0 : i64, scratch_operands = 2 : i64, tpu.core_type = #tpu.core_type<tc>, window_params = [{transform_indices = @transform_0, window_bounds = array<i64: 8, 8, 128>}, {transform_indices = @transform_1, window_bounds = array<i64: 2, 8, 128>}, {transform_indices = @transform_2, window_bounds = array<i64: 2, 8, 128>}, {pipeline_mode = #tpu.pipeline_mode<synchronous>, transform_indices = @transform_3, window_bounds = array<i64: 256, 512>}, {pipeline_mode = #tpu.pipeline_mode<synchronous>, transform_indices = @transform_4, window_bounds = array<i64: 1, 512>}, {pipeline_mode = #tpu.pipeline_mode<synchronous>, transform_indices = @transform_5, window_bounds = array<i64: 256, 512>}, {pipeline_mode = #tpu.pipeline_mode<synchronous>, transform_indices = @transform_6, window_bounds = array<i64: 1, 512>}, {transform_indices = @transform_7, window_bounds = array<i64: 8, 8, 128>}, {transform_indices = @transform_8, window_bounds = array<i64: 2, 8, 128>}, {transform_indices = @transform_9, window_bounds = array<i64: 2, 8, 128>}]} {
    %c0_i32 = arith.constant 0 : i32
    %0 = arith.cmpi eq, %arg1, %c0_i32 : i32
    %1 = arith.extui %0 : i1 to i32
    %c0_i32_0 = arith.constant 0 : i32
    %2 = arith.cmpi ne, %1, %c0_i32_0 : i32
    scf.if %2 {
      %c0_265 = arith.constant 0 : index
      %c0_266 = arith.constant 0 : index
      %c0_267 = arith.constant 0 : index
      %562 = vector.load %arg3[%c0_265, %c0_266, %c0_267] : memref<2x8x128xf32, #tpu.memory_space<vmem>>, vector<2x8x128xf32>
      %c0_268 = arith.constant 0 : index
      %c0_269 = arith.constant 0 : index
      %c0_270 = arith.constant 0 : index
      %563 = vector.load %arg12[%c0_268, %c0_269, %c0_270] : memref<2x8x128xf32, #tpu.memory_space<vmem>>, vector<2x8x128xf32>
      tpu.vector_store %arg12[%c0_268, %c0_269, %c0_270], %562 {strides = array<i32>} : memref<2x8x128xf32, #tpu.memory_space<vmem>>, vector<2x8x128xf32>,
      %c0_271 = arith.constant 0 : index
      %c0_272 = arith.constant 0 : index
      %c0_273 = arith.constant 0 : index
      %564 = vector.load %arg4[%c0_271, %c0_272, %c0_273] : memref<2x8x128xf32, #tpu.memory_space<vmem>>, vector<2x8x128xf32>
      %c0_274 = arith.constant 0 : index
      %c0_275 = arith.constant 0 : index
      %c0_276 = arith.constant 0 : index
      %565 = vector.load %arg13[%c0_274, %c0_275, %c0_276] : memref<2x8x128xf32, #tpu.memory_space<vmem>>, vector<2x8x128xf32>
      tpu.vector_store %arg13[%c0_274, %c0_275, %c0_276], %564 {strides = array<i32>} : memref<2x8x128xf32, #tpu.memory_space<vmem>>, vector<2x8x128xf32>,
    } else {
    }
    %c0 = arith.constant 0 : index
    %c0_1 = arith.constant 0 : index
    %3 = vector.load %arg5[%c0, %c0_1] : memref<256x512xbf16, #tpu.memory_space<vmem>>, vector<256x512xbf16>
    %c0_2 = arith.constant 0 : index
    %c0_3 = arith.constant 0 : index
    %4 = vector.load %arg7[%c0_2, %c0_3] : memref<256x512xbf16, #tpu.memory_space<vmem>>, vector<256x512xbf16>
    %c0_4 = arith.constant 0 : index
    %c0_5 = arith.constant 0 : index
    %5 = vector.load %arg6[%c0_4, %c0_5] : memref<1x512xf32, #tpu.memory_space<vmem>>, vector<1x512xf32>
    %c0_6 = arith.constant 0 : index
    %c0_7 = arith.constant 0 : index
    %6 = vector.load %arg8[%c0_6, %c0_7] : memref<1x512xf32, #tpu.memory_space<vmem>>, vector<1x512xf32>
    %c0_i32_8 = arith.constant 0 : i32
    %7 = arith.index_cast %c0_i32_8 : i32 to index
    %c0_9 = arith.constant 0 : index
    %c0_10 = arith.constant 0 : index
    %8 = vector.load %arg2[%7, %c0_9, %c0_10] : memref<8x8x128xf32, #tpu.memory_space<vmem>>, vector<1x8x128xf32>
    %9 = vector.shape_cast %8 : vector<1x8x128xf32> to vector<8x128xf32>
    %c0_11 = arith.constant 0 : index
    %c0_12 = arith.constant 0 : index
    %c0_13 = arith.constant 0 : index
    %10 = vector.load %arg12[%c0_11, %c0_12, %c0_13] : memref<2x8x128xf32, #tpu.memory_space<vmem>>, vector<1x8x128xf32>
    %11 = vector.shape_cast %10 : vector<1x8x128xf32> to vector<8x128xf32>
    %c0_14 = arith.constant 0 : index
    %c0_15 = arith.constant 0 : index
    %c0_16 = arith.constant 0 : index
    %12 = vector.load %arg13[%c0_14, %c0_15, %c0_16] : memref<2x8x128xf32, #tpu.memory_space<vmem>>, vector<1x8x128xf32>
    %13 = vector.shape_cast %12 : vector<1x8x128xf32> to vector<8x128xf32>
    %14 = tpu.concatenate %9, %11 in 1 : vector<8x128xf32>, vector<8x128xf32> -> vector<8x256xf32>
    %15 = arith.truncf %14 : vector<8x256xf32> to vector<8x256xbf16>
    %cst = arith.constant dense<0.000000e+00> : vector<8x512xf32>
    %16 = tpu.matmul %15, %3, %cst {dimension_numbers = #tpu.dot_dimension_numbers<[1], [0], [0], [1], [0, 0, 1, 1], [], []>} : vector<8x256xbf16>, vector<256x512xbf16>, vector<8x512xf32> -> vector<8x512xf32>
    %17 = vector.broadcast %5 : vector<1x512xf32> to vector<8x512xf32>
    %18 = arith.addf %16, %17 : vector<8x512xf32>
    %19 = vector.extract_strided_slice %18 {offsets = [0, 0], sizes = [8, 384], strides = [1, 1]} : vector<8x512xf32> to vector<8x384xf32>
    %20 = arith.negf %19 : vector<8x384xf32>
    %21 = math.exp %20 : vector<8x384xf32>
    %cst_17 = arith.constant 1.000000e+00 : f32
    %22 = vector.broadcast %cst_17 : f32 to vector<8x384xf32>
    %23 = arith.addf %22, %21 : vector<8x384xf32>
    %24 = arith.divf %22, %23 : vector<8x384xf32>
    %25 = vector.extract_strided_slice %18 {offsets = [0, 384], sizes = [8, 128], strides = [1, 1]} : vector<8x512xf32> to vector<8x128xf32>
    %26 = math.tanh %25 : vector<8x128xf32>
    %27 = vector.extract_strided_slice %24 {offsets = [0, 0], sizes = [8, 128], strides = [1, 1]} : vector<8x384xf32> to vector<8x128xf32>
    %28 = vector.extract_strided_slice %24 {offsets = [0, 128], sizes = [8, 128], strides = [1, 1]} : vector<8x384xf32> to vector<8x128xf32>
    %29 = vector.extract_strided_slice %24 {offsets = [0, 256], sizes = [8, 128], strides = [1, 1]} : vector<8x384xf32> to vector<8x128xf32>
    %30 = arith.mulf %28, %13 : vector<8x128xf32>
    %31 = arith.mulf %27, %26 : vector<8x128xf32>
    %32 = arith.addf %30, %31 : vector<8x128xf32>
    %33 = math.tanh %32 : vector<8x128xf32>
    %34 = arith.mulf %29, %33 : vector<8x128xf32>
    %c0_18 = arith.constant 0 : index
    %c0_19 = arith.constant 0 : index
    %c0_20 = arith.constant 0 : index
    %35 = vector.load %arg12[%c0_18, %c0_19, %c0_20] : memref<2x8x128xf32, #tpu.memory_space<vmem>>, vector<1x8x128xf32>
    %36 = vector.shape_cast %35 : vector<1x8x128xf32> to vector<8x128xf32>
    %37 = vector.shape_cast %34 : vector<8x128xf32> to vector<1x8x128xf32>
    tpu.vector_store %arg12[%c0_18, %c0_19, %c0_20], %37 {strides = array<i32>} : memref<2x8x128xf32, #tpu.memory_space<vmem>>, vector<1x8x128xf32>,
    %c0_21 = arith.constant 0 : index
    %c0_22 = arith.constant 0 : index
    %c0_23 = arith.constant 0 : index
    %38 = vector.load %arg13[%c0_21, %c0_22, %c0_23] : memref<2x8x128xf32, #tpu.memory_space<vmem>>, vector<1x8x128xf32>
    %39 = vector.shape_cast %38 : vector<1x8x128xf32> to vector<8x128xf32>
    %40 = vector.shape_cast %32 : vector<8x128xf32> to vector<1x8x128xf32>
    tpu.vector_store %arg13[%c0_21, %c0_22, %c0_23], %40 {strides = array<i32>} : memref<2x8x128xf32, #tpu.memory_space<vmem>>, vector<1x8x128xf32>,
    %c1 = arith.constant 1 : index
    %c0_24 = arith.constant 0 : index
    %c0_25 = arith.constant 0 : index
    %41 = vector.load %arg12[%c1, %c0_24, %c0_25] : memref<2x8x128xf32, #tpu.memory_space<vmem>>, vector<1x8x128xf32>
    %42 = vector.shape_cast %41 : vector<1x8x128xf32> to vector<8x128xf32>
    %c1_26 = arith.constant 1 : index
    %c0_27 = arith.constant 0 : index
    %c0_28 = arith.constant 0 : index
    %43 = vector.load %arg13[%c1_26, %c0_27, %c0_28] : memref<2x8x128xf32, #tpu.memory_space<vmem>>, vector<1x8x128xf32>
    %44 = vector.shape_cast %43 : vector<1x8x128xf32> to vector<8x128xf32>
    %45 = tpu.concatenate %34, %42 in 1 : vector<8x128xf32>, vector<8x128xf32> -> vector<8x256xf32>
    %46 = arith.truncf %45 : vector<8x256xf32> to vector<8x256xbf16>
    %cst_29 = arith.constant dense<0.000000e+00> : vector<8x512xf32>
    %47 = tpu.matmul %46, %4, %cst_29 {dimension_numbers = #tpu.dot_dimension_numbers<[1], [0], [0], [1], [0, 0, 1, 1], [], []>} : vector<8x256xbf16>, vector<256x512xbf16>, vector<8x512xf32> -> vector<8x512xf32>
    %48 = vector.broadcast %6 : vector<1x512xf32> to vector<8x512xf32>
    %49 = arith.addf %47, %48 : vector<8x512xf32>
    %50 = vector.extract_strided_slice %49 {offsets = [0, 0], sizes = [8, 384], strides = [1, 1]} : vector<8x512xf32> to vector<8x384xf32>
    %51 = arith.negf %50 : vector<8x384xf32>
    %52 = math.exp %51 : vector<8x384xf32>
    %cst_30 = arith.constant 1.000000e+00 : f32
    %53 = vector.broadcast %cst_30 : f32 to vector<8x384xf32>
    %54 = arith.addf %53, %52 : vector<8x384xf32>
    %55 = arith.divf %53, %54 : vector<8x384xf32>
    %56 = vector.extract_strided_slice %49 {offsets = [0, 384], sizes = [8, 128], strides = [1, 1]} : vector<8x512xf32> to vector<8x128xf32>
    %57 = math.tanh %56 : vector<8x128xf32>
    %58 = vector.extract_strided_slice %55 {offsets = [0, 0], sizes = [8, 128], strides = [1, 1]} : vector<8x384xf32> to vector<8x128xf32>
    %59 = vector.extract_strided_slice %55 {offsets = [0, 128], sizes = [8, 128], strides = [1, 1]} : vector<8x384xf32> to vector<8x128xf32>
    %60 = vector.extract_strided_slice %55 {offsets = [0, 256], sizes = [8, 128], strides = [1, 1]} : vector<8x384xf32> to vector<8x128xf32>
    %61 = arith.mulf %59, %44 : vector<8x128xf32>
    %62 = arith.mulf %58, %57 : vector<8x128xf32>
    %63 = arith.addf %61, %62 : vector<8x128xf32>
    %64 = math.tanh %63 : vector<8x128xf32>
    %65 = arith.mulf %60, %64 : vector<8x128xf32>
    %c1_31 = arith.constant 1 : index
    %c0_32 = arith.constant 0 : index
    %c0_33 = arith.constant 0 : index
    %66 = vector.load %arg12[%c1_31, %c0_32, %c0_33] : memref<2x8x128xf32, #tpu.memory_space<vmem>>, vector<1x8x128xf32>
    %67 = vector.shape_cast %66 : vector<1x8x128xf32> to vector<8x128xf32>
    %68 = vector.shape_cast %65 : vector<8x128xf32> to vector<1x8x128xf32>
    tpu.vector_store %arg12[%c1_31, %c0_32, %c0_33], %68 {strides = array<i32>} : memref<2x8x128xf32, #tpu.memory_space<vmem>>, vector<1x8x128xf32>,
    %c1_34 = arith.constant 1 : index
    %c0_35 = arith.constant 0 : index
    %c0_36 = arith.constant 0 : index
    %69 = vector.load %arg13[%c1_34, %c0_35, %c0_36] : memref<2x8x128xf32, #tpu.memory_space<vmem>>, vector<1x8x128xf32>
    %70 = vector.shape_cast %69 : vector<1x8x128xf32> to vector<8x128xf32>
    %71 = vector.shape_cast %63 : vector<8x128xf32> to vector<1x8x128xf32>
    tpu.vector_store %arg13[%c1_34, %c0_35, %c0_36], %71 {strides = array<i32>} : memref<2x8x128xf32, #tpu.memory_space<vmem>>, vector<1x8x128xf32>,
    %72 = arith.index_cast %c0_i32_8 : i32 to index
    %c0_37 = arith.constant 0 : index
    %c0_38 = arith.constant 0 : index
    %73 = vector.load %arg9[%72, %c0_37, %c0_38] : memref<8x8x128xf32, #tpu.memory_space<vmem>>, vector<1x8x128xf32>
    %74 = vector.shape_cast %73 : vector<1x8x128xf32> to vector<8x128xf32>
    %75 = vector.shape_cast %65 : vector<8x128xf32> to vector<1x8x128xf32>
    tpu.vector_store %arg9[%72, %c0_37, %c0_38], %75 {strides = array<i32>} : memref<8x8x128xf32, #tpu.memory_space<vmem>>, vector<1x8x128xf32>,
    %c1_i32 = arith.constant 1 : i32
    %76 = arith.index_cast %c1_i32 : i32 to index
    %c0_39 = arith.constant 0 : index
    %c0_40 = arith.constant 0 : index
    %77 = vector.load %arg2[%76, %c0_39, %c0_40] : memref<8x8x128xf32, #tpu.memory_space<vmem>>, vector<1x8x128xf32>
    %78 = vector.shape_cast %77 : vector<1x8x128xf32> to vector<8x128xf32>
    %c0_41 = arith.constant 0 : index
    %c0_42 = arith.constant 0 : index
    %c0_43 = arith.constant 0 : index
    %79 = vector.load %arg12[%c0_41, %c0_42, %c0_43] : memref<2x8x128xf32, #tpu.memory_space<vmem>>, vector<1x8x128xf32>
    %80 = vector.shape_cast %79 : vector<1x8x128xf32> to vector<8x128xf32>
    %c0_44 = arith.constant 0 : index
    %c0_45 = arith.constant 0 : index
    %c0_46 = arith.constant 0 : index
    %81 = vector.load %arg13[%c0_44, %c0_45, %c0_46] : memref<2x8x128xf32, #tpu.memory_space<vmem>>, vector<1x8x128xf32>
    %82 = vector.shape_cast %81 : vector<1x8x128xf32> to vector<8x128xf32>
    %83 = tpu.concatenate %78, %80 in 1 : vector<8x128xf32>, vector<8x128xf32> -> vector<8x256xf32>
    %84 = arith.truncf %83 : vector<8x256xf32> to vector<8x256xbf16>
    %cst_47 = arith.constant dense<0.000000e+00> : vector<8x512xf32>
    %85 = tpu.matmul %84, %3, %cst_47 {dimension_numbers = #tpu.dot_dimension_numbers<[1], [0], [0], [1], [0, 0, 1, 1], [], []>} : vector<8x256xbf16>, vector<256x512xbf16>, vector<8x512xf32> -> vector<8x512xf32>
    %86 = vector.broadcast %5 : vector<1x512xf32> to vector<8x512xf32>
    %87 = arith.addf %85, %86 : vector<8x512xf32>
    %88 = vector.extract_strided_slice %87 {offsets = [0, 0], sizes = [8, 384], strides = [1, 1]} : vector<8x512xf32> to vector<8x384xf32>
    %89 = arith.negf %88 : vector<8x384xf32>
    %90 = math.exp %89 : vector<8x384xf32>
    %cst_48 = arith.constant 1.000000e+00 : f32
    %91 = vector.broadcast %cst_48 : f32 to vector<8x384xf32>
    %92 = arith.addf %91, %90 : vector<8x384xf32>
    %93 = arith.divf %91, %92 : vector<8x384xf32>
    %94 = vector.extract_strided_slice %87 {offsets = [0, 384], sizes = [8, 128], strides = [1, 1]} : vector<8x512xf32> to vector<8x128xf32>
    %95 = math.tanh %94 : vector<8x128xf32>
    %96 = vector.extract_strided_slice %93 {offsets = [0, 0], sizes = [8, 128], strides = [1, 1]} : vector<8x384xf32> to vector<8x128xf32>
    %97 = vector.extract_strided_slice %93 {offsets = [0, 128], sizes = [8, 128], strides = [1, 1]} : vector<8x384xf32> to vector<8x128xf32>
    %98 = vector.extract_strided_slice %93 {offsets = [0, 256], sizes = [8, 128], strides = [1, 1]} : vector<8x384xf32> to vector<8x128xf32>
    %99 = arith.mulf %97, %82 : vector<8x128xf32>
    %100 = arith.mulf %96, %95 : vector<8x128xf32>
    %101 = arith.addf %99, %100 : vector<8x128xf32>
    %102 = math.tanh %101 : vector<8x128xf32>
    %103 = arith.mulf %98, %102 : vector<8x128xf32>
    %c0_49 = arith.constant 0 : index
    %c0_50 = arith.constant 0 : index
    %c0_51 = arith.constant 0 : index
    %104 = vector.load %arg12[%c0_49, %c0_50, %c0_51] : memref<2x8x128xf32, #tpu.memory_space<vmem>>, vector<1x8x128xf32>
    %105 = vector.shape_cast %104 : vector<1x8x128xf32> to vector<8x128xf32>
    %106 = vector.shape_cast %103 : vector<8x128xf32> to vector<1x8x128xf32>
    tpu.vector_store %arg12[%c0_49, %c0_50, %c0_51], %106 {strides = array<i32>} : memref<2x8x128xf32, #tpu.memory_space<vmem>>, vector<1x8x128xf32>,
    %c0_52 = arith.constant 0 : index
    %c0_53 = arith.constant 0 : index
    %c0_54 = arith.constant 0 : index
    %107 = vector.load %arg13[%c0_52, %c0_53, %c0_54] : memref<2x8x128xf32, #tpu.memory_space<vmem>>, vector<1x8x128xf32>
    %108 = vector.shape_cast %107 : vector<1x8x128xf32> to vector<8x128xf32>
    %109 = vector.shape_cast %101 : vector<8x128xf32> to vector<1x8x128xf32>
    tpu.vector_store %arg13[%c0_52, %c0_53, %c0_54], %109 {strides = array<i32>} : memref<2x8x128xf32, #tpu.memory_space<vmem>>, vector<1x8x128xf32>,
    %c1_55 = arith.constant 1 : index
    %c0_56 = arith.constant 0 : index
    %c0_57 = arith.constant 0 : index
    %110 = vector.load %arg12[%c1_55, %c0_56, %c0_57] : memref<2x8x128xf32, #tpu.memory_space<vmem>>, vector<1x8x128xf32>
    %111 = vector.shape_cast %110 : vector<1x8x128xf32> to vector<8x128xf32>
    %c1_58 = arith.constant 1 : index
    %c0_59 = arith.constant 0 : index
    %c0_60 = arith.constant 0 : index
    %112 = vector.load %arg13[%c1_58, %c0_59, %c0_60] : memref<2x8x128xf32, #tpu.memory_space<vmem>>, vector<1x8x128xf32>
    %113 = vector.shape_cast %112 : vector<1x8x128xf32> to vector<8x128xf32>
    %114 = tpu.concatenate %103, %111 in 1 : vector<8x128xf32>, vector<8x128xf32> -> vector<8x256xf32>
    %115 = arith.truncf %114 : vector<8x256xf32> to vector<8x256xbf16>
    %cst_61 = arith.constant dense<0.000000e+00> : vector<8x512xf32>
    %116 = tpu.matmul %115, %4, %cst_61 {dimension_numbers = #tpu.dot_dimension_numbers<[1], [0], [0], [1], [0, 0, 1, 1], [], []>} : vector<8x256xbf16>, vector<256x512xbf16>, vector<8x512xf32> -> vector<8x512xf32>
    %117 = vector.broadcast %6 : vector<1x512xf32> to vector<8x512xf32>
    %118 = arith.addf %116, %117 : vector<8x512xf32>
    %119 = vector.extract_strided_slice %118 {offsets = [0, 0], sizes = [8, 384], strides = [1, 1]} : vector<8x512xf32> to vector<8x384xf32>
    %120 = arith.negf %119 : vector<8x384xf32>
    %121 = math.exp %120 : vector<8x384xf32>
    %cst_62 = arith.constant 1.000000e+00 : f32
    %122 = vector.broadcast %cst_62 : f32 to vector<8x384xf32>
    %123 = arith.addf %122, %121 : vector<8x384xf32>
    %124 = arith.divf %122, %123 : vector<8x384xf32>
    %125 = vector.extract_strided_slice %118 {offsets = [0, 384], sizes = [8, 128], strides = [1, 1]} : vector<8x512xf32> to vector<8x128xf32>
    %126 = math.tanh %125 : vector<8x128xf32>
    %127 = vector.extract_strided_slice %124 {offsets = [0, 0], sizes = [8, 128], strides = [1, 1]} : vector<8x384xf32> to vector<8x128xf32>
    %128 = vector.extract_strided_slice %124 {offsets = [0, 128], sizes = [8, 128], strides = [1, 1]} : vector<8x384xf32> to vector<8x128xf32>
    %129 = vector.extract_strided_slice %124 {offsets = [0, 256], sizes = [8, 128], strides = [1, 1]} : vector<8x384xf32> to vector<8x128xf32>
    %130 = arith.mulf %128, %113 : vector<8x128xf32>
    %131 = arith.mulf %127, %126 : vector<8x128xf32>
    %132 = arith.addf %130, %131 : vector<8x128xf32>
    %133 = math.tanh %132 : vector<8x128xf32>
    %134 = arith.mulf %129, %133 : vector<8x128xf32>
    %c1_63 = arith.constant 1 : index
    %c0_64 = arith.constant 0 : index
    %c0_65 = arith.constant 0 : index
    %135 = vector.load %arg12[%c1_63, %c0_64, %c0_65] : memref<2x8x128xf32, #tpu.memory_space<vmem>>, vector<1x8x128xf32>
    %136 = vector.shape_cast %135 : vector<1x8x128xf32> to vector<8x128xf32>
    %137 = vector.shape_cast %134 : vector<8x128xf32> to vector<1x8x128xf32>
    tpu.vector_store %arg12[%c1_63, %c0_64, %c0_65], %137 {strides = array<i32>} : memref<2x8x128xf32, #tpu.memory_space<vmem>>, vector<1x8x128xf32>,
    %c1_66 = arith.constant 1 : index
    %c0_67 = arith.constant 0 : index
    %c0_68 = arith.constant 0 : index
    %138 = vector.load %arg13[%c1_66, %c0_67, %c0_68] : memref<2x8x128xf32, #tpu.memory_space<vmem>>, vector<1x8x128xf32>
    %139 = vector.shape_cast %138 : vector<1x8x128xf32> to vector<8x128xf32>
    %140 = vector.shape_cast %132 : vector<8x128xf32> to vector<1x8x128xf32>
    tpu.vector_store %arg13[%c1_66, %c0_67, %c0_68], %140 {strides = array<i32>} : memref<2x8x128xf32, #tpu.memory_space<vmem>>, vector<1x8x128xf32>,
    %141 = arith.index_cast %c1_i32 : i32 to index
    %c0_69 = arith.constant 0 : index
    %c0_70 = arith.constant 0 : index
    %142 = vector.load %arg9[%141, %c0_69, %c0_70] : memref<8x8x128xf32, #tpu.memory_space<vmem>>, vector<1x8x128xf32>
    %143 = vector.shape_cast %142 : vector<1x8x128xf32> to vector<8x128xf32>
    %144 = vector.shape_cast %134 : vector<8x128xf32> to vector<1x8x128xf32>
    tpu.vector_store %arg9[%141, %c0_69, %c0_70], %144 {strides = array<i32>} : memref<8x8x128xf32, #tpu.memory_space<vmem>>, vector<1x8x128xf32>,
    %c2_i32 = arith.constant 2 : i32
    %145 = arith.index_cast %c2_i32 : i32 to index
    %c0_71 = arith.constant 0 : index
    %c0_72 = arith.constant 0 : index
    %146 = vector.load %arg2[%145, %c0_71, %c0_72] : memref<8x8x128xf32, #tpu.memory_space<vmem>>, vector<1x8x128xf32>
    %147 = vector.shape_cast %146 : vector<1x8x128xf32> to vector<8x128xf32>
    %c0_73 = arith.constant 0 : index
    %c0_74 = arith.constant 0 : index
    %c0_75 = arith.constant 0 : index
    %148 = vector.load %arg12[%c0_73, %c0_74, %c0_75] : memref<2x8x128xf32, #tpu.memory_space<vmem>>, vector<1x8x128xf32>
    %149 = vector.shape_cast %148 : vector<1x8x128xf32> to vector<8x128xf32>
    %c0_76 = arith.constant 0 : index
    %c0_77 = arith.constant 0 : index
    %c0_78 = arith.constant 0 : index
    %150 = vector.load %arg13[%c0_76, %c0_77, %c0_78] : memref<2x8x128xf32, #tpu.memory_space<vmem>>, vector<1x8x128xf32>
    %151 = vector.shape_cast %150 : vector<1x8x128xf32> to vector<8x128xf32>
    %152 = tpu.concatenate %147, %149 in 1 : vector<8x128xf32>, vector<8x128xf32> -> vector<8x256xf32>
    %153 = arith.truncf %152 : vector<8x256xf32> to vector<8x256xbf16>
    %cst_79 = arith.constant dense<0.000000e+00> : vector<8x512xf32>
    %154 = tpu.matmul %153, %3, %cst_79 {dimension_numbers = #tpu.dot_dimension_numbers<[1], [0], [0], [1], [0, 0, 1, 1], [], []>} : vector<8x256xbf16>, vector<256x512xbf16>, vector<8x512xf32> -> vector<8x512xf32>
    %155 = vector.broadcast %5 : vector<1x512xf32> to vector<8x512xf32>
    %156 = arith.addf %154, %155 : vector<8x512xf32>
    %157 = vector.extract_strided_slice %156 {offsets = [0, 0], sizes = [8, 384], strides = [1, 1]} : vector<8x512xf32> to vector<8x384xf32>
    %158 = arith.negf %157 : vector<8x384xf32>
    %159 = math.exp %158 : vector<8x384xf32>
    %cst_80 = arith.constant 1.000000e+00 : f32
    %160 = vector.broadcast %cst_80 : f32 to vector<8x384xf32>
    %161 = arith.addf %160, %159 : vector<8x384xf32>
    %162 = arith.divf %160, %161 : vector<8x384xf32>
    %163 = vector.extract_strided_slice %156 {offsets = [0, 384], sizes = [8, 128], strides = [1, 1]} : vector<8x512xf32> to vector<8x128xf32>
    %164 = math.tanh %163 : vector<8x128xf32>
    %165 = vector.extract_strided_slice %162 {offsets = [0, 0], sizes = [8, 128], strides = [1, 1]} : vector<8x384xf32> to vector<8x128xf32>
    %166 = vector.extract_strided_slice %162 {offsets = [0, 128], sizes = [8, 128], strides = [1, 1]} : vector<8x384xf32> to vector<8x128xf32>
    %167 = vector.extract_strided_slice %162 {offsets = [0, 256], sizes = [8, 128], strides = [1, 1]} : vector<8x384xf32> to vector<8x128xf32>
    %168 = arith.mulf %166, %151 : vector<8x128xf32>
    %169 = arith.mulf %165, %164 : vector<8x128xf32>
    %170 = arith.addf %168, %169 : vector<8x128xf32>
    %171 = math.tanh %170 : vector<8x128xf32>
    %172 = arith.mulf %167, %171 : vector<8x128xf32>
    %c0_81 = arith.constant 0 : index
    %c0_82 = arith.constant 0 : index
    %c0_83 = arith.constant 0 : index
    %173 = vector.load %arg12[%c0_81, %c0_82, %c0_83] : memref<2x8x128xf32, #tpu.memory_space<vmem>>, vector<1x8x128xf32>
    %174 = vector.shape_cast %173 : vector<1x8x128xf32> to vector<8x128xf32>
    %175 = vector.shape_cast %172 : vector<8x128xf32> to vector<1x8x128xf32>
    tpu.vector_store %arg12[%c0_81, %c0_82, %c0_83], %175 {strides = array<i32>} : memref<2x8x128xf32, #tpu.memory_space<vmem>>, vector<1x8x128xf32>,
    %c0_84 = arith.constant 0 : index
    %c0_85 = arith.constant 0 : index
    %c0_86 = arith.constant 0 : index
    %176 = vector.load %arg13[%c0_84, %c0_85, %c0_86] : memref<2x8x128xf32, #tpu.memory_space<vmem>>, vector<1x8x128xf32>
    %177 = vector.shape_cast %176 : vector<1x8x128xf32> to vector<8x128xf32>
    %178 = vector.shape_cast %170 : vector<8x128xf32> to vector<1x8x128xf32>
    tpu.vector_store %arg13[%c0_84, %c0_85, %c0_86], %178 {strides = array<i32>} : memref<2x8x128xf32, #tpu.memory_space<vmem>>, vector<1x8x128xf32>,
    %c1_87 = arith.constant 1 : index
    %c0_88 = arith.constant 0 : index
    %c0_89 = arith.constant 0 : index
    %179 = vector.load %arg12[%c1_87, %c0_88, %c0_89] : memref<2x8x128xf32, #tpu.memory_space<vmem>>, vector<1x8x128xf32>
    %180 = vector.shape_cast %179 : vector<1x8x128xf32> to vector<8x128xf32>
    %c1_90 = arith.constant 1 : index
    %c0_91 = arith.constant 0 : index
    %c0_92 = arith.constant 0 : index
    %181 = vector.load %arg13[%c1_90, %c0_91, %c0_92] : memref<2x8x128xf32, #tpu.memory_space<vmem>>, vector<1x8x128xf32>
    %182 = vector.shape_cast %181 : vector<1x8x128xf32> to vector<8x128xf32>
    %183 = tpu.concatenate %172, %180 in 1 : vector<8x128xf32>, vector<8x128xf32> -> vector<8x256xf32>
    %184 = arith.truncf %183 : vector<8x256xf32> to vector<8x256xbf16>
    %cst_93 = arith.constant dense<0.000000e+00> : vector<8x512xf32>
    %185 = tpu.matmul %184, %4, %cst_93 {dimension_numbers = #tpu.dot_dimension_numbers<[1], [0], [0], [1], [0, 0, 1, 1], [], []>} : vector<8x256xbf16>, vector<256x512xbf16>, vector<8x512xf32> -> vector<8x512xf32>
    %186 = vector.broadcast %6 : vector<1x512xf32> to vector<8x512xf32>
    %187 = arith.addf %185, %186 : vector<8x512xf32>
    %188 = vector.extract_strided_slice %187 {offsets = [0, 0], sizes = [8, 384], strides = [1, 1]} : vector<8x512xf32> to vector<8x384xf32>
    %189 = arith.negf %188 : vector<8x384xf32>
    %190 = math.exp %189 : vector<8x384xf32>
    %cst_94 = arith.constant 1.000000e+00 : f32
    %191 = vector.broadcast %cst_94 : f32 to vector<8x384xf32>
    %192 = arith.addf %191, %190 : vector<8x384xf32>
    %193 = arith.divf %191, %192 : vector<8x384xf32>
    %194 = vector.extract_strided_slice %187 {offsets = [0, 384], sizes = [8, 128], strides = [1, 1]} : vector<8x512xf32> to vector<8x128xf32>
    %195 = math.tanh %194 : vector<8x128xf32>
    %196 = vector.extract_strided_slice %193 {offsets = [0, 0], sizes = [8, 128], strides = [1, 1]} : vector<8x384xf32> to vector<8x128xf32>
    %197 = vector.extract_strided_slice %193 {offsets = [0, 128], sizes = [8, 128], strides = [1, 1]} : vector<8x384xf32> to vector<8x128xf32>
    %198 = vector.extract_strided_slice %193 {offsets = [0, 256], sizes = [8, 128], strides = [1, 1]} : vector<8x384xf32> to vector<8x128xf32>
    %199 = arith.mulf %197, %182 : vector<8x128xf32>
    %200 = arith.mulf %196, %195 : vector<8x128xf32>
    %201 = arith.addf %199, %200 : vector<8x128xf32>
    %202 = math.tanh %201 : vector<8x128xf32>
    %203 = arith.mulf %198, %202 : vector<8x128xf32>
    %c1_95 = arith.constant 1 : index
    %c0_96 = arith.constant 0 : index
    %c0_97 = arith.constant 0 : index
    %204 = vector.load %arg12[%c1_95, %c0_96, %c0_97] : memref<2x8x128xf32, #tpu.memory_space<vmem>>, vector<1x8x128xf32>
    %205 = vector.shape_cast %204 : vector<1x8x128xf32> to vector<8x128xf32>
    %206 = vector.shape_cast %203 : vector<8x128xf32> to vector<1x8x128xf32>
    tpu.vector_store %arg12[%c1_95, %c0_96, %c0_97], %206 {strides = array<i32>} : memref<2x8x128xf32, #tpu.memory_space<vmem>>, vector<1x8x128xf32>,
    %c1_98 = arith.constant 1 : index
    %c0_99 = arith.constant 0 : index
    %c0_100 = arith.constant 0 : index
    %207 = vector.load %arg13[%c1_98, %c0_99, %c0_100] : memref<2x8x128xf32, #tpu.memory_space<vmem>>, vector<1x8x128xf32>
    %208 = vector.shape_cast %207 : vector<1x8x128xf32> to vector<8x128xf32>
    %209 = vector.shape_cast %201 : vector<8x128xf32> to vector<1x8x128xf32>
    tpu.vector_store %arg13[%c1_98, %c0_99, %c0_100], %209 {strides = array<i32>} : memref<2x8x128xf32, #tpu.memory_space<vmem>>, vector<1x8x128xf32>,
    %210 = arith.index_cast %c2_i32 : i32 to index
    %c0_101 = arith.constant 0 : index
    %c0_102 = arith.constant 0 : index
    %211 = vector.load %arg9[%210, %c0_101, %c0_102] : memref<8x8x128xf32, #tpu.memory_space<vmem>>, vector<1x8x128xf32>
    %212 = vector.shape_cast %211 : vector<1x8x128xf32> to vector<8x128xf32>
    %213 = vector.shape_cast %203 : vector<8x128xf32> to vector<1x8x128xf32>
    tpu.vector_store %arg9[%210, %c0_101, %c0_102], %213 {strides = array<i32>} : memref<8x8x128xf32, #tpu.memory_space<vmem>>, vector<1x8x128xf32>,
    %c3_i32 = arith.constant 3 : i32
    %214 = arith.index_cast %c3_i32 : i32 to index
    %c0_103 = arith.constant 0 : index
    %c0_104 = arith.constant 0 : index
    %215 = vector.load %arg2[%214, %c0_103, %c0_104] : memref<8x8x128xf32, #tpu.memory_space<vmem>>, vector<1x8x128xf32>
    %216 = vector.shape_cast %215 : vector<1x8x128xf32> to vector<8x128xf32>
    %c0_105 = arith.constant 0 : index
    %c0_106 = arith.constant 0 : index
    %c0_107 = arith.constant 0 : index
    %217 = vector.load %arg12[%c0_105, %c0_106, %c0_107] : memref<2x8x128xf32, #tpu.memory_space<vmem>>, vector<1x8x128xf32>
    %218 = vector.shape_cast %217 : vector<1x8x128xf32> to vector<8x128xf32>
    %c0_108 = arith.constant 0 : index
    %c0_109 = arith.constant 0 : index
    %c0_110 = arith.constant 0 : index
    %219 = vector.load %arg13[%c0_108, %c0_109, %c0_110] : memref<2x8x128xf32, #tpu.memory_space<vmem>>, vector<1x8x128xf32>
    %220 = vector.shape_cast %219 : vector<1x8x128xf32> to vector<8x128xf32>
    %221 = tpu.concatenate %216, %218 in 1 : vector<8x128xf32>, vector<8x128xf32> -> vector<8x256xf32>
    %222 = arith.truncf %221 : vector<8x256xf32> to vector<8x256xbf16>
    %cst_111 = arith.constant dense<0.000000e+00> : vector<8x512xf32>
    %223 = tpu.matmul %222, %3, %cst_111 {dimension_numbers = #tpu.dot_dimension_numbers<[1], [0], [0], [1], [0, 0, 1, 1], [], []>} : vector<8x256xbf16>, vector<256x512xbf16>, vector<8x512xf32> -> vector<8x512xf32>
    %224 = vector.broadcast %5 : vector<1x512xf32> to vector<8x512xf32>
    %225 = arith.addf %223, %224 : vector<8x512xf32>
    %226 = vector.extract_strided_slice %225 {offsets = [0, 0], sizes = [8, 384], strides = [1, 1]} : vector<8x512xf32> to vector<8x384xf32>
    %227 = arith.negf %226 : vector<8x384xf32>
    %228 = math.exp %227 : vector<8x384xf32>
    %cst_112 = arith.constant 1.000000e+00 : f32
    %229 = vector.broadcast %cst_112 : f32 to vector<8x384xf32>
    %230 = arith.addf %229, %228 : vector<8x384xf32>
    %231 = arith.divf %229, %230 : vector<8x384xf32>
    %232 = vector.extract_strided_slice %225 {offsets = [0, 384], sizes = [8, 128], strides = [1, 1]} : vector<8x512xf32> to vector<8x128xf32>
    %233 = math.tanh %232 : vector<8x128xf32>
    %234 = vector.extract_strided_slice %231 {offsets = [0, 0], sizes = [8, 128], strides = [1, 1]} : vector<8x384xf32> to vector<8x128xf32>
    %235 = vector.extract_strided_slice %231 {offsets = [0, 128], sizes = [8, 128], strides = [1, 1]} : vector<8x384xf32> to vector<8x128xf32>
    %236 = vector.extract_strided_slice %231 {offsets = [0, 256], sizes = [8, 128], strides = [1, 1]} : vector<8x384xf32> to vector<8x128xf32>
    %237 = arith.mulf %235, %220 : vector<8x128xf32>
    %238 = arith.mulf %234, %233 : vector<8x128xf32>
    %239 = arith.addf %237, %238 : vector<8x128xf32>
    %240 = math.tanh %239 : vector<8x128xf32>
    %241 = arith.mulf %236, %240 : vector<8x128xf32>
    %c0_113 = arith.constant 0 : index
    %c0_114 = arith.constant 0 : index
    %c0_115 = arith.constant 0 : index
    %242 = vector.load %arg12[%c0_113, %c0_114, %c0_115] : memref<2x8x128xf32, #tpu.memory_space<vmem>>, vector<1x8x128xf32>
    %243 = vector.shape_cast %242 : vector<1x8x128xf32> to vector<8x128xf32>
    %244 = vector.shape_cast %241 : vector<8x128xf32> to vector<1x8x128xf32>
    tpu.vector_store %arg12[%c0_113, %c0_114, %c0_115], %244 {strides = array<i32>} : memref<2x8x128xf32, #tpu.memory_space<vmem>>, vector<1x8x128xf32>,
    %c0_116 = arith.constant 0 : index
    %c0_117 = arith.constant 0 : index
    %c0_118 = arith.constant 0 : index
    %245 = vector.load %arg13[%c0_116, %c0_117, %c0_118] : memref<2x8x128xf32, #tpu.memory_space<vmem>>, vector<1x8x128xf32>
    %246 = vector.shape_cast %245 : vector<1x8x128xf32> to vector<8x128xf32>
    %247 = vector.shape_cast %239 : vector<8x128xf32> to vector<1x8x128xf32>
    tpu.vector_store %arg13[%c0_116, %c0_117, %c0_118], %247 {strides = array<i32>} : memref<2x8x128xf32, #tpu.memory_space<vmem>>, vector<1x8x128xf32>,
    %c1_119 = arith.constant 1 : index
    %c0_120 = arith.constant 0 : index
    %c0_121 = arith.constant 0 : index
    %248 = vector.load %arg12[%c1_119, %c0_120, %c0_121] : memref<2x8x128xf32, #tpu.memory_space<vmem>>, vector<1x8x128xf32>
    %249 = vector.shape_cast %248 : vector<1x8x128xf32> to vector<8x128xf32>
    %c1_122 = arith.constant 1 : index
    %c0_123 = arith.constant 0 : index
    %c0_124 = arith.constant 0 : index
    %250 = vector.load %arg13[%c1_122, %c0_123, %c0_124] : memref<2x8x128xf32, #tpu.memory_space<vmem>>, vector<1x8x128xf32>
    %251 = vector.shape_cast %250 : vector<1x8x128xf32> to vector<8x128xf32>
    %252 = tpu.concatenate %241, %249 in 1 : vector<8x128xf32>, vector<8x128xf32> -> vector<8x256xf32>
    %253 = arith.truncf %252 : vector<8x256xf32> to vector<8x256xbf16>
    %cst_125 = arith.constant dense<0.000000e+00> : vector<8x512xf32>
    %254 = tpu.matmul %253, %4, %cst_125 {dimension_numbers = #tpu.dot_dimension_numbers<[1], [0], [0], [1], [0, 0, 1, 1], [], []>} : vector<8x256xbf16>, vector<256x512xbf16>, vector<8x512xf32> -> vector<8x512xf32>
    %255 = vector.broadcast %6 : vector<1x512xf32> to vector<8x512xf32>
    %256 = arith.addf %254, %255 : vector<8x512xf32>
    %257 = vector.extract_strided_slice %256 {offsets = [0, 0], sizes = [8, 384], strides = [1, 1]} : vector<8x512xf32> to vector<8x384xf32>
    %258 = arith.negf %257 : vector<8x384xf32>
    %259 = math.exp %258 : vector<8x384xf32>
    %cst_126 = arith.constant 1.000000e+00 : f32
    %260 = vector.broadcast %cst_126 : f32 to vector<8x384xf32>
    %261 = arith.addf %260, %259 : vector<8x384xf32>
    %262 = arith.divf %260, %261 : vector<8x384xf32>
    %263 = vector.extract_strided_slice %256 {offsets = [0, 384], sizes = [8, 128], strides = [1, 1]} : vector<8x512xf32> to vector<8x128xf32>
    %264 = math.tanh %263 : vector<8x128xf32>
    %265 = vector.extract_strided_slice %262 {offsets = [0, 0], sizes = [8, 128], strides = [1, 1]} : vector<8x384xf32> to vector<8x128xf32>
    %266 = vector.extract_strided_slice %262 {offsets = [0, 128], sizes = [8, 128], strides = [1, 1]} : vector<8x384xf32> to vector<8x128xf32>
    %267 = vector.extract_strided_slice %262 {offsets = [0, 256], sizes = [8, 128], strides = [1, 1]} : vector<8x384xf32> to vector<8x128xf32>
    %268 = arith.mulf %266, %251 : vector<8x128xf32>
    %269 = arith.mulf %265, %264 : vector<8x128xf32>
    %270 = arith.addf %268, %269 : vector<8x128xf32>
    %271 = math.tanh %270 : vector<8x128xf32>
    %272 = arith.mulf %267, %271 : vector<8x128xf32>
    %c1_127 = arith.constant 1 : index
    %c0_128 = arith.constant 0 : index
    %c0_129 = arith.constant 0 : index
    %273 = vector.load %arg12[%c1_127, %c0_128, %c0_129] : memref<2x8x128xf32, #tpu.memory_space<vmem>>, vector<1x8x128xf32>
    %274 = vector.shape_cast %273 : vector<1x8x128xf32> to vector<8x128xf32>
    %275 = vector.shape_cast %272 : vector<8x128xf32> to vector<1x8x128xf32>
    tpu.vector_store %arg12[%c1_127, %c0_128, %c0_129], %275 {strides = array<i32>} : memref<2x8x128xf32, #tpu.memory_space<vmem>>, vector<1x8x128xf32>,
    %c1_130 = arith.constant 1 : index
    %c0_131 = arith.constant 0 : index
    %c0_132 = arith.constant 0 : index
    %276 = vector.load %arg13[%c1_130, %c0_131, %c0_132] : memref<2x8x128xf32, #tpu.memory_space<vmem>>, vector<1x8x128xf32>
    %277 = vector.shape_cast %276 : vector<1x8x128xf32> to vector<8x128xf32>
    %278 = vector.shape_cast %270 : vector<8x128xf32> to vector<1x8x128xf32>
    tpu.vector_store %arg13[%c1_130, %c0_131, %c0_132], %278 {strides = array<i32>} : memref<2x8x128xf32, #tpu.memory_space<vmem>>, vector<1x8x128xf32>,
    %279 = arith.index_cast %c3_i32 : i32 to index
    %c0_133 = arith.constant 0 : index
    %c0_134 = arith.constant 0 : index
    %280 = vector.load %arg9[%279, %c0_133, %c0_134] : memref<8x8x128xf32, #tpu.memory_space<vmem>>, vector<1x8x128xf32>
    %281 = vector.shape_cast %280 : vector<1x8x128xf32> to vector<8x128xf32>
    %282 = vector.shape_cast %272 : vector<8x128xf32> to vector<1x8x128xf32>
    tpu.vector_store %arg9[%279, %c0_133, %c0_134], %282 {strides = array<i32>} : memref<8x8x128xf32, #tpu.memory_space<vmem>>, vector<1x8x128xf32>,
    %c4_i32 = arith.constant 4 : i32
    %283 = arith.index_cast %c4_i32 : i32 to index
    %c0_135 = arith.constant 0 : index
    %c0_136 = arith.constant 0 : index
    %284 = vector.load %arg2[%283, %c0_135, %c0_136] : memref<8x8x128xf32, #tpu.memory_space<vmem>>, vector<1x8x128xf32>
    %285 = vector.shape_cast %284 : vector<1x8x128xf32> to vector<8x128xf32>
    %c0_137 = arith.constant 0 : index
    %c0_138 = arith.constant 0 : index
    %c0_139 = arith.constant 0 : index
    %286 = vector.load %arg12[%c0_137, %c0_138, %c0_139] : memref<2x8x128xf32, #tpu.memory_space<vmem>>, vector<1x8x128xf32>
    %287 = vector.shape_cast %286 : vector<1x8x128xf32> to vector<8x128xf32>
    %c0_140 = arith.constant 0 : index
    %c0_141 = arith.constant 0 : index
    %c0_142 = arith.constant 0 : index
    %288 = vector.load %arg13[%c0_140, %c0_141, %c0_142] : memref<2x8x128xf32, #tpu.memory_space<vmem>>, vector<1x8x128xf32>
    %289 = vector.shape_cast %288 : vector<1x8x128xf32> to vector<8x128xf32>
    %290 = tpu.concatenate %285, %287 in 1 : vector<8x128xf32>, vector<8x128xf32> -> vector<8x256xf32>
    %291 = arith.truncf %290 : vector<8x256xf32> to vector<8x256xbf16>
    %cst_143 = arith.constant dense<0.000000e+00> : vector<8x512xf32>
    %292 = tpu.matmul %291, %3, %cst_143 {dimension_numbers = #tpu.dot_dimension_numbers<[1], [0], [0], [1], [0, 0, 1, 1], [], []>} : vector<8x256xbf16>, vector<256x512xbf16>, vector<8x512xf32> -> vector<8x512xf32>
    %293 = vector.broadcast %5 : vector<1x512xf32> to vector<8x512xf32>
    %294 = arith.addf %292, %293 : vector<8x512xf32>
    %295 = vector.extract_strided_slice %294 {offsets = [0, 0], sizes = [8, 384], strides = [1, 1]} : vector<8x512xf32> to vector<8x384xf32>
    %296 = arith.negf %295 : vector<8x384xf32>
    %297 = math.exp %296 : vector<8x384xf32>
    %cst_144 = arith.constant 1.000000e+00 : f32
    %298 = vector.broadcast %cst_144 : f32 to vector<8x384xf32>
    %299 = arith.addf %298, %297 : vector<8x384xf32>
    %300 = arith.divf %298, %299 : vector<8x384xf32>
    %301 = vector.extract_strided_slice %294 {offsets = [0, 384], sizes = [8, 128], strides = [1, 1]} : vector<8x512xf32> to vector<8x128xf32>
    %302 = math.tanh %301 : vector<8x128xf32>
    %303 = vector.extract_strided_slice %300 {offsets = [0, 0], sizes = [8, 128], strides = [1, 1]} : vector<8x384xf32> to vector<8x128xf32>
    %304 = vector.extract_strided_slice %300 {offsets = [0, 128], sizes = [8, 128], strides = [1, 1]} : vector<8x384xf32> to vector<8x128xf32>
    %305 = vector.extract_strided_slice %300 {offsets = [0, 256], sizes = [8, 128], strides = [1, 1]} : vector<8x384xf32> to vector<8x128xf32>
    %306 = arith.mulf %304, %289 : vector<8x128xf32>
    %307 = arith.mulf %303, %302 : vector<8x128xf32>
    %308 = arith.addf %306, %307 : vector<8x128xf32>
    %309 = math.tanh %308 : vector<8x128xf32>
    %310 = arith.mulf %305, %309 : vector<8x128xf32>
    %c0_145 = arith.constant 0 : index
    %c0_146 = arith.constant 0 : index
    %c0_147 = arith.constant 0 : index
    %311 = vector.load %arg12[%c0_145, %c0_146, %c0_147] : memref<2x8x128xf32, #tpu.memory_space<vmem>>, vector<1x8x128xf32>
    %312 = vector.shape_cast %311 : vector<1x8x128xf32> to vector<8x128xf32>
    %313 = vector.shape_cast %310 : vector<8x128xf32> to vector<1x8x128xf32>
    tpu.vector_store %arg12[%c0_145, %c0_146, %c0_147], %313 {strides = array<i32>} : memref<2x8x128xf32, #tpu.memory_space<vmem>>, vector<1x8x128xf32>,
    %c0_148 = arith.constant 0 : index
    %c0_149 = arith.constant 0 : index
    %c0_150 = arith.constant 0 : index
    %314 = vector.load %arg13[%c0_148, %c0_149, %c0_150] : memref<2x8x128xf32, #tpu.memory_space<vmem>>, vector<1x8x128xf32>
    %315 = vector.shape_cast %314 : vector<1x8x128xf32> to vector<8x128xf32>
    %316 = vector.shape_cast %308 : vector<8x128xf32> to vector<1x8x128xf32>
    tpu.vector_store %arg13[%c0_148, %c0_149, %c0_150], %316 {strides = array<i32>} : memref<2x8x128xf32, #tpu.memory_space<vmem>>, vector<1x8x128xf32>,
    %c1_151 = arith.constant 1 : index
    %c0_152 = arith.constant 0 : index
    %c0_153 = arith.constant 0 : index
    %317 = vector.load %arg12[%c1_151, %c0_152, %c0_153] : memref<2x8x128xf32, #tpu.memory_space<vmem>>, vector<1x8x128xf32>
    %318 = vector.shape_cast %317 : vector<1x8x128xf32> to vector<8x128xf32>
    %c1_154 = arith.constant 1 : index
    %c0_155 = arith.constant 0 : index
    %c0_156 = arith.constant 0 : index
    %319 = vector.load %arg13[%c1_154, %c0_155, %c0_156] : memref<2x8x128xf32, #tpu.memory_space<vmem>>, vector<1x8x128xf32>
    %320 = vector.shape_cast %319 : vector<1x8x128xf32> to vector<8x128xf32>
    %321 = tpu.concatenate %310, %318 in 1 : vector<8x128xf32>, vector<8x128xf32> -> vector<8x256xf32>
    %322 = arith.truncf %321 : vector<8x256xf32> to vector<8x256xbf16>
    %cst_157 = arith.constant dense<0.000000e+00> : vector<8x512xf32>
    %323 = tpu.matmul %322, %4, %cst_157 {dimension_numbers = #tpu.dot_dimension_numbers<[1], [0], [0], [1], [0, 0, 1, 1], [], []>} : vector<8x256xbf16>, vector<256x512xbf16>, vector<8x512xf32> -> vector<8x512xf32>
    %324 = vector.broadcast %6 : vector<1x512xf32> to vector<8x512xf32>
    %325 = arith.addf %323, %324 : vector<8x512xf32>
    %326 = vector.extract_strided_slice %325 {offsets = [0, 0], sizes = [8, 384], strides = [1, 1]} : vector<8x512xf32> to vector<8x384xf32>
    %327 = arith.negf %326 : vector<8x384xf32>
    %328 = math.exp %327 : vector<8x384xf32>
    %cst_158 = arith.constant 1.000000e+00 : f32
    %329 = vector.broadcast %cst_158 : f32 to vector<8x384xf32>
    %330 = arith.addf %329, %328 : vector<8x384xf32>
    %331 = arith.divf %329, %330 : vector<8x384xf32>
    %332 = vector.extract_strided_slice %325 {offsets = [0, 384], sizes = [8, 128], strides = [1, 1]} : vector<8x512xf32> to vector<8x128xf32>
    %333 = math.tanh %332 : vector<8x128xf32>
    %334 = vector.extract_strided_slice %331 {offsets = [0, 0], sizes = [8, 128], strides = [1, 1]} : vector<8x384xf32> to vector<8x128xf32>
    %335 = vector.extract_strided_slice %331 {offsets = [0, 128], sizes = [8, 128], strides = [1, 1]} : vector<8x384xf32> to vector<8x128xf32>
    %336 = vector.extract_strided_slice %331 {offsets = [0, 256], sizes = [8, 128], strides = [1, 1]} : vector<8x384xf32> to vector<8x128xf32>
    %337 = arith.mulf %335, %320 : vector<8x128xf32>
    %338 = arith.mulf %334, %333 : vector<8x128xf32>
    %339 = arith.addf %337, %338 : vector<8x128xf32>
    %340 = math.tanh %339 : vector<8x128xf32>
    %341 = arith.mulf %336, %340 : vector<8x128xf32>
    %c1_159 = arith.constant 1 : index
    %c0_160 = arith.constant 0 : index
    %c0_161 = arith.constant 0 : index
    %342 = vector.load %arg12[%c1_159, %c0_160, %c0_161] : memref<2x8x128xf32, #tpu.memory_space<vmem>>, vector<1x8x128xf32>
    %343 = vector.shape_cast %342 : vector<1x8x128xf32> to vector<8x128xf32>
    %344 = vector.shape_cast %341 : vector<8x128xf32> to vector<1x8x128xf32>
    tpu.vector_store %arg12[%c1_159, %c0_160, %c0_161], %344 {strides = array<i32>} : memref<2x8x128xf32, #tpu.memory_space<vmem>>, vector<1x8x128xf32>,
    %c1_162 = arith.constant 1 : index
    %c0_163 = arith.constant 0 : index
    %c0_164 = arith.constant 0 : index
    %345 = vector.load %arg13[%c1_162, %c0_163, %c0_164] : memref<2x8x128xf32, #tpu.memory_space<vmem>>, vector<1x8x128xf32>
    %346 = vector.shape_cast %345 : vector<1x8x128xf32> to vector<8x128xf32>
    %347 = vector.shape_cast %339 : vector<8x128xf32> to vector<1x8x128xf32>
    tpu.vector_store %arg13[%c1_162, %c0_163, %c0_164], %347 {strides = array<i32>} : memref<2x8x128xf32, #tpu.memory_space<vmem>>, vector<1x8x128xf32>,
    %348 = arith.index_cast %c4_i32 : i32 to index
    %c0_165 = arith.constant 0 : index
    %c0_166 = arith.constant 0 : index
    %349 = vector.load %arg9[%348, %c0_165, %c0_166] : memref<8x8x128xf32, #tpu.memory_space<vmem>>, vector<1x8x128xf32>
    %350 = vector.shape_cast %349 : vector<1x8x128xf32> to vector<8x128xf32>
    %351 = vector.shape_cast %341 : vector<8x128xf32> to vector<1x8x128xf32>
    tpu.vector_store %arg9[%348, %c0_165, %c0_166], %351 {strides = array<i32>} : memref<8x8x128xf32, #tpu.memory_space<vmem>>, vector<1x8x128xf32>,
    %c5_i32 = arith.constant 5 : i32
    %352 = arith.index_cast %c5_i32 : i32 to index
    %c0_167 = arith.constant 0 : index
    %c0_168 = arith.constant 0 : index
    %353 = vector.load %arg2[%352, %c0_167, %c0_168] : memref<8x8x128xf32, #tpu.memory_space<vmem>>, vector<1x8x128xf32>
    %354 = vector.shape_cast %353 : vector<1x8x128xf32> to vector<8x128xf32>
    %c0_169 = arith.constant 0 : index
    %c0_170 = arith.constant 0 : index
    %c0_171 = arith.constant 0 : index
    %355 = vector.load %arg12[%c0_169, %c0_170, %c0_171] : memref<2x8x128xf32, #tpu.memory_space<vmem>>, vector<1x8x128xf32>
    %356 = vector.shape_cast %355 : vector<1x8x128xf32> to vector<8x128xf32>
    %c0_172 = arith.constant 0 : index
    %c0_173 = arith.constant 0 : index
    %c0_174 = arith.constant 0 : index
    %357 = vector.load %arg13[%c0_172, %c0_173, %c0_174] : memref<2x8x128xf32, #tpu.memory_space<vmem>>, vector<1x8x128xf32>
    %358 = vector.shape_cast %357 : vector<1x8x128xf32> to vector<8x128xf32>
    %359 = tpu.concatenate %354, %356 in 1 : vector<8x128xf32>, vector<8x128xf32> -> vector<8x256xf32>
    %360 = arith.truncf %359 : vector<8x256xf32> to vector<8x256xbf16>
    %cst_175 = arith.constant dense<0.000000e+00> : vector<8x512xf32>
    %361 = tpu.matmul %360, %3, %cst_175 {dimension_numbers = #tpu.dot_dimension_numbers<[1], [0], [0], [1], [0, 0, 1, 1], [], []>} : vector<8x256xbf16>, vector<256x512xbf16>, vector<8x512xf32> -> vector<8x512xf32>
    %362 = vector.broadcast %5 : vector<1x512xf32> to vector<8x512xf32>
    %363 = arith.addf %361, %362 : vector<8x512xf32>
    %364 = vector.extract_strided_slice %363 {offsets = [0, 0], sizes = [8, 384], strides = [1, 1]} : vector<8x512xf32> to vector<8x384xf32>
    %365 = arith.negf %364 : vector<8x384xf32>
    %366 = math.exp %365 : vector<8x384xf32>
    %cst_176 = arith.constant 1.000000e+00 : f32
    %367 = vector.broadcast %cst_176 : f32 to vector<8x384xf32>
    %368 = arith.addf %367, %366 : vector<8x384xf32>
    %369 = arith.divf %367, %368 : vector<8x384xf32>
    %370 = vector.extract_strided_slice %363 {offsets = [0, 384], sizes = [8, 128], strides = [1, 1]} : vector<8x512xf32> to vector<8x128xf32>
    %371 = math.tanh %370 : vector<8x128xf32>
    %372 = vector.extract_strided_slice %369 {offsets = [0, 0], sizes = [8, 128], strides = [1, 1]} : vector<8x384xf32> to vector<8x128xf32>
    %373 = vector.extract_strided_slice %369 {offsets = [0, 128], sizes = [8, 128], strides = [1, 1]} : vector<8x384xf32> to vector<8x128xf32>
    %374 = vector.extract_strided_slice %369 {offsets = [0, 256], sizes = [8, 128], strides = [1, 1]} : vector<8x384xf32> to vector<8x128xf32>
    %375 = arith.mulf %373, %358 : vector<8x128xf32>
    %376 = arith.mulf %372, %371 : vector<8x128xf32>
    %377 = arith.addf %375, %376 : vector<8x128xf32>
    %378 = math.tanh %377 : vector<8x128xf32>
    %379 = arith.mulf %374, %378 : vector<8x128xf32>
    %c0_177 = arith.constant 0 : index
    %c0_178 = arith.constant 0 : index
    %c0_179 = arith.constant 0 : index
    %380 = vector.load %arg12[%c0_177, %c0_178, %c0_179] : memref<2x8x128xf32, #tpu.memory_space<vmem>>, vector<1x8x128xf32>
    %381 = vector.shape_cast %380 : vector<1x8x128xf32> to vector<8x128xf32>
    %382 = vector.shape_cast %379 : vector<8x128xf32> to vector<1x8x128xf32>
    tpu.vector_store %arg12[%c0_177, %c0_178, %c0_179], %382 {strides = array<i32>} : memref<2x8x128xf32, #tpu.memory_space<vmem>>, vector<1x8x128xf32>,
    %c0_180 = arith.constant 0 : index
    %c0_181 = arith.constant 0 : index
    %c0_182 = arith.constant 0 : index
    %383 = vector.load %arg13[%c0_180, %c0_181, %c0_182] : memref<2x8x128xf32, #tpu.memory_space<vmem>>, vector<1x8x128xf32>
    %384 = vector.shape_cast %383 : vector<1x8x128xf32> to vector<8x128xf32>
    %385 = vector.shape_cast %377 : vector<8x128xf32> to vector<1x8x128xf32>
    tpu.vector_store %arg13[%c0_180, %c0_181, %c0_182], %385 {strides = array<i32>} : memref<2x8x128xf32, #tpu.memory_space<vmem>>, vector<1x8x128xf32>,
    %c1_183 = arith.constant 1 : index
    %c0_184 = arith.constant 0 : index
    %c0_185 = arith.constant 0 : index
    %386 = vector.load %arg12[%c1_183, %c0_184, %c0_185] : memref<2x8x128xf32, #tpu.memory_space<vmem>>, vector<1x8x128xf32>
    %387 = vector.shape_cast %386 : vector<1x8x128xf32> to vector<8x128xf32>
    %c1_186 = arith.constant 1 : index
    %c0_187 = arith.constant 0 : index
    %c0_188 = arith.constant 0 : index
    %388 = vector.load %arg13[%c1_186, %c0_187, %c0_188] : memref<2x8x128xf32, #tpu.memory_space<vmem>>, vector<1x8x128xf32>
    %389 = vector.shape_cast %388 : vector<1x8x128xf32> to vector<8x128xf32>
    %390 = tpu.concatenate %379, %387 in 1 : vector<8x128xf32>, vector<8x128xf32> -> vector<8x256xf32>
    %391 = arith.truncf %390 : vector<8x256xf32> to vector<8x256xbf16>
    %cst_189 = arith.constant dense<0.000000e+00> : vector<8x512xf32>
    %392 = tpu.matmul %391, %4, %cst_189 {dimension_numbers = #tpu.dot_dimension_numbers<[1], [0], [0], [1], [0, 0, 1, 1], [], []>} : vector<8x256xbf16>, vector<256x512xbf16>, vector<8x512xf32> -> vector<8x512xf32>
    %393 = vector.broadcast %6 : vector<1x512xf32> to vector<8x512xf32>
    %394 = arith.addf %392, %393 : vector<8x512xf32>
    %395 = vector.extract_strided_slice %394 {offsets = [0, 0], sizes = [8, 384], strides = [1, 1]} : vector<8x512xf32> to vector<8x384xf32>
    %396 = arith.negf %395 : vector<8x384xf32>
    %397 = math.exp %396 : vector<8x384xf32>
    %cst_190 = arith.constant 1.000000e+00 : f32
    %398 = vector.broadcast %cst_190 : f32 to vector<8x384xf32>
    %399 = arith.addf %398, %397 : vector<8x384xf32>
    %400 = arith.divf %398, %399 : vector<8x384xf32>
    %401 = vector.extract_strided_slice %394 {offsets = [0, 384], sizes = [8, 128], strides = [1, 1]} : vector<8x512xf32> to vector<8x128xf32>
    %402 = math.tanh %401 : vector<8x128xf32>
    %403 = vector.extract_strided_slice %400 {offsets = [0, 0], sizes = [8, 128], strides = [1, 1]} : vector<8x384xf32> to vector<8x128xf32>
    %404 = vector.extract_strided_slice %400 {offsets = [0, 128], sizes = [8, 128], strides = [1, 1]} : vector<8x384xf32> to vector<8x128xf32>
    %405 = vector.extract_strided_slice %400 {offsets = [0, 256], sizes = [8, 128], strides = [1, 1]} : vector<8x384xf32> to vector<8x128xf32>
    %406 = arith.mulf %404, %389 : vector<8x128xf32>
    %407 = arith.mulf %403, %402 : vector<8x128xf32>
    %408 = arith.addf %406, %407 : vector<8x128xf32>
    %409 = math.tanh %408 : vector<8x128xf32>
    %410 = arith.mulf %405, %409 : vector<8x128xf32>
    %c1_191 = arith.constant 1 : index
    %c0_192 = arith.constant 0 : index
    %c0_193 = arith.constant 0 : index
    %411 = vector.load %arg12[%c1_191, %c0_192, %c0_193] : memref<2x8x128xf32, #tpu.memory_space<vmem>>, vector<1x8x128xf32>
    %412 = vector.shape_cast %411 : vector<1x8x128xf32> to vector<8x128xf32>
    %413 = vector.shape_cast %410 : vector<8x128xf32> to vector<1x8x128xf32>
    tpu.vector_store %arg12[%c1_191, %c0_192, %c0_193], %413 {strides = array<i32>} : memref<2x8x128xf32, #tpu.memory_space<vmem>>, vector<1x8x128xf32>,
    %c1_194 = arith.constant 1 : index
    %c0_195 = arith.constant 0 : index
    %c0_196 = arith.constant 0 : index
    %414 = vector.load %arg13[%c1_194, %c0_195, %c0_196] : memref<2x8x128xf32, #tpu.memory_space<vmem>>, vector<1x8x128xf32>
    %415 = vector.shape_cast %414 : vector<1x8x128xf32> to vector<8x128xf32>
    %416 = vector.shape_cast %408 : vector<8x128xf32> to vector<1x8x128xf32>
    tpu.vector_store %arg13[%c1_194, %c0_195, %c0_196], %416 {strides = array<i32>} : memref<2x8x128xf32, #tpu.memory_space<vmem>>, vector<1x8x128xf32>,
    %417 = arith.index_cast %c5_i32 : i32 to index
    %c0_197 = arith.constant 0 : index
    %c0_198 = arith.constant 0 : index
    %418 = vector.load %arg9[%417, %c0_197, %c0_198] : memref<8x8x128xf32, #tpu.memory_space<vmem>>, vector<1x8x128xf32>
    %419 = vector.shape_cast %418 : vector<1x8x128xf32> to vector<8x128xf32>
    %420 = vector.shape_cast %410 : vector<8x128xf32> to vector<1x8x128xf32>
    tpu.vector_store %arg9[%417, %c0_197, %c0_198], %420 {strides = array<i32>} : memref<8x8x128xf32, #tpu.memory_space<vmem>>, vector<1x8x128xf32>,
    %c6_i32 = arith.constant 6 : i32
    %421 = arith.index_cast %c6_i32 : i32 to index
    %c0_199 = arith.constant 0 : index
    %c0_200 = arith.constant 0 : index
    %422 = vector.load %arg2[%421, %c0_199, %c0_200] : memref<8x8x128xf32, #tpu.memory_space<vmem>>, vector<1x8x128xf32>
    %423 = vector.shape_cast %422 : vector<1x8x128xf32> to vector<8x128xf32>
    %c0_201 = arith.constant 0 : index
    %c0_202 = arith.constant 0 : index
    %c0_203 = arith.constant 0 : index
    %424 = vector.load %arg12[%c0_201, %c0_202, %c0_203] : memref<2x8x128xf32, #tpu.memory_space<vmem>>, vector<1x8x128xf32>
    %425 = vector.shape_cast %424 : vector<1x8x128xf32> to vector<8x128xf32>
    %c0_204 = arith.constant 0 : index
    %c0_205 = arith.constant 0 : index
    %c0_206 = arith.constant 0 : index
    %426 = vector.load %arg13[%c0_204, %c0_205, %c0_206] : memref<2x8x128xf32, #tpu.memory_space<vmem>>, vector<1x8x128xf32>
    %427 = vector.shape_cast %426 : vector<1x8x128xf32> to vector<8x128xf32>
    %428 = tpu.concatenate %423, %425 in 1 : vector<8x128xf32>, vector<8x128xf32> -> vector<8x256xf32>
    %429 = arith.truncf %428 : vector<8x256xf32> to vector<8x256xbf16>
    %cst_207 = arith.constant dense<0.000000e+00> : vector<8x512xf32>
    %430 = tpu.matmul %429, %3, %cst_207 {dimension_numbers = #tpu.dot_dimension_numbers<[1], [0], [0], [1], [0, 0, 1, 1], [], []>} : vector<8x256xbf16>, vector<256x512xbf16>, vector<8x512xf32> -> vector<8x512xf32>
    %431 = vector.broadcast %5 : vector<1x512xf32> to vector<8x512xf32>
    %432 = arith.addf %430, %431 : vector<8x512xf32>
    %433 = vector.extract_strided_slice %432 {offsets = [0, 0], sizes = [8, 384], strides = [1, 1]} : vector<8x512xf32> to vector<8x384xf32>
    %434 = arith.negf %433 : vector<8x384xf32>
    %435 = math.exp %434 : vector<8x384xf32>
    %cst_208 = arith.constant 1.000000e+00 : f32
    %436 = vector.broadcast %cst_208 : f32 to vector<8x384xf32>
    %437 = arith.addf %436, %435 : vector<8x384xf32>
    %438 = arith.divf %436, %437 : vector<8x384xf32>
    %439 = vector.extract_strided_slice %432 {offsets = [0, 384], sizes = [8, 128], strides = [1, 1]} : vector<8x512xf32> to vector<8x128xf32>
    %440 = math.tanh %439 : vector<8x128xf32>
    %441 = vector.extract_strided_slice %438 {offsets = [0, 0], sizes = [8, 128], strides = [1, 1]} : vector<8x384xf32> to vector<8x128xf32>
    %442 = vector.extract_strided_slice %438 {offsets = [0, 128], sizes = [8, 128], strides = [1, 1]} : vector<8x384xf32> to vector<8x128xf32>
    %443 = vector.extract_strided_slice %438 {offsets = [0, 256], sizes = [8, 128], strides = [1, 1]} : vector<8x384xf32> to vector<8x128xf32>
    %444 = arith.mulf %442, %427 : vector<8x128xf32>
    %445 = arith.mulf %441, %440 : vector<8x128xf32>
    %446 = arith.addf %444, %445 : vector<8x128xf32>
    %447 = math.tanh %446 : vector<8x128xf32>
    %448 = arith.mulf %443, %447 : vector<8x128xf32>
    %c0_209 = arith.constant 0 : index
    %c0_210 = arith.constant 0 : index
    %c0_211 = arith.constant 0 : index
    %449 = vector.load %arg12[%c0_209, %c0_210, %c0_211] : memref<2x8x128xf32, #tpu.memory_space<vmem>>, vector<1x8x128xf32>
    %450 = vector.shape_cast %449 : vector<1x8x128xf32> to vector<8x128xf32>
    %451 = vector.shape_cast %448 : vector<8x128xf32> to vector<1x8x128xf32>
    tpu.vector_store %arg12[%c0_209, %c0_210, %c0_211], %451 {strides = array<i32>} : memref<2x8x128xf32, #tpu.memory_space<vmem>>, vector<1x8x128xf32>,
    %c0_212 = arith.constant 0 : index
    %c0_213 = arith.constant 0 : index
    %c0_214 = arith.constant 0 : index
    %452 = vector.load %arg13[%c0_212, %c0_213, %c0_214] : memref<2x8x128xf32, #tpu.memory_space<vmem>>, vector<1x8x128xf32>
    %453 = vector.shape_cast %452 : vector<1x8x128xf32> to vector<8x128xf32>
    %454 = vector.shape_cast %446 : vector<8x128xf32> to vector<1x8x128xf32>
    tpu.vector_store %arg13[%c0_212, %c0_213, %c0_214], %454 {strides = array<i32>} : memref<2x8x128xf32, #tpu.memory_space<vmem>>, vector<1x8x128xf32>,
    %c1_215 = arith.constant 1 : index
    %c0_216 = arith.constant 0 : index
    %c0_217 = arith.constant 0 : index
    %455 = vector.load %arg12[%c1_215, %c0_216, %c0_217] : memref<2x8x128xf32, #tpu.memory_space<vmem>>, vector<1x8x128xf32>
    %456 = vector.shape_cast %455 : vector<1x8x128xf32> to vector<8x128xf32>
    %c1_218 = arith.constant 1 : index
    %c0_219 = arith.constant 0 : index
    %c0_220 = arith.constant 0 : index
    %457 = vector.load %arg13[%c1_218, %c0_219, %c0_220] : memref<2x8x128xf32, #tpu.memory_space<vmem>>, vector<1x8x128xf32>
    %458 = vector.shape_cast %457 : vector<1x8x128xf32> to vector<8x128xf32>
    %459 = tpu.concatenate %448, %456 in 1 : vector<8x128xf32>, vector<8x128xf32> -> vector<8x256xf32>
    %460 = arith.truncf %459 : vector<8x256xf32> to vector<8x256xbf16>
    %cst_221 = arith.constant dense<0.000000e+00> : vector<8x512xf32>
    %461 = tpu.matmul %460, %4, %cst_221 {dimension_numbers = #tpu.dot_dimension_numbers<[1], [0], [0], [1], [0, 0, 1, 1], [], []>} : vector<8x256xbf16>, vector<256x512xbf16>, vector<8x512xf32> -> vector<8x512xf32>
    %462 = vector.broadcast %6 : vector<1x512xf32> to vector<8x512xf32>
    %463 = arith.addf %461, %462 : vector<8x512xf32>
    %464 = vector.extract_strided_slice %463 {offsets = [0, 0], sizes = [8, 384], strides = [1, 1]} : vector<8x512xf32> to vector<8x384xf32>
    %465 = arith.negf %464 : vector<8x384xf32>
    %466 = math.exp %465 : vector<8x384xf32>
    %cst_222 = arith.constant 1.000000e+00 : f32
    %467 = vector.broadcast %cst_222 : f32 to vector<8x384xf32>
    %468 = arith.addf %467, %466 : vector<8x384xf32>
    %469 = arith.divf %467, %468 : vector<8x384xf32>
    %470 = vector.extract_strided_slice %463 {offsets = [0, 384], sizes = [8, 128], strides = [1, 1]} : vector<8x512xf32> to vector<8x128xf32>
    %471 = math.tanh %470 : vector<8x128xf32>
    %472 = vector.extract_strided_slice %469 {offsets = [0, 0], sizes = [8, 128], strides = [1, 1]} : vector<8x384xf32> to vector<8x128xf32>
    %473 = vector.extract_strided_slice %469 {offsets = [0, 128], sizes = [8, 128], strides = [1, 1]} : vector<8x384xf32> to vector<8x128xf32>
    %474 = vector.extract_strided_slice %469 {offsets = [0, 256], sizes = [8, 128], strides = [1, 1]} : vector<8x384xf32> to vector<8x128xf32>
    %475 = arith.mulf %473, %458 : vector<8x128xf32>
    %476 = arith.mulf %472, %471 : vector<8x128xf32>
    %477 = arith.addf %475, %476 : vector<8x128xf32>
    %478 = math.tanh %477 : vector<8x128xf32>
    %479 = arith.mulf %474, %478 : vector<8x128xf32>
    %c1_223 = arith.constant 1 : index
    %c0_224 = arith.constant 0 : index
    %c0_225 = arith.constant 0 : index
    %480 = vector.load %arg12[%c1_223, %c0_224, %c0_225] : memref<2x8x128xf32, #tpu.memory_space<vmem>>, vector<1x8x128xf32>
    %481 = vector.shape_cast %480 : vector<1x8x128xf32> to vector<8x128xf32>
    %482 = vector.shape_cast %479 : vector<8x128xf32> to vector<1x8x128xf32>
    tpu.vector_store %arg12[%c1_223, %c0_224, %c0_225], %482 {strides = array<i32>} : memref<2x8x128xf32, #tpu.memory_space<vmem>>, vector<1x8x128xf32>,
    %c1_226 = arith.constant 1 : index
    %c0_227 = arith.constant 0 : index
    %c0_228 = arith.constant 0 : index
    %483 = vector.load %arg13[%c1_226, %c0_227, %c0_228] : memref<2x8x128xf32, #tpu.memory_space<vmem>>, vector<1x8x128xf32>
    %484 = vector.shape_cast %483 : vector<1x8x128xf32> to vector<8x128xf32>
    %485 = vector.shape_cast %477 : vector<8x128xf32> to vector<1x8x128xf32>
    tpu.vector_store %arg13[%c1_226, %c0_227, %c0_228], %485 {strides = array<i32>} : memref<2x8x128xf32, #tpu.memory_space<vmem>>, vector<1x8x128xf32>,
    %486 = arith.index_cast %c6_i32 : i32 to index
    %c0_229 = arith.constant 0 : index
    %c0_230 = arith.constant 0 : index
    %487 = vector.load %arg9[%486, %c0_229, %c0_230] : memref<8x8x128xf32, #tpu.memory_space<vmem>>, vector<1x8x128xf32>
    %488 = vector.shape_cast %487 : vector<1x8x128xf32> to vector<8x128xf32>
    %489 = vector.shape_cast %479 : vector<8x128xf32> to vector<1x8x128xf32>
    tpu.vector_store %arg9[%486, %c0_229, %c0_230], %489 {strides = array<i32>} : memref<8x8x128xf32, #tpu.memory_space<vmem>>, vector<1x8x128xf32>,
    %c7_i32 = arith.constant 7 : i32
    %490 = arith.index_cast %c7_i32 : i32 to index
    %c0_231 = arith.constant 0 : index
    %c0_232 = arith.constant 0 : index
    %491 = vector.load %arg2[%490, %c0_231, %c0_232] : memref<8x8x128xf32, #tpu.memory_space<vmem>>, vector<1x8x128xf32>
    %492 = vector.shape_cast %491 : vector<1x8x128xf32> to vector<8x128xf32>
    %c0_233 = arith.constant 0 : index
    %c0_234 = arith.constant 0 : index
    %c0_235 = arith.constant 0 : index
    %493 = vector.load %arg12[%c0_233, %c0_234, %c0_235] : memref<2x8x128xf32, #tpu.memory_space<vmem>>, vector<1x8x128xf32>
    %494 = vector.shape_cast %493 : vector<1x8x128xf32> to vector<8x128xf32>
    %c0_236 = arith.constant 0 : index
    %c0_237 = arith.constant 0 : index
    %c0_238 = arith.constant 0 : index
    %495 = vector.load %arg13[%c0_236, %c0_237, %c0_238] : memref<2x8x128xf32, #tpu.memory_space<vmem>>, vector<1x8x128xf32>
    %496 = vector.shape_cast %495 : vector<1x8x128xf32> to vector<8x128xf32>
    %497 = tpu.concatenate %492, %494 in 1 : vector<8x128xf32>, vector<8x128xf32> -> vector<8x256xf32>
    %498 = arith.truncf %497 : vector<8x256xf32> to vector<8x256xbf16>
    %cst_239 = arith.constant dense<0.000000e+00> : vector<8x512xf32>
    %499 = tpu.matmul %498, %3, %cst_239 {dimension_numbers = #tpu.dot_dimension_numbers<[1], [0], [0], [1], [0, 0, 1, 1], [], []>} : vector<8x256xbf16>, vector<256x512xbf16>, vector<8x512xf32> -> vector<8x512xf32>
    %500 = vector.broadcast %5 : vector<1x512xf32> to vector<8x512xf32>
    %501 = arith.addf %499, %500 : vector<8x512xf32>
    %502 = vector.extract_strided_slice %501 {offsets = [0, 0], sizes = [8, 384], strides = [1, 1]} : vector<8x512xf32> to vector<8x384xf32>
    %503 = arith.negf %502 : vector<8x384xf32>
    %504 = math.exp %503 : vector<8x384xf32>
    %cst_240 = arith.constant 1.000000e+00 : f32
    %505 = vector.broadcast %cst_240 : f32 to vector<8x384xf32>
    %506 = arith.addf %505, %504 : vector<8x384xf32>
    %507 = arith.divf %505, %506 : vector<8x384xf32>
    %508 = vector.extract_strided_slice %501 {offsets = [0, 384], sizes = [8, 128], strides = [1, 1]} : vector<8x512xf32> to vector<8x128xf32>
    %509 = math.tanh %508 : vector<8x128xf32>
    %510 = vector.extract_strided_slice %507 {offsets = [0, 0], sizes = [8, 128], strides = [1, 1]} : vector<8x384xf32> to vector<8x128xf32>
    %511 = vector.extract_strided_slice %507 {offsets = [0, 128], sizes = [8, 128], strides = [1, 1]} : vector<8x384xf32> to vector<8x128xf32>
    %512 = vector.extract_strided_slice %507 {offsets = [0, 256], sizes = [8, 128], strides = [1, 1]} : vector<8x384xf32> to vector<8x128xf32>
    %513 = arith.mulf %511, %496 : vector<8x128xf32>
    %514 = arith.mulf %510, %509 : vector<8x128xf32>
    %515 = arith.addf %513, %514 : vector<8x128xf32>
    %516 = math.tanh %515 : vector<8x128xf32>
    %517 = arith.mulf %512, %516 : vector<8x128xf32>
    %c0_241 = arith.constant 0 : index
    %c0_242 = arith.constant 0 : index
    %c0_243 = arith.constant 0 : index
    %518 = vector.load %arg12[%c0_241, %c0_242, %c0_243] : memref<2x8x128xf32, #tpu.memory_space<vmem>>, vector<1x8x128xf32>
    %519 = vector.shape_cast %518 : vector<1x8x128xf32> to vector<8x128xf32>
    %520 = vector.shape_cast %517 : vector<8x128xf32> to vector<1x8x128xf32>
    tpu.vector_store %arg12[%c0_241, %c0_242, %c0_243], %520 {strides = array<i32>} : memref<2x8x128xf32, #tpu.memory_space<vmem>>, vector<1x8x128xf32>,
    %c0_244 = arith.constant 0 : index
    %c0_245 = arith.constant 0 : index
    %c0_246 = arith.constant 0 : index
    %521 = vector.load %arg13[%c0_244, %c0_245, %c0_246] : memref<2x8x128xf32, #tpu.memory_space<vmem>>, vector<1x8x128xf32>
    %522 = vector.shape_cast %521 : vector<1x8x128xf32> to vector<8x128xf32>
    %523 = vector.shape_cast %515 : vector<8x128xf32> to vector<1x8x128xf32>
    tpu.vector_store %arg13[%c0_244, %c0_245, %c0_246], %523 {strides = array<i32>} : memref<2x8x128xf32, #tpu.memory_space<vmem>>, vector<1x8x128xf32>,
    %c1_247 = arith.constant 1 : index
    %c0_248 = arith.constant 0 : index
    %c0_249 = arith.constant 0 : index
    %524 = vector.load %arg12[%c1_247, %c0_248, %c0_249] : memref<2x8x128xf32, #tpu.memory_space<vmem>>, vector<1x8x128xf32>
    %525 = vector.shape_cast %524 : vector<1x8x128xf32> to vector<8x128xf32>
    %c1_250 = arith.constant 1 : index
    %c0_251 = arith.constant 0 : index
    %c0_252 = arith.constant 0 : index
    %526 = vector.load %arg13[%c1_250, %c0_251, %c0_252] : memref<2x8x128xf32, #tpu.memory_space<vmem>>, vector<1x8x128xf32>
    %527 = vector.shape_cast %526 : vector<1x8x128xf32> to vector<8x128xf32>
    %528 = tpu.concatenate %517, %525 in 1 : vector<8x128xf32>, vector<8x128xf32> -> vector<8x256xf32>
    %529 = arith.truncf %528 : vector<8x256xf32> to vector<8x256xbf16>
    %cst_253 = arith.constant dense<0.000000e+00> : vector<8x512xf32>
    %530 = tpu.matmul %529, %4, %cst_253 {dimension_numbers = #tpu.dot_dimension_numbers<[1], [0], [0], [1], [0, 0, 1, 1], [], []>} : vector<8x256xbf16>, vector<256x512xbf16>, vector<8x512xf32> -> vector<8x512xf32>
    %531 = vector.broadcast %6 : vector<1x512xf32> to vector<8x512xf32>
    %532 = arith.addf %530, %531 : vector<8x512xf32>
    %533 = vector.extract_strided_slice %532 {offsets = [0, 0], sizes = [8, 384], strides = [1, 1]} : vector<8x512xf32> to vector<8x384xf32>
    %534 = arith.negf %533 : vector<8x384xf32>
    %535 = math.exp %534 : vector<8x384xf32>
    %cst_254 = arith.constant 1.000000e+00 : f32
    %536 = vector.broadcast %cst_254 : f32 to vector<8x384xf32>
    %537 = arith.addf %536, %535 : vector<8x384xf32>
    %538 = arith.divf %536, %537 : vector<8x384xf32>
    %539 = vector.extract_strided_slice %532 {offsets = [0, 384], sizes = [8, 128], strides = [1, 1]} : vector<8x512xf32> to vector<8x128xf32>
    %540 = math.tanh %539 : vector<8x128xf32>
    %541 = vector.extract_strided_slice %538 {offsets = [0, 0], sizes = [8, 128], strides = [1, 1]} : vector<8x384xf32> to vector<8x128xf32>
    %542 = vector.extract_strided_slice %538 {offsets = [0, 128], sizes = [8, 128], strides = [1, 1]} : vector<8x384xf32> to vector<8x128xf32>
    %543 = vector.extract_strided_slice %538 {offsets = [0, 256], sizes = [8, 128], strides = [1, 1]} : vector<8x384xf32> to vector<8x128xf32>
    %544 = arith.mulf %542, %527 : vector<8x128xf32>
    %545 = arith.mulf %541, %540 : vector<8x128xf32>
    %546 = arith.addf %544, %545 : vector<8x128xf32>
    %547 = math.tanh %546 : vector<8x128xf32>
    %548 = arith.mulf %543, %547 : vector<8x128xf32>
    %c1_255 = arith.constant 1 : index
    %c0_256 = arith.constant 0 : index
    %c0_257 = arith.constant 0 : index
    %549 = vector.load %arg12[%c1_255, %c0_256, %c0_257] : memref<2x8x128xf32, #tpu.memory_space<vmem>>, vector<1x8x128xf32>
    %550 = vector.shape_cast %549 : vector<1x8x128xf32> to vector<8x128xf32>
    %551 = vector.shape_cast %548 : vector<8x128xf32> to vector<1x8x128xf32>
    tpu.vector_store %arg12[%c1_255, %c0_256, %c0_257], %551 {strides = array<i32>} : memref<2x8x128xf32, #tpu.memory_space<vmem>>, vector<1x8x128xf32>,
    %c1_258 = arith.constant 1 : index
    %c0_259 = arith.constant 0 : index
    %c0_260 = arith.constant 0 : index
    %552 = vector.load %arg13[%c1_258, %c0_259, %c0_260] : memref<2x8x128xf32, #tpu.memory_space<vmem>>, vector<1x8x128xf32>
    %553 = vector.shape_cast %552 : vector<1x8x128xf32> to vector<8x128xf32>
    %554 = vector.shape_cast %546 : vector<8x128xf32> to vector<1x8x128xf32>
    tpu.vector_store %arg13[%c1_258, %c0_259, %c0_260], %554 {strides = array<i32>} : memref<2x8x128xf32, #tpu.memory_space<vmem>>, vector<1x8x128xf32>,
    %555 = arith.index_cast %c7_i32 : i32 to index
    %c0_261 = arith.constant 0 : index
    %c0_262 = arith.constant 0 : index
    %556 = vector.load %arg9[%555, %c0_261, %c0_262] : memref<8x8x128xf32, #tpu.memory_space<vmem>>, vector<1x8x128xf32>
    %557 = vector.shape_cast %556 : vector<1x8x128xf32> to vector<8x128xf32>
    %558 = vector.shape_cast %548 : vector<8x128xf32> to vector<1x8x128xf32>
    tpu.vector_store %arg9[%555, %c0_261, %c0_262], %558 {strides = array<i32>} : memref<8x8x128xf32, #tpu.memory_space<vmem>>, vector<1x8x128xf32>,
    %c8_i32 = arith.constant 8 : i32
    %c0_i32_263 = arith.constant 0 : i32
    %559 = arith.cmpi eq, %arg1, %c0_i32_263 : i32
    %560 = arith.extui %559 : i1 to i32
    %c0_i32_264 = arith.constant 0 : i32
    %561 = arith.cmpi ne, %560, %c0_i32_264 : i32
    scf.if %561 {
      %c0_265 = arith.constant 0 : index
      %c0_266 = arith.constant 0 : index
      %c0_267 = arith.constant 0 : index
      %562 = vector.load %arg12[%c0_265, %c0_266, %c0_267] : memref<2x8x128xf32, #tpu.memory_space<vmem>>, vector<2x8x128xf32>
      %c0_268 = arith.constant 0 : index
      %c0_269 = arith.constant 0 : index
      %c0_270 = arith.constant 0 : index
      %563 = vector.load %arg10[%c0_268, %c0_269, %c0_270] : memref<2x8x128xf32, #tpu.memory_space<vmem>>, vector<2x8x128xf32>
      tpu.vector_store %arg10[%c0_268, %c0_269, %c0_270], %562 {strides = array<i32>} : memref<2x8x128xf32, #tpu.memory_space<vmem>>, vector<2x8x128xf32>,
      %c0_271 = arith.constant 0 : index
      %c0_272 = arith.constant 0 : index
      %c0_273 = arith.constant 0 : index
      %564 = vector.load %arg13[%c0_271, %c0_272, %c0_273] : memref<2x8x128xf32, #tpu.memory_space<vmem>>, vector<2x8x128xf32>
      %c0_274 = arith.constant 0 : index
      %c0_275 = arith.constant 0 : index
      %c0_276 = arith.constant 0 : index
      %565 = vector.load %arg11[%c0_274, %c0_275, %c0_276] : memref<2x8x128xf32, #tpu.memory_space<vmem>>, vector<2x8x128xf32>
      tpu.vector_store %arg11[%c0_274, %c0_275, %c0_276], %564 {strides = array<i32>} : memref<2x8x128xf32, #tpu.memory_space<vmem>>, vector<2x8x128xf32>,
    } else {
    }
    return
  }
  func.func @transform_0(%arg0: i32, %arg1: i32) -> (i32, i32, i32) {
    %c0_i32 = arith.constant 0 : i32
    %c0_i32_0 = arith.constant 0 : i32
    return %arg1, %arg0, %c0_i32 : i32, i32, i32
  }
  func.func @transform_1(%arg0: i32, %arg1: i32) -> (i32, i32, i32) {
    %c0_i32 = arith.constant 0 : i32
    %c0_i32_0 = arith.constant 0 : i32
    %c0_i32_1 = arith.constant 0 : i32
    return %c0_i32, %arg0, %c0_i32_0 : i32, i32, i32
  }
  func.func @transform_2(%arg0: i32, %arg1: i32) -> (i32, i32, i32) {
    %c0_i32 = arith.constant 0 : i32
    %c0_i32_0 = arith.constant 0 : i32
    %c0_i32_1 = arith.constant 0 : i32
    return %c0_i32, %arg0, %c0_i32_0 : i32, i32, i32
  }
  func.func @transform_3(%arg0: i32, %arg1: i32) -> (i32, i32) {
    %c0_i32 = arith.constant 0 : i32
    %c0_i32_0 = arith.constant 0 : i32
    %c0_i32_1 = arith.constant 0 : i32
    return %c0_i32, %c0_i32_0 : i32, i32
  }
  func.func @transform_4(%arg0: i32, %arg1: i32) -> (i32, i32) {
    %c0_i32 = arith.constant 0 : i32
    %c0_i32_0 = arith.constant 0 : i32
    %c0_i32_1 = arith.constant 0 : i32
    return %c0_i32, %c0_i32_0 : i32, i32
  }
  func.func @transform_5(%arg0: i32, %arg1: i32) -> (i32, i32) {
    %c0_i32 = arith.constant 0 : i32
    %c0_i32_0 = arith.constant 0 : i32
    %c0_i32_1 = arith.constant 0 : i32
    return %c0_i32, %c0_i32_0 : i32, i32
  }
  func.func @transform_6(%arg0: i32, %arg1: i32) -> (i32, i32) {
    %c0_i32 = arith.constant 0 : i32
    %c0_i32_0 = arith.constant 0 : i32
    %c0_i32_1 = arith.constant 0 : i32
    return %c0_i32, %c0_i32_0 : i32, i32
  }
  func.func @transform_7(%arg0: i32, %arg1: i32) -> (i32, i32, i32) {
    %c0_i32 = arith.constant 0 : i32
    %c0_i32_0 = arith.constant 0 : i32
    return %arg1, %arg0, %c0_i32 : i32, i32, i32
  }
  func.func @transform_8(%arg0: i32, %arg1: i32) -> (i32, i32, i32) {
    %c0_i32 = arith.constant 0 : i32
    %c0_i32_0 = arith.constant 0 : i32
    %c0_i32_1 = arith.constant 0 : i32
    return %c0_i32, %arg0, %c0_i32_0 : i32, i32, i32
  }
  func.func @transform_9(%arg0: i32, %arg1: i32) -> (i32, i32, i32) {
    %c0_i32 = arith.constant 0 : i32
    %c0_i32_0 = arith.constant 0 : i32
    %c0_i32_1 = arith.constant 0 : i32
    return %c0_i32, %arg0, %c0_i32_0 : i32, i32, i32
  }
}

</mosaic_0001>

<llo_original>
// kernel: tpu_custom_call.1
$region0: #{tpu_custom_call.1}
  #allocation0 [shape = 'u32[]', space=smem, size = 0x4, offset = 0x4, fixed_abs, tag = 'smem constant byte address 0x4 - core index']
  #allocation1 [shape = 'u32[144,128]{1,0:T(1,128)}', space=vmem, size = 0x12000, scoped, tag = 'internal scratch']
  #allocation2 [shape = 'f32[2,8,128]{2,1,0:T(8,128)}', space=vmem, size = 0x2000, scoped, tag = 'scratch operand']
  #allocation3 [shape = 'f32[2,8,128]{2,1,0:T(8,128)}', space=vmem, size = 0x2000, scoped, tag = 'scratch operand']
  %s0 = inlined_call_operand.hbm [shape: f32[8,8,128], index: 0, kind: input, shape index: {}]
  %s1 = inlined_call_operand.hbm [shape: f32[2,8,128], index: 1, kind: input, shape index: {}]
  %s2 = inlined_call_operand.hbm [shape: f32[2,8,128], index: 2, kind: input, shape index: {}]
  %s3 = inlined_call_operand.hbm [shape: bf16[256,512], index: 3, kind: input, shape index: {}]
  %s4 = inlined_call_operand.hbm [shape: f32[1,512], index: 4, kind: input, shape index: {}]
  %s5 = inlined_call_operand.hbm [shape: bf16[256,512], index: 5, kind: input, shape index: {}]
  %s6 = inlined_call_operand.hbm [shape: f32[1,512], index: 6, kind: input, shape index: {}]
  %s7 = inlined_call_operand.hbm [shape: f32[8,8,128], index: 7, kind: output, shape index: {0}]
  %s8 = inlined_call_operand.hbm [shape: f32[2,8,128], index: 8, kind: output, shape index: {1}]
  %s9 = inlined_call_operand.hbm [shape: f32[2,8,128], index: 9, kind: output, shape index: {2}]
  %10 = xla_tuple %s7, %s8, %s9
  %s11 = sld [smem:[#allocation0]]
  $region90: #{tpu_custom_call.1} parent=0
    _
  %s13 = ssub.s32 1, %s11
  %s14 = scalar_select 0, %s13, %s11
  $region1: #{tpu_custom_call.1} parent=0
    #allocation4 [shape = 'u8[32768]{0}', space=vmem, size = 0x8000, scoped, tag = 'input window, operand 0, single buffered']
    #allocation5 [shape = 's32[1]{0}', space=sflag, size = 0x4, scoped, tag = 'scoped memory for tpu_custom_call.1']
    #allocation6 [shape = 's32[1]{0}', space=sflag, size = 0x4, scoped, tag = 'scoped memory for tpu_custom_call.1']
    #allocation7 [shape = 'u8[8192]{0}', space=vmem, size = 0x2000, scoped, tag = 'input window, operand 1, single buffered']
    #allocation8 [shape = 's32[1]{0}', space=sflag, size = 0x4, scoped, tag = 'scoped memory for tpu_custom_call.1']
    #allocation9 [shape = 'u8[8192]{0}', space=vmem, size = 0x2000, scoped, tag = 'input window, operand 2, single buffered']
    #allocation10 [shape = 'u8[262144]{0}', space=vmem, size = 0x40000, scoped, tag = 'input window, operand 3, single buffered']
    #allocation11 [shape = 's32[1]{0}', space=sflag, size = 0x4, scoped, tag = 'scoped memory for tpu_custom_call.1']
    #allocation12 [shape = 'u8[2048]{0}', space=vmem, size = 0x800, scoped, tag = 'input window, operand 4, single buffered']
    #allocation13 [shape = 'u8[262144]{0}', space=vmem, size = 0x40000, scoped, tag = 'input window, operand 5, single buffered']
    #allocation14 [shape = 's32[1]{0}', space=sflag, size = 0x4, scoped, tag = 'scoped memory for tpu_custom_call.1']
    #allocation15 [shape = 'u8[2048]{0}', space=vmem, size = 0x800, scoped, tag = 'input window, operand 6, single buffered']
    #allocation16 [shape = 'u8[32768]{0}', space=vmem, size = 0x8000, scoped, tag = 'output window, operand 0, single buffered']
    #allocation17 [shape = 'u8[8192]{0}', space=vmem, size = 0x2000, scoped, tag = 'output window, operand 1, single buffered']
    #allocation18 [shape = 's32[1]{0}', space=sflag, size = 0x4, scoped, tag = 'scoped memory for tpu_custom_call.1']
    #allocation19 [shape = 'u8[8192]{0}', space=vmem, size = 0x2000, scoped, tag = 'output window, operand 2, single buffered']
    %15 = vsyncpa [#allocation5], 0
    %16 = vsyncpa [#allocation8], 0
    %17 = vsyncpa [#allocation11], 0
    %18 = vsyncpa [#allocation14], 0
    %19 = vsyncpa [#allocation6], 0
    %20 = vsyncpa [#allocation18], 0
    // Predicated region
    $region2: #{tpu_custom_call.1} parent=1 // pred_check
      _
    $region3: #{tpu_custom_call.1} parent=1 // pred_check_branch
      %22 = sbr.rel (0) target = $region5
    $region4: #{tpu_custom_call.1} parent=1 // pred_region
      %s24 = ssub.s32 1024, 1024
      %25 = vsyncadd [#allocation5], %s24
      %s26 = sshll.u32 [#allocation4], 4
      %s27 = int_to_ptr.vmem [resolvable:$true] %s26
      %32 = dma.hbm_to_vmem [thread:$0]  %s0, 1024, %s27, [#allocation5], 128, 128, 8
    $region5: #{tpu_custom_call.1} parent=1 // pred_fallthru
      _
    // Predicated region
    $region6: #{tpu_custom_call.1} parent=1 // pred_check
      _
    $region7: #{tpu_custom_call.1} parent=1 // pred_check_branch
      %34 = sbr.rel (0) target = $region9
    $region8: #{tpu_custom_call.1} parent=1 // pred_region
      %s36 = ssub.s32 256, 256
      %37 = vsyncadd [#allocation8], %s36
      %s38 = sshll.u32 [#allocation7], 4
      %s39 = int_to_ptr.vmem [resolvable:$true] %s38
      %44 = dma.hbm_to_vmem [thread:$0]  %s1, 256, %s39, [#allocation8], 128, 128, 8
    $region9: #{tpu_custom_call.1} parent=1 // pred_fallthru
      _
    // Predicated region
    $region10: #{tpu_custom_call.1} parent=1 // pred_check
      _
    $region11: #{tpu_custom_call.1} parent=1 // pred_check_branch
      %46 = sbr.rel (0) target = $region13
    $region12: #{tpu_custom_call.1} parent=1 // pred_region
      %s48 = ssub.s32 256, 256
      %49 = vsyncadd [#allocation8], %s48
      %s50 = sshll.u32 [#allocation9], 4
      %s51 = int_to_ptr.vmem [resolvable:$true] %s50
      %56 = dma.hbm_to_vmem [thread:$0]  %s2, 256, %s51, [#allocation8], 128, 128, 8
    $region13: #{tpu_custom_call.1} parent=1 // pred_fallthru
      _
    // Predicated region
    $region14: #{tpu_custom_call.1} parent=1 // pred_check
      _
    $region15: #{tpu_custom_call.1} parent=1 // pred_check_branch
      %58 = sbr.rel (0) target = $region17
    $region16: #{tpu_custom_call.1} parent=1 // pred_region
      %s60 = ssub.s32 8192, 8192
      %61 = vsyncadd [#allocation11], %s60
      %s62 = sshll.u32 [#allocation10], 4
      %s63 = int_to_ptr.vmem [resolvable:$true] %s62
      %68 = dma.hbm_to_vmem [thread:$0]  %s3, 8192, %s63, [#allocation11], 256, 256, 16
    $region17: #{tpu_custom_call.1} parent=1 // pred_fallthru
      _
    // Predicated region
    $region18: #{tpu_custom_call.1} parent=1 // pred_check
      _
    $region19: #{tpu_custom_call.1} parent=1 // pred_check_branch
      %70 = sbr.rel (0) target = $region21
    $region20: #{tpu_custom_call.1} parent=1 // pred_region
      %s72 = ssub.s32 64, 64
      %73 = vsyncadd [#allocation11], %s72
      %s75 = sshll.u32 [#allocation12], 4
      %s76 = int_to_ptr.vmem [resolvable:$true] %s75
      %78 = dma.hbm_to_vmem [thread:$0]  %s4, 64, %s76, [#allocation11]
    $region21: #{tpu_custom_call.1} parent=1 // pred_fallthru
      _
    // Predicated region
    $region22: #{tpu_custom_call.1} parent=1 // pred_check
      _
    $region23: #{tpu_custom_call.1} parent=1 // pred_check_branch
      %80 = sbr.rel (0) target = $region25
    $region24: #{tpu_custom_call.1} parent=1 // pred_region
      %s82 = ssub.s32 8192, 8192
      %83 = vsyncadd [#allocation14], %s82
      %s84 = sshll.u32 [#allocation13], 4
      %s85 = int_to_ptr.vmem [resolvable:$true] %s84
      %90 = dma.hbm_to_vmem [thread:$0]  %s5, 8192, %s85, [#allocation14], 256, 256, 16
    $region25: #{tpu_custom_call.1} parent=1 // pred_fallthru
      _
    // Predicated region
    $region26: #{tpu_custom_call.1} parent=1 // pred_check
      _
    $region27: #{tpu_custom_call.1} parent=1 // pred_check_branch
      %92 = sbr.rel (0) target = $region29
    $region28: #{tpu_custom_call.1} parent=1 // pred_region
      %s94 = ssub.s32 64, 64
      %95 = vsyncadd [#allocation14], %s94
      %s97 = sshll.u32 [#allocation15], 4
      %s98 = int_to_ptr.vmem [resolvable:$true] %s97
      %100 = dma.hbm_to_vmem [thread:$0]  %s6, 64, %s98, [#allocation14]
    $region29: #{tpu_custom_call.1} parent=1 // pred_fallthru
      _
    // Predicated region
    $region30: #{tpu_custom_call.1} parent=1 // pred_check
      _
    $region31: #{tpu_custom_call.1} parent=1 // pred_check_branch
      %102 = sbr.rel (0) target = $region33
    $region32: #{tpu_custom_call.1} parent=1 // pred_region
      %103 = dma.done [#allocation5], 1024
    $region33: #{tpu_custom_call.1} parent=1 // pred_fallthru
      _
    // Predicated region
    $region34: #{tpu_custom_call.1} parent=1 // pred_check
      _
    $region35: #{tpu_custom_call.1} parent=1 // pred_check_branch
      %105 = sbr.rel (0) target = $region37
    $region36: #{tpu_custom_call.1} parent=1 // pred_region
      %106 = dma.done [#allocation8], 256
    $region37: #{tpu_custom_call.1} parent=1 // pred_fallthru
      _
    // Predicated region
    $region38: #{tpu_custom_call.1} parent=1 // pred_check
      _
    $region39: #{tpu_custom_call.1} parent=1 // pred_check_branch
      %108 = sbr.rel (0) target = $region41
    $region40: #{tpu_custom_call.1} parent=1 // pred_region
      %109 = dma.done [#allocation8], 256
    $region41: #{tpu_custom_call.1} parent=1 // pred_fallthru
      _
    // Predicated region
    $region42: #{tpu_custom_call.1} parent=1 // pred_check
      _
    $region43: #{tpu_custom_call.1} parent=1 // pred_check_branch
      %111 = sbr.rel (0) target = $region45
    $region44: #{tpu_custom_call.1} parent=1 // pred_region
      %112 = dma.done [#allocation11], 8192
    $region45: #{tpu_custom_call.1} parent=1 // pred_fallthru
      _
    // Predicated region
    $region46: #{tpu_custom_call.1} parent=1 // pred_check
      _
    $region47: #{tpu_custom_call.1} parent=1 // pred_check_branch
      %114 = sbr.rel (0) target = $region49
    $region48: #{tpu_custom_call.1} parent=1 // pred_region
      %115 = dma.done [#allocation11], 64
    $region49: #{tpu_custom_call.1} parent=1 // pred_fallthru
      _
    // Predicated region
    $region50: #{tpu_custom_call.1} parent=1 // pred_check
      _
    $region51: #{tpu_custom_call.1} parent=1 // pred_check_branch
      %117 = sbr.rel (0) target = $region53
    $region52: #{tpu_custom_call.1} parent=1 // pred_region
      %118 = dma.done [#allocation14], 8192
    $region53: #{tpu_custom_call.1} parent=1 // pred_fallthru
      _
    // Predicated region
    $region54: #{tpu_custom_call.1} parent=1 // pred_check
      _
    $region55: #{tpu_custom_call.1} parent=1 // pred_check_branch
      %120 = sbr.rel (0) target = $region57
    $region56: #{tpu_custom_call.1} parent=1 // pred_region
      %121 = dma.done [#allocation14], 64
    $region57: #{tpu_custom_call.1} parent=1 // pred_fallthru
      _
    %p122 = scmp.eq.s32.totalorder 0, 0
    // Predicated region
    $region58: #{tpu_custom_call.1} parent=1 // pred_check
      %p123 = pneg %p122
    $region59: #{tpu_custom_call.1} parent=1 // pred_check_branch
      %125 = sbr.rel (%p123) target = $region61
    $region60: #{tpu_custom_call.1} parent=1 // pred_region
      %v126 = vld [vmem:[#allocation7] sm:$0xff]
      %v127 = vld [vmem:[#allocation7 + $0x8] sm:$0xff]
      %128 = vst [vmem:[#allocation2] sm:$0xff] %v126
      %129 = vst [vmem:[#allocation2 + $0x8] sm:$0xff] %v127
      %v130 = vld [vmem:[#allocation9] sm:$0xff]
      %v131 = vld [vmem:[#allocation9 + $0x8] sm:$0xff]
      %132 = vst [vmem:[#allocation3] sm:$0xff] %v130
      %133 = vst [vmem:[#allocation3 + $0x8] sm:$0xff] %v131
    $region61: #{tpu_custom_call.1} parent=1 // pred_fallthru
      _
    %v134 = vld [vmem:[#allocation10] sm:$0xff]
    %v135 = vld [vmem:[#allocation10 + $0x8] sm:$0xff]
    %v136 = vld [vmem:[#allocation10 + $0x10] sm:$0xff]
    %v137 = vld [vmem:[#allocation10 + $0x18] sm:$0xff]
    %v138 = vld [vmem:[#allocation10 + $0x20] sm:$0xff]
    %v139 = vld [vmem:[#allocation10 + $0x28] sm:$0xff]
    %v140 = vld [vmem:[#allocation10 + $0x30] sm:$0xff]
    %v141 = vld [vmem:[#allocation10 + $0x38] sm:$0xff]
    %v142 = vld [vmem:[#allocation10 + $0x40] sm:$0xff]
    %v143 = vld [vmem:[#allocation10 + $0x48] sm:$0xff]
    %v144 = vld [vmem:[#allocation10 + $0x50] sm:$0xff]
    %v145 = vld [vmem:[#allocation10 + $0x58] sm:$0xff]
    %v146 = vld [vmem:[#allocation10 + $0x60] sm:$0xff]
    %v147 = vld [vmem:[#allocation10 + $0x68] sm:$0xff]
    %v148 = vld [vmem:[#allocation10 + $0x70] sm:$0xff]
    %v149 = vld [vmem:[#allocation10 + $0x78] sm:$0xff]
    %v150 = vld [vmem:[#allocation10 + $0x80] sm:$0xff]
    %v151 = vld [vmem:[#allocation10 + $0x88] sm:$0xff]
    %v152 = vld [vmem:[#allocation10 + $0x90] sm:$0xff]
    %v153 = vld [vmem:[#allocation10 + $0x98] sm:$0xff]
    %v154 = vld [vmem:[#allocation10 + $0xa0] sm:$0xff]
    %v155 = vld [vmem:[#allocation10 + $0xa8] sm:$0xff]
    %v156 = vld [vmem:[#allocation10 + $0xb0] sm:$0xff]
    %v157 = vld [vmem:[#allocation10 + $0xb8] sm:$0xff]
    %v158 = vld [vmem:[#allocation10 + $0xc0] sm:$0xff]
    %v159 = vld [vmem:[#allocation10 + $0xc8] sm:$0xff]
    %v160 = vld [vmem:[#allocation10 + $0xd0] sm:$0xff]
    %v161 = vld [vmem:[#allocation10 + $0xd8] sm:$0xff]
    %v162 = vld [vmem:[#allocation10 + $0xe0] sm:$0xff]
    %v163 = vld [vmem:[#allocation10 + $0xe8] sm:$0xff]
    %v164 = vld [vmem:[#allocation10 + $0xf0] sm:$0xff]
    %v165 = vld [vmem:[#allocation10 + $0xf8] sm:$0xff]
    %v166 = vld [vmem:[#allocation10 + $0x100] sm:$0xff]
    %v167 = vld [vmem:[#allocation10 + $0x108] sm:$0xff]
    %v168 = vld [vmem:[#allocation10 + $0x110] sm:$0xff]
    %v169 = vld [vmem:[#allocation10 + $0x118] sm:$0xff]
    %v170 = vld [vmem:[#allocation10 + $0x120] sm:$0xff]
    %v171 = vld [vmem:[#allocation10 + $0x128] sm:$0xff]
    %v172 = vld [vmem:[#allocation10 + $0x130] sm:$0xff]
    %v173 = vld [vmem:[#allocation10 + $0x138] sm:$0xff]
    %v174 = vld [vmem:[#allocation10 + $0x140] sm:$0xff]
    %v175 = vld [vmem:[#allocation10 + $0x148] sm:$0xff]
    %v176 = vld [vmem:[#allocation10 + $0x150] sm:$0xff]
    %v177 = vld [vmem:[#allocation10 + $0x158] sm:$0xff]
    %v178 = vld [vmem:[#allocation10 + $0x160] sm:$0xff]
    %v179 = vld [vmem:[#allocation10 + $0x168] sm:$0xff]
    %v180 = vld [vmem:[#allocation10 + $0x170] sm:$0xff]
    %v181 = vld [vmem:[#allocation10 + $0x178] sm:$0xff]
    %v182 = vld [vmem:[#allocation10 + $0x180] sm:$0xff]
    %v183 = vld [vmem:[#allocation10 + $0x188] sm:$0xff]
    %v184 = vld [vmem:[#allocation10 + $0x190] sm:$0xff]
    %v185 = vld [vmem:[#allocation10 + $0x198] sm:$0xff]
    %v186 = vld [vmem:[#allocation10 + $0x1a0] sm:$0xff]
    %v187 = vld [vmem:[#allocation10 + $0x1a8] sm:$0xff]
    %v188 = vld [vmem:[#allocation10 + $0x1b0] sm:$0xff]
    %v189 = vld [vmem:[#allocation10 + $0x1b8] sm:$0xff]
    %v190 = vld [vmem:[#allocation10 + $0x1c0] sm:$0xff]
    %v191 = vld [vmem:[#allocation10 + $0x1c8] sm:$0xff]
    %v192 = vld [vmem:[#allocation10 + $0x1d0] sm:$0xff]
    %v193 = vld [vmem:[#allocation10 + $0x1d8] sm:$0xff]
    %v194 = vld [vmem:[#allocation10 + $0x1e0] sm:$0xff]
    %v195 = vld [vmem:[#allocation10 + $0x1e8] sm:$0xff]
    %v196 = vld [vmem:[#allocation10 + $0x1f0] sm:$0xff]
    %v197 = vld [vmem:[#allocation10 + $0x1f8] sm:$0xff]
    %v198 = vld [vmem:[#allocation13] sm:$0xff]
    %v199 = vld [vmem:[#allocation13 + $0x8] sm:$0xff]
    %v200 = vld [vmem:[#allocation13 + $0x10] sm:$0xff]
    %v201 = vld [vmem:[#allocation13 + $0x18] sm:$0xff]
    %v202 = vld [vmem:[#allocation13 + $0x20] sm:$0xff]
    %v203 = vld [vmem:[#allocation13 + $0x28] sm:$0xff]
    %v204 = vld [vmem:[#allocation13 + $0x30] sm:$0xff]
    %v205 = vld [vmem:[#allocation13 + $0x38] sm:$0xff]
    %v206 = vld [vmem:[#allocation13 + $0x40] sm:$0xff]
    %v207 = vld [vmem:[#allocation13 + $0x48] sm:$0xff]
    %v208 = vld [vmem:[#allocation13 + $0x50] sm:$0xff]
    %v209 = vld [vmem:[#allocation13 + $0x58] sm:$0xff]
    %v210 = vld [vmem:[#allocation13 + $0x60] sm:$0xff]
    %v211 = vld [vmem:[#allocation13 + $0x68] sm:$0xff]
    %v212 = vld [vmem:[#allocation13 + $0x70] sm:$0xff]
    %v213 = vld [vmem:[#allocation13 + $0x78] sm:$0xff]
    %v214 = vld [vmem:[#allocation13 + $0x80] sm:$0xff]
    %v215 = vld [vmem:[#allocation13 + $0x88] sm:$0xff]
    %v216 = vld [vmem:[#allocation13 + $0x90] sm:$0xff]
    %v217 = vld [vmem:[#allocation13 + $0x98] sm:$0xff]
    %v218 = vld [vmem:[#allocation13 + $0xa0] sm:$0xff]
    %v219 = vld [vmem:[#allocation13 + $0xa8] sm:$0xff]
    %v220 = vld [vmem:[#allocation13 + $0xb0] sm:$0xff]
    %v221 = vld [vmem:[#allocation13 + $0xb8] sm:$0xff]
    %v222 = vld [vmem:[#allocation13 + $0xc0] sm:$0xff]
    %v223 = vld [vmem:[#allocation13 + $0xc8] sm:$0xff]
    %v224 = vld [vmem:[#allocation13 + $0xd0] sm:$0xff]
    %v225 = vld [vmem:[#allocation13 + $0xd8] sm:$0xff]
    %v226 = vld [vmem:[#allocation13 + $0xe0] sm:$0xff]
    %v227 = vld [vmem:[#allocation13 + $0xe8] sm:$0xff]
    %v228 = vld [vmem:[#allocation13 + $0xf0] sm:$0xff]
    %v229 = vld [vmem:[#allocation13 + $0xf8] sm:$0xff]
    %v230 = vld [vmem:[#allocation13 + $0x100] sm:$0xff]
    %v231 = vld [vmem:[#allocation13 + $0x108] sm:$0xff]
    %v232 = vld [vmem:[#allocation13 + $0x110] sm:$0xff]
    %v233 = vld [vmem:[#allocation13 + $0x118] sm:$0xff]
    %v234 = vld [vmem:[#allocation13 + $0x120] sm:$0xff]
    %v235 = vld [vmem:[#allocation13 + $0x128] sm:$0xff]
    %v236 = vld [vmem:[#allocation13 + $0x130] sm:$0xff]
    %v237 = vld [vmem:[#allocation13 + $0x138] sm:$0xff]
    %v238 = vld [vmem:[#allocation13 + $0x140] sm:$0xff]
    %v239 = vld [vmem:[#allocation13 + $0x148] sm:$0xff]
    %v240 = vld [vmem:[#allocation13 + $0x150] sm:$0xff]
    %v241 = vld [vmem:[#allocation13 + $0x158] sm:$0xff]
    %v242 = vld [vmem:[#allocation13 + $0x160] sm:$0xff]
    %v243 = vld [vmem:[#allocation13 + $0x168] sm:$0xff]
    %v244 = vld [vmem:[#allocation13 + $0x170] sm:$0xff]
    %v245 = vld [vmem:[#allocation13 + $0x178] sm:$0xff]
    %v246 = vld [vmem:[#allocation13 + $0x180] sm:$0xff]
    %v247 = vld [vmem:[#allocation13 + $0x188] sm:$0xff]
    %v248 = vld [vmem:[#allocation13 + $0x190] sm:$0xff]
    %v249 = vld [vmem:[#allocation13 + $0x198] sm:$0xff]
    %v250 = vld [vmem:[#allocation13 + $0x1a0] sm:$0xff]
    %v251 = vld [vmem:[#allocation13 + $0x1a8] sm:$0xff]
    %v252 = vld [vmem:[#allocation13 + $0x1b0] sm:$0xff]
    %v253 = vld [vmem:[#allocation13 + $0x1b8] sm:$0xff]
    %v254 = vld [vmem:[#allocation13 + $0x1c0] sm:$0xff]
    %v255 = vld [vmem:[#allocation13 + $0x1c8] sm:$0xff]
    %v256 = vld [vmem:[#allocation13 + $0x1d0] sm:$0xff]
    %v257 = vld [vmem:[#allocation13 + $0x1d8] sm:$0xff]
    %v258 = vld [vmem:[#allocation13 + $0x1e0] sm:$0xff]
    %v259 = vld [vmem:[#allocation13 + $0x1e8] sm:$0xff]
    %v260 = vld [vmem:[#allocation13 + $0x1f0] sm:$0xff]
    %v261 = vld [vmem:[#allocation13 + $0x1f8] sm:$0xff]
    %v262 = vld [vmem:[#allocation12] sm:$0xf]
    %v263 = vld [vmem:[#allocation15] sm:$0xf]
    %v264 = vld [vmem:[#allocation4] sm:$0xff]
    %v265 = vld [vmem:[#allocation2] sm:$0xff]
    %v266 = vld [vmem:[#allocation3] sm:$0xff]
    %v267 = vpack.c.bf16 %v264, %v264
    %v268 = vpack.c.bf16 %v265, %v265
    %v270 = vlaneseq
    %v271 = vshrl.u32 %v270, 7
    %v272 = vsub.s32 0, %v271
    %v273 = vrot.slane %v262, %v272
    %v274 = vlaneseq
    %v275 = vshrl.u32 %v274, 7
    %v276 = vsub.s32 1, %v275
    %v277 = vrot.slane %v262, %v276
    %v278 = vlaneseq
    %v279 = vshrl.u32 %v278, 7
    %v280 = vsub.s32 2, %v279
    %v281 = vrot.slane %v262, %v280
    %v282 = vlaneseq
    %v283 = vshrl.u32 %v282, 7
    %v284 = vsub.s32 3, %v283
    %v285 = vrot.slane %v262, %v284
    %v354 = vunpack.c.l.b16 %v134
    %v355 = vunpack.c.h.b16 %v134
    %v356 = vunpack.c.l.b16 %v135
    %v357 = vunpack.c.h.b16 %v135
    %v358 = vunpack.c.l.b16 %v136
    %v359 = vunpack.c.h.b16 %v136
    %v360 = vunpack.c.l.b16 %v137
    %v361 = vunpack.c.h.b16 %v137
    %v362 = vunpack.c.l.b16 %v138
    %v363 = vunpack.c.h.b16 %v138
    %v364 = vunpack.c.l.b16 %v139
    %v365 = vunpack.c.h.b16 %v139
    %v366 = vunpack.c.l.b16 %v140
    %v367 = vunpack.c.h.b16 %v140
    %v368 = vunpack.c.l.b16 %v141
    %v369 = vunpack.c.h.b16 %v141
    %v370 = vunpack.c.l.b16 %v142
    %v371 = vunpack.c.h.b16 %v142
    %v372 = vunpack.c.l.b16 %v143
    %v373 = vunpack.c.h.b16 %v143
    %v374 = vunpack.c.l.b16 %v144
    %v375 = vunpack.c.h.b16 %v144
    %v376 = vunpack.c.l.b16 %v145
    %v377 = vunpack.c.h.b16 %v145
    %v378 = vunpack.c.l.b16 %v146
    %v379 = vunpack.c.h.b16 %v146
    %v380 = vunpack.c.l.b16 %v147
    %v381 = vunpack.c.h.b16 %v147
    %v382 = vunpack.c.l.b16 %v148
    %v383 = vunpack.c.h.b16 %v148
    %v384 = vunpack.c.l.b16 %v149
    %v385 = vunpack.c.h.b16 %v149
    %v386 = vunpack.c.l.b16 %v150
    %v387 = vunpack.c.h.b16 %v150
    %v388 = vunpack.c.l.b16 %v151
    %v389 = vunpack.c.h.b16 %v151
    %v390 = vunpack.c.l.b16 %v152
    %v391 = vunpack.c.h.b16 %v152
    %v392 = vunpack.c.l.b16 %v153
    %v393 = vunpack.c.h.b16 %v153
    %v394 = vunpack.c.l.b16 %v154
    %v395 = vunpack.c.h.b16 %v154
    %v396 = vunpack.c.l.b16 %v155
    %v397 = vunpack.c.h.b16 %v155
    %v398 = vunpack.c.l.b16 %v156
    %v399 = vunpack.c.h.b16 %v156
    %v400 = vunpack.c.l.b16 %v157
    %v401 = vunpack.c.h.b16 %v157
    %v402 = vunpack.c.l.b16 %v158
    %v403 = vunpack.c.h.b16 %v158
    %v404 = vunpack.c.l.b16 %v159
    %v405 = vunpack.c.h.b16 %v159
    %v406 = vunpack.c.l.b16 %v160
    %v407 = vunpack.c.h.b16 %v160
    %v408 = vunpack.c.l.b16 %v161
    %v409 = vunpack.c.h.b16 %v161
    %v410 = vunpack.c.l.b16 %v162
    %v411 = vunpack.c.h.b16 %v162
    %v412 = vunpack.c.l.b16 %v163
    %v413 = vunpack.c.h.b16 %v163
    %v414 = vunpack.c.l.b16 %v164
    %v415 = vunpack.c.h.b16 %v164
    %v416 = vunpack.c.l.b16 %v165
    %v417 = vunpack.c.h.b16 %v165
    %v418 = vunpack.c.l.b16 %v166
    %v419 = vunpack.c.h.b16 %v166
    %v420 = vunpack.c.l.b16 %v167
    %v421 = vunpack.c.h.b16 %v167
    %v422 = vunpack.c.l.b16 %v168
    %v423 = vunpack.c.h.b16 %v168
    %v424 = vunpack.c.l.b16 %v169
    %v425 = vunpack.c.h.b16 %v169
    %v426 = vunpack.c.l.b16 %v170
    %v427 = vunpack.c.h.b16 %v170
    %v428 = vunpack.c.l.b16 %v171
    %v429 = vunpack.c.h.b16 %v171
    %v430 = vunpack.c.l.b16 %v172
    %v431 = vunpack.c.h.b16 %v172
    %v432 = vunpack.c.l.b16 %v173
    %v433 = vunpack.c.h.b16 %v173
    %v434 = vunpack.c.l.b16 %v174
    %v435 = vunpack.c.h.b16 %v174
    %v436 = vunpack.c.l.b16 %v175
    %v437 = vunpack.c.h.b16 %v175
    %v438 = vunpack.c.l.b16 %v176
    %v439 = vunpack.c.h.b16 %v176
    %v440 = vunpack.c.l.b16 %v177
    %v441 = vunpack.c.h.b16 %v177
    %v442 = vunpack.c.l.b16 %v178
    %v443 = vunpack.c.h.b16 %v178
    %v444 = vunpack.c.l.b16 %v179
    %v445 = vunpack.c.h.b16 %v179
    %v446 = vunpack.c.l.b16 %v180
    %v447 = vunpack.c.h.b16 %v180
    %v448 = vunpack.c.l.b16 %v181
    %v449 = vunpack.c.h.b16 %v181
    %v450 = vunpack.c.l.b16 %v182
    %v451 = vunpack.c.h.b16 %v182
    %v452 = vunpack.c.l.b16 %v183
    %v453 = vunpack.c.h.b16 %v183
    %v454 = vunpack.c.l.b16 %v184
    %v455 = vunpack.c.h.b16 %v184
    %v456 = vunpack.c.l.b16 %v185
    %v457 = vunpack.c.h.b16 %v185
    %v458 = vunpack.c.l.b16 %v186
    %v459 = vunpack.c.h.b16 %v186
    %v460 = vunpack.c.l.b16 %v187
    %v461 = vunpack.c.h.b16 %v187
    %v462 = vunpack.c.l.b16 %v188
    %v463 = vunpack.c.h.b16 %v188
    %v464 = vunpack.c.l.b16 %v189
    %v465 = vunpack.c.h.b16 %v189
    %v466 = vunpack.c.l.b16 %v190
    %v467 = vunpack.c.h.b16 %v190
    %v468 = vunpack.c.l.b16 %v191
    %v469 = vunpack.c.h.b16 %v191
    %v470 = vunpack.c.l.b16 %v192
    %v471 = vunpack.c.h.b16 %v192
    %v472 = vunpack.c.l.b16 %v193
    %v473 = vunpack.c.h.b16 %v193
    %v474 = vunpack.c.l.b16 %v194
    %v475 = vunpack.c.h.b16 %v194
    %v476 = vunpack.c.l.b16 %v195
    %v477 = vunpack.c.h.b16 %v195
    %v478 = vunpack.c.l.b16 %v196
    %v479 = vunpack.c.h.b16 %v196
    %v480 = vunpack.c.l.b16 %v197
    %v481 = vunpack.c.h.b16 %v197
    %v482 = vpack.c.b16 %v358, %v354
    %v483 = vpack.c.b16 %v359, %v355
    %v484 = vpack.c.b16 %v360, %v356
    %v485 = vpack.c.b16 %v361, %v357
    %v486 = vpack.c.b16 %v366, %v362
    %v487 = vpack.c.b16 %v367, %v363
    %v488 = vpack.c.b16 %v368, %v364
    %v489 = vpack.c.b16 %v369, %v365
    %v490 = vpack.c.b16 %v374, %v370
    %v491 = vpack.c.b16 %v375, %v371
    %v492 = vpack.c.b16 %v376, %v372
    %v493 = vpack.c.b16 %v377, %v373
    %v494 = vpack.c.b16 %v382, %v378
    %v495 = vpack.c.b16 %v383, %v379
    %v496 = vpack.c.b16 %v384, %v380
    %v497 = vpack.c.b16 %v385, %v381
    %v498 = vpack.c.b16 %v390, %v386
    %v499 = vpack.c.b16 %v391, %v387
    %v500 = vpack.c.b16 %v392, %v388
    %v501 = vpack.c.b16 %v393, %v389
    %v502 = vpack.c.b16 %v398, %v394
    %v503 = vpack.c.b16 %v399, %v395
    %v504 = vpack.c.b16 %v400, %v396
    %v505 = vpack.c.b16 %v401, %v397
    %v506 = vpack.c.b16 %v406, %v402
    %v507 = vpack.c.b16 %v407, %v403
    %v508 = vpack.c.b16 %v408, %v404
    %v509 = vpack.c.b16 %v409, %v405
    %v510 = vpack.c.b16 %v414, %v410
    %v511 = vpack.c.b16 %v415, %v411
    %v512 = vpack.c.b16 %v416, %v412
    %v513 = vpack.c.b16 %v417, %v413
    %v514 = vpack.c.b16 %v422, %v418
    %v515 = vpack.c.b16 %v423, %v419
    %v516 = vpack.c.b16 %v424, %v420
    %v517 = vpack.c.b16 %v425, %v421
    %v518 = vpack.c.b16 %v430, %v426
    %v519 = vpack.c.b16 %v431, %v427
    %v520 = vpack.c.b16 %v432, %v428
    %v521 = vpack.c.b16 %v433, %v429
    %v522 = vpack.c.b16 %v438, %v434
    %v523 = vpack.c.b16 %v439, %v435
    %v524 = vpack.c.b16 %v440, %v436
    %v525 = vpack.c.b16 %v441, %v437
    %v526 = vpack.c.b16 %v446, %v442
    %v527 = vpack.c.b16 %v447, %v443
    %v528 = vpack.c.b16 %v448, %v444
    %v529 = vpack.c.b16 %v449, %v445
    %v530 = vpack.c.b16 %v454, %v450
    %v531 = vpack.c.b16 %v455, %v451
    %v532 = vpack.c.b16 %v456, %v452
    %v533 = vpack.c.b16 %v457, %v453
    %v534 = vpack.c.b16 %v462, %v458
    %v535 = vpack.c.b16 %v463, %v459
    %v536 = vpack.c.b16 %v464, %v460
    %v537 = vpack.c.b16 %v465, %v461
    %v538 = vpack.c.b16 %v470, %v466
    %v539 = vpack.c.b16 %v471, %v467
    %v540 = vpack.c.b16 %v472, %v468
    %v541 = vpack.c.b16 %v473, %v469
    %v542 = vpack.c.b16 %v478, %v474
    %v543 = vpack.c.b16 %v479, %v475
    %v544 = vpack.c.b16 %v480, %v476
    %v545 = vpack.c.b16 %v481, %v477
    %610 = vmatprep.subr.bf16.mxu0 %v483
    %611 = vmatpush1.bf16.msra.mxu0 %v482
    %612 = vmatprep.subr.bf16.mxu0 %v487
    %613 = vmatpush1.bf16.msra.mxu0 %v486
    %614 = vmatprep.subr.bf16.mxu0 %v491
    %615 = vmatpush1.bf16.msra.mxu0 %v490
    %616 = vmatprep.subr.bf16.mxu0 %v495
    %617 = vmatpush1.bf16.msra.mxu0 %v494
    %618 = vmatprep.subr.bf16.mxu0 %v499
    %619 = vmatpush1.bf16.msra.mxu0 %v498
    %620 = vmatprep.subr.bf16.mxu0 %v503
    %621 = vmatpush1.bf16.msra.mxu0 %v502
    %622 = vmatprep.subr.bf16.mxu0 %v507
    %623 = vmatpush1.bf16.msra.mxu0 %v506
    %624 = vmatprep.subr.bf16.mxu0 %v511
    %625 = vmatpush1.bf16.msra.mxu0 %v510
    %626 = vmatprep.subr.bf16.mxu0 %v515
    %627 = vmatpush1.bf16.msra.mxu0 %v514
    %628 = vmatprep.subr.bf16.mxu0 %v519
    %629 = vmatpush1.bf16.msra.mxu0 %v518
    %630 = vmatprep.subr.bf16.mxu0 %v523
    %631 = vmatpush1.bf16.msra.mxu0 %v522
    %632 = vmatprep.subr.bf16.mxu0 %v527
    %633 = vmatpush1.bf16.msra.mxu0 %v526
    %634 = vmatprep.subr.bf16.mxu0 %v531
    %635 = vmatpush1.bf16.msra.mxu0 %v530
    %636 = vmatprep.subr.bf16.mxu0 %v535
    %637 = vmatpush1.bf16.msra.mxu0 %v534
    %638 = vmatprep.subr.bf16.mxu0 %v539
    %639 = vmatpush1.bf16.msra.mxu0 %v538
    %640 = vmatprep.subr.bf16.mxu0 %v543
    %641 = vmatpush1.bf16.msra.mxu0 %v542
    %642 = vmatprep.mubr.bf16.mxu0 %v268
    %643 = vmatmul.mubr.bf16.gmra.mrb[0].mxu0 %v267
    %v644 = vpop.f32.mrb[0].mxu0
    %v645 = vadd.f32 %v273, %v644
    %v646 = vpop.f32.mrb[0].mxu0
    %v647 = vadd.f32 %v277, %v646
    %v648 = vpop.f32.mrb[0].mxu0
    %v649 = vpop.f32.mrb[0].mxu0
    %650 = vdwg.mxu0
    %651 = vmatprep.subr.bf16.mxu0 %v485
    %652 = vmatpush1.bf16.msra.mxu0 %v484
    %653 = vmatprep.subr.bf16.mxu0 %v489
    %654 = vmatpush1.bf16.msra.mxu0 %v488
    %655 = vmatprep.subr.bf16.mxu0 %v493
    %656 = vmatpush1.bf16.msra.mxu0 %v492
    %657 = vmatprep.subr.bf16.mxu0 %v497
    %658 = vmatpush1.bf16.msra.mxu0 %v496
    %659 = vmatprep.subr.bf16.mxu0 %v501
    %660 = vmatpush1.bf16.msra.mxu0 %v500
    %661 = vmatprep.subr.bf16.mxu0 %v505
    %662 = vmatpush1.bf16.msra.mxu0 %v504
    %663 = vmatprep.subr.bf16.mxu0 %v509
    %664 = vmatpush1.bf16.msra.mxu0 %v508
    %665 = vmatprep.subr.bf16.mxu0 %v513
    %666 = vmatpush1.bf16.msra.mxu0 %v512
    %667 = vmatprep.subr.bf16.mxu0 %v517
    %668 = vmatpush1.bf16.msra.mxu0 %v516
    %669 = vmatprep.subr.bf16.mxu0 %v521
    %670 = vmatpush1.bf16.msra.mxu0 %v520
    %671 = vmatprep.subr.bf16.mxu0 %v525
    %672 = vmatpush1.bf16.msra.mxu0 %v524
    %673 = vmatprep.subr.bf16.mxu0 %v529
    %674 = vmatpush1.bf16.msra.mxu0 %v528
    %675 = vmatprep.subr.bf16.mxu0 %v533
    %676 = vmatpush1.bf16.msra.mxu0 %v532
    %677 = vmatprep.subr.bf16.mxu0 %v537
    %678 = vmatpush1.bf16.msra.mxu0 %v536
    %679 = vmatprep.subr.bf16.mxu0 %v541
    %680 = vmatpush1.bf16.msra.mxu0 %v540
    %681 = vmatprep.subr.bf16.mxu0 %v545
    %682 = vmatpush1.bf16.msra.mxu0 %v544
    %683 = vmatprep.mubr.bf16.mxu0 %v268
    %684 = vmatmul.mubr.bf16.gmra.mrb[0].mxu0 %v267
    %v685 = vpop.f32.mrb[0].mxu0
    %v686 = vadd.f32 %v281, %v685
    %v687 = vpop.f32.mrb[0].mxu0
    %v688 = vadd.f32 %v285, %v687
    %v689 = vpop.f32.mrb[0].mxu0
    %v690 = vpop.f32.mrb[0].mxu0
    %691 = vdwg.mxu0
    %v692 = vxor.u32 %v645, 2147483648
    %v693 = vxor.u32 %v647, 2147483648
    %v694 = vxor.u32 %v686, 2147483648
    %v695 = vmul.f32 %v692, 1.442695
    %v696 = vpow.pop %v695
    %v697 = vmul.f32 %v693, 1.442695
    %v698 = vpow.pop %v697
    %v699 = vmul.f32 %v694, 1.442695
    %v700 = vpow.pop %v699
    %v701 = vadd.f32 %v696, 1.0
    %v702 = vadd.f32 %v698, 1.0
    %v703 = vadd.f32 %v700, 1.0
    %v704 = vrcp.pop %v701
    %v705 = vmul.f32 1.0, %v704
    %v706 = vrcp.pop %v702
    %v707 = vmul.f32 1.0, %v706
    %v708 = vrcp.pop %v703
    %v709 = vmul.f32 1.0, %v708
    %v710 = vtanh.pop %v688
    %v711 = vmul.f32 %v707, %v266
    %v712 = vmul.f32 %v705, %v710
    %v713 = vadd.f32 %v711, %v712
    %v714 = vtanh.pop %v713
    %v715 = vmul.f32 %v709, %v714
    %716 = vst [vmem:[#allocation2] sm:$0xff] %v715
    %717 = vst [vmem:[#allocation3] sm:$0xff] %v713
    %s718 = scalar_lea.vmem [#allocation2], 8
    %v719 = vld [vmem:[%s718] sm:$0xff]
    %s720 = scalar_lea.vmem [#allocation3], 8
    %v721 = vld [vmem:[%s720] sm:$0xff]
    %v722 = vpack.c.bf16 %v715, %v715
    %v723 = vpack.c.bf16 %v719, %v719
    %v725 = vlaneseq
    %v726 = vshrl.u32 %v725, 7
    %v727 = vsub.s32 0, %v726
    %v728 = vrot.slane %v263, %v727
    %v729 = vlaneseq
    %v730 = vshrl.u32 %v729, 7
    %v731 = vsub.s32 1, %v730
    %v732 = vrot.slane %v263, %v731
    %v733 = vlaneseq
    %v734 = vshrl.u32 %v733, 7
    %v735 = vsub.s32 2, %v734
    %v736 = vrot.slane %v263, %v735
    %v737 = vlaneseq
    %v738 = vshrl.u32 %v737, 7
    %v739 = vsub.s32 3, %v738
    %v740 = vrot.slane %v263, %v739
    %v809 = vunpack.c.l.b16 %v198
    %v810 = vunpack.c.h.b16 %v198
    %v811 = vunpack.c.l.b16 %v199
    %v812 = vunpack.c.h.b16 %v199
    %v813 = vunpack.c.l.b16 %v200
    %v814 = vunpack.c.h.b16 %v200
    %v815 = vunpack.c.l.b16 %v201
    %v816 = vunpack.c.h.b16 %v201
    %v817 = vunpack.c.l.b16 %v202
    %v818 = vunpack.c.h.b16 %v202
    %v819 = vunpack.c.l.b16 %v203
    %v820 = vunpack.c.h.b16 %v203
    %v821 = vunpack.c.l.b16 %v204
    %v822 = vunpack.c.h.b16 %v204
    %v823 = vunpack.c.l.b16 %v205
    %v824 = vunpack.c.h.b16 %v205
    %v825 = vunpack.c.l.b16 %v206
    %v826 = vunpack.c.h.b16 %v206
    %v827 = vunpack.c.l.b16 %v207
    %v828 = vunpack.c.h.b16 %v207
    %v829 = vunpack.c.l.b16 %v208
    %v830 = vunpack.c.h.b16 %v208
    %v831 = vunpack.c.l.b16 %v209
    %v832 = vunpack.c.h.b16 %v209
    %v833 = vunpack.c.l.b16 %v210
    %v834 = vunpack.c.h.b16 %v210
    %v835 = vunpack.c.l.b16 %v211
    %v836 = vunpack.c.h.b16 %v211
    %v837 = vunpack.c.l.b16 %v212
    %v838 = vunpack.c.h.b16 %v212
    %v839 = vunpack.c.l.b16 %v213
    %v840 = vunpack.c.h.b16 %v213
    %v841 = vunpack.c.l.b16 %v214
    %v842 = vunpack.c.h.b16 %v214
    %v843 = vunpack.c.l.b16 %v215
    %v844 = vunpack.c.h.b16 %v215
    %v845 = vunpack.c.l.b16 %v216
    %v846 = vunpack.c.h.b16 %v216
    %v847 = vunpack.c.l.b16 %v217
    %v848 = vunpack.c.h.b16 %v217
    %v849 = vunpack.c.l.b16 %v218
    %v850 = vunpack.c.h.b16 %v218
    %v851 = vunpack.c.l.b16 %v219
    %v852 = vunpack.c.h.b16 %v219
    %v853 = vunpack.c.l.b16 %v220
    %v854 = vunpack.c.h.b16 %v220
    %v855 = vunpack.c.l.b16 %v221
    %v856 = vunpack.c.h.b16 %v221
    %v857 = vunpack.c.l.b16 %v222
    %v858 = vunpack.c.h.b16 %v222
    %v859 = vunpack.c.l.b16 %v223
    %v860 = vunpack.c.h.b16 %v223
    %v861 = vunpack.c.l.b16 %v224
    %v862 = vunpack.c.h.b16 %v224
    %v863 = vunpack.c.l.b16 %v225
    %v864 = vunpack.c.h.b16 %v225
    %v865 = vunpack.c.l.b16 %v226
    %v866 = vunpack.c.h.b16 %v226
    %v867 = vunpack.c.l.b16 %v227
    %v868 = vunpack.c.h.b16 %v227
    %v869 = vunpack.c.l.b16 %v228
    %v870 = vunpack.c.h.b16 %v228
    %v871 = vunpack.c.l.b16 %v229
    %v872 = vunpack.c.h.b16 %v229
    %v873 = vunpack.c.l.b16 %v230
    %v874 = vunpack.c.h.b16 %v230
    %v875 = vunpack.c.l.b16 %v231
    %v876 = vunpack.c.h.b16 %v231
    %v877 = vunpack.c.l.b16 %v232
    %v878 = vunpack.c.h.b16 %v232
    %v879 = vunpack.c.l.b16 %v233
    %v880 = vunpack.c.h.b16 %v233
    %v881 = vunpack.c.l.b16 %v234
    %v882 = vunpack.c.h.b16 %v234
    %v883 = vunpack.c.l.b16 %v235
    %v884 = vunpack.c.h.b16 %v235
    %v885 = vunpack.c.l.b16 %v236
    %v886 = vunpack.c.h.b16 %v236
    %v887 = vunpack.c.l.b16 %v237
    %v888 = vunpack.c.h.b16 %v237
    %v889 = vunpack.c.l.b16 %v238
    %v890 = vunpack.c.h.b16 %v238
    %v891 = vunpack.c.l.b16 %v239
    %v892 = vunpack.c.h.b16 %v239
    %v893 = vunpack.c.l.b16 %v240
    %v894 = vunpack.c.h.b16 %v240
    %v895 = vunpack.c.l.b16 %v241
    %v896 = vunpack.c.h.b16 %v241
    %v897 = vunpack.c.l.b16 %v242
    %v898 = vunpack.c.h.b16 %v242
    %v899 = vunpack.c.l.b16 %v243
    %v900 = vunpack.c.h.b16 %v243
    %v901 = vunpack.c.l.b16 %v244
    %v902 = vunpack.c.h.b16 %v244
    %v903 = vunpack.c.l.b16 %v245
    %v904 = vunpack.c.h.b16 %v245
    %v905 = vunpack.c.l.b16 %v246
    %v906 = vunpack.c.h.b16 %v246
    %v907 = vunpack.c.l.b16 %v247
    %v908 = vunpack.c.h.b16 %v247
    %v909 = vunpack.c.l.b16 %v248
    %v910 = vunpack.c.h.b16 %v248
    %v911 = vunpack.c.l.b16 %v249
    %v912 = vunpack.c.h.b16 %v249
    %v913 = vunpack.c.l.b16 %v250
    %v914 = vunpack.c.h.b16 %v250
    %v915 = vunpack.c.l.b16 %v251
    %v916 = vunpack.c.h.b16 %v251
    %v917 = vunpack.c.l.b16 %v252
    %v918 = vunpack.c.h.b16 %v252
    %v919 = vunpack.c.l.b16 %v253
    %v920 = vunpack.c.h.b16 %v253
    %v921 = vunpack.c.l.b16 %v254
    %v922 = vunpack.c.h.b16 %v254
    %v923 = vunpack.c.l.b16 %v255
    %v924 = vunpack.c.h.b16 %v255
    %v925 = vunpack.c.l.b16 %v256
    %v926 = vunpack.c.h.b16 %v256
    %v927 = vunpack.c.l.b16 %v257
    %v928 = vunpack.c.h.b16 %v257
    %v929 = vunpack.c.l.b16 %v258
    %v930 = vunpack.c.h.b16 %v258
    %v931 = vunpack.c.l.b16 %v259
    %v932 = vunpack.c.h.b16 %v259
    %v933 = vunpack.c.l.b16 %v260
    %v934 = vunpack.c.h.b16 %v260
    %v935 = vunpack.c.l.b16 %v261
    %v936 = vunpack.c.h.b16 %v261
    %v937 = vpack.c.b16 %v813, %v809
    %v938 = vpack.c.b16 %v814, %v810
    %v939 = vpack.c.b16 %v815, %v811
    %v940 = vpack.c.b16 %v816, %v812
    %v941 = vpack.c.b16 %v821, %v817
    %v942 = vpack.c.b16 %v822, %v818
    %v943 = vpack.c.b16 %v823, %v819
    %v944 = vpack.c.b16 %v824, %v820
    %v945 = vpack.c.b16 %v829, %v825
    %v946 = vpack.c.b16 %v830, %v826
    %v947 = vpack.c.b16 %v831, %v827
    %v948 = vpack.c.b16 %v832, %v828
    %v949 = vpack.c.b16 %v837, %v833
    %v950 = vpack.c.b16 %v838, %v834
    %v951 = vpack.c.b16 %v839, %v835
    %v952 = vpack.c.b16 %v840, %v836
    %v953 = vpack.c.b16 %v845, %v841
    %v954 = vpack.c.b16 %v846, %v842
    %v955 = vpack.c.b16 %v847, %v843
    %v956 = vpack.c.b16 %v848, %v844
    %v957 = vpack.c.b16 %v853, %v849
    %v958 = vpack.c.b16 %v854, %v850
    %v959 = vpack.c.b16 %v855, %v851
    %v960 = vpack.c.b16 %v856, %v852
    %v961 = vpack.c.b16 %v861, %v857
    %v962 = vpack.c.b16 %v862, %v858
    %v963 = vpack.c.b16 %v863, %v859
    %v964 = vpack.c.b16 %v864, %v860
    %v965 = vpack.c.b16 %v869, %v865
    %v966 = vpack.c.b16 %v870, %v866
    %v967 = vpack.c.b16 %v871, %v867
    %v968 = vpack.c.b16 %v872, %v868
    %v969 = vpack.c.b16 %v877, %v873
    %v970 = vpack.c.b16 %v878, %v874
    %v971 = vpack.c.b16 %v879, %v875
    %v972 = vpack.c.b16 %v880, %v876
    %v973 = vpack.c.b16 %v885, %v881
    %v974 = vpack.c.b16 %v886, %v882
    %v975 = vpack.c.b16 %v887, %v883
    %v976 = vpack.c.b16 %v888, %v884
    %v977 = vpack.c.b16 %v893, %v889
    %v978 = vpack.c.b16 %v894, %v890
    %v979 = vpack.c.b16 %v895, %v891
    %v980 = vpack.c.b16 %v896, %v892
    %v981 = vpack.c.b16 %v901, %v897
    %v982 = vpack.c.b16 %v902, %v898
    %v983 = vpack.c.b16 %v903, %v899
    %v984 = vpack.c.b16 %v904, %v900
    %v985 = vpack.c.b16 %v909, %v905
    %v986 = vpack.c.b16 %v910, %v906
    %v987 = vpack.c.b16 %v911, %v907
    %v988 = vpack.c.b16 %v912, %v908
    %v989 = vpack.c.b16 %v917, %v913
    %v990 = vpack.c.b16 %v918, %v914
    %v991 = vpack.c.b16 %v919, %v915
    %v992 = vpack.c.b16 %v920, %v916
    %v993 = vpack.c.b16 %v925, %v921
    %v994 = vpack.c.b16 %v926, %v922
    %v995 = vpack.c.b16 %v927, %v923
    %v996 = vpack.c.b16 %v928, %v924
    %v997 = vpack.c.b16 %v933, %v929
    %v998 = vpack.c.b16 %v934, %v930
    %v999 = vpack.c.b16 %v935, %v931
    %v1000 = vpack.c.b16 %v936, %v932
    %1065 = vmatprep.subr.bf16.mxu0 %v938
    %1066 = vmatpush1.bf16.msra.mxu0 %v937
    %1067 = vmatprep.subr.bf16.mxu0 %v942
    %1068 = vmatpush1.bf16.msra.mxu0 %v941
    %1069 = vmatprep.subr.bf16.mxu0 %v946
    %1070 = vmatpush1.bf16.msra.mxu0 %v945
    %1071 = vmatprep.subr.bf16.mxu0 %v950
    %1072 = vmatpush1.bf16.msra.mxu0 %v949
    %1073 = vmatprep.subr.bf16.mxu0 %v954
    %1074 = vmatpush1.bf16.msra.mxu0 %v953
    %1075 = vmatprep.subr.bf16.mxu0 %v958
    %1076 = vmatpush1.bf16.msra.mxu0 %v957
    %1077 = vmatprep.subr.bf16.mxu0 %v962
    %1078 = vmatpush1.bf16.msra.mxu0 %v961
    %1079 = vmatprep.subr.bf16.mxu0 %v966
    %1080 = vmatpush1.bf16.msra.mxu0 %v965
    %1081 = vmatprep.subr.bf16.mxu0 %v970
    %1082 = vmatpush1.bf16.msra.mxu0 %v969
    %1083 = vmatprep.subr.bf16.mxu0 %v974
    %1084 = vmatpush1.bf16.msra.mxu0 %v973
    %1085 = vmatprep.subr.bf16.mxu0 %v978
    %1086 = vmatpush1.bf16.msra.mxu0 %v977
    %1087 = vmatprep.subr.bf16.mxu0 %v982
    %1088 = vmatpush1.bf16.msra.mxu0 %v981
    %1089 = vmatprep.subr.bf16.mxu0 %v986
    %1090 = vmatpush1.bf16.msra.mxu0 %v985
    %1091 = vmatprep.subr.bf16.mxu0 %v990
    %1092 = vmatpush1.bf16.msra.mxu0 %v989
    %1093 = vmatprep.subr.bf16.mxu0 %v994
    %1094 = vmatpush1.bf16.msra.mxu0 %v993
    %1095 = vmatprep.subr.bf16.mxu0 %v998
    %1096 = vmatpush1.bf16.msra.mxu0 %v997
    %1097 = vmatprep.mubr.bf16.mxu0 %v723
    %1098 = vmatmul.mubr.bf16.gmra.mrb[0].mxu0 %v722
    %v1099 = vpop.f32.mrb[0].mxu0
    %v1100 = vadd.f32 %v728, %v1099
    %v1101 = vpop.f32.mrb[0].mxu0
    %v1102 = vadd.f32 %v732, %v1101
    %v1103 = vpop.f32.mrb[0].mxu0
    %v1104 = vpop.f32.mrb[0].mxu0
    %1105 = vdwg.mxu0
    %1106 = vmatprep.subr.bf16.mxu0 %v940
    %1107 = vmatpush1.bf16.msra.mxu0 %v939
    %1108 = vmatprep.subr.bf16.mxu0 %v944
    %1109 = vmatpush1.bf16.msra.mxu0 %v943
    %1110 = vmatprep.subr.bf16.mxu0 %v948
    %1111 = vmatpush1.bf16.msra.mxu0 %v947
    %1112 = vmatprep.subr.bf16.mxu0 %v952
    %1113 = vmatpush1.bf16.msra.mxu0 %v951
    %1114 = vmatprep.subr.bf16.mxu0 %v956
    %1115 = vmatpush1.bf16.msra.mxu0 %v955
    %1116 = vmatprep.subr.bf16.mxu0 %v960
    %1117 = vmatpush1.bf16.msra.mxu0 %v959
    %1118 = vmatprep.subr.bf16.mxu0 %v964
    %1119 = vmatpush1.bf16.msra.mxu0 %v963
    %1120 = vmatprep.subr.bf16.mxu0 %v968
    %1121 = vmatpush1.bf16.msra.mxu0 %v967
    %1122 = vmatprep.subr.bf16.mxu0 %v972
    %1123 = vmatpush1.bf16.msra.mxu0 %v971
    %1124 = vmatprep.subr.bf16.mxu0 %v976
    %1125 = vmatpush1.bf16.msra.mxu0 %v975
    %1126 = vmatprep.subr.bf16.mxu0 %v980
    %1127 = vmatpush1.bf16.msra.mxu0 %v979
    %1128 = vmatprep.subr.bf16.mxu0 %v984
    %1129 = vmatpush1.bf16.msra.mxu0 %v983
    %1130 = vmatprep.subr.bf16.mxu0 %v988
    %1131 = vmatpush1.bf16.msra.mxu0 %v987
    %1132 = vmatprep.subr.bf16.mxu0 %v992
    %1133 = vmatpush1.bf16.msra.mxu0 %v991
    %1134 = vmatprep.subr.bf16.mxu0 %v996
    %1135 = vmatpush1.bf16.msra.mxu0 %v995
    %1136 = vmatprep.subr.bf16.mxu0 %v1000
    %1137 = vmatpush1.bf16.msra.mxu0 %v999
    %1138 = vmatprep.mubr.bf16.mxu0 %v723
    %1139 = vmatmul.mubr.bf16.gmra.mrb[0].mxu0 %v722
    %v1140 = vpop.f32.mrb[0].mxu0
    %v1141 = vadd.f32 %v736, %v1140
    %v1142 = vpop.f32.mrb[0].mxu0
    %v1143 = vadd.f32 %v740, %v1142
    %v1144 = vpop.f32.mrb[0].mxu0
    %v1145 = vpop.f32.mrb[0].mxu0
    %1146 = vdwg.mxu0
    %v1147 = vxor.u32 %v1100, 2147483648
    %v1148 = vxor.u32 %v1102, 2147483648
    %v1149 = vxor.u32 %v1141, 2147483648
    %v1150 = vmul.f32 %v1147, 1.442695
    %v1151 = vpow.pop %v1150
    %v1152 = vmul.f32 %v1148, 1.442695
    %v1153 = vpow.pop %v1152
    %v1154 = vmul.f32 %v1149, 1.442695
    %v1155 = vpow.pop %v1154
    %v1156 = vadd.f32 %v1151, 1.0
    %v1157 = vadd.f32 %v1153, 1.0
    %v1158 = vadd.f32 %v1155, 1.0
    %v1159 = vrcp.pop %v1156
    %v1160 = vmul.f32 1.0, %v1159
    %v1161 = vrcp.pop %v1157
    %v1162 = vmul.f32 1.0, %v1161
    %v1163 = vrcp.pop %v1158
    %v1164 = vmul.f32 1.0, %v1163
    %v1165 = vtanh.pop %v1143
    %v1166 = vmul.f32 %v1162, %v721
    %v1167 = vmul.f32 %v1160, %v1165
    %v1168 = vadd.f32 %v1166, %v1167
    %v1169 = vtanh.pop %v1168
    %v1170 = vmul.f32 %v1164, %v1169
    %1171 = vst [vmem:[%s718] sm:$0xff] %v1170
    %1172 = vst [vmem:[%s720] sm:$0xff] %v1168
    %1173 = vst [vmem:[#allocation16] sm:$0xff] %v1170
    %s1174 = scalar_lea.vmem [#allocation4], 8
    %v1175 = vld [vmem:[%s1174] sm:$0xff]
    %v1176 = vld [vmem:[#allocation2] sm:$0xff]
    %v1177 = vld [vmem:[#allocation3] sm:$0xff]
    %v1178 = vpack.c.bf16 %v1175, %v1175
    %v1179 = vpack.c.bf16 %v1176, %v1176
    %1180 = vmatprep.subr.bf16.mxu0 %v483
    %1181 = vmatpush1.bf16.msra.mxu0 %v482
    %1182 = vmatprep.subr.bf16.mxu0 %v487
    %1183 = vmatpush1.bf16.msra.mxu0 %v486
    %1184 = vmatprep.subr.bf16.mxu0 %v491
    %1185 = vmatpush1.bf16.msra.mxu0 %v490
    %1186 = vmatprep.subr.bf16.mxu0 %v495
    %1187 = vmatpush1.bf16.msra.mxu0 %v494
    %1188 = vmatprep.subr.bf16.mxu0 %v499
    %1189 = vmatpush1.bf16.msra.mxu0 %v498
    %1190 = vmatprep.subr.bf16.mxu0 %v503
    %1191 = vmatpush1.bf16.msra.mxu0 %v502
    %1192 = vmatprep.subr.bf16.mxu0 %v507
    %1193 = vmatpush1.bf16.msra.mxu0 %v506
    %1194 = vmatprep.subr.bf16.mxu0 %v511
    %1195 = vmatpush1.bf16.msra.mxu0 %v510
    %1196 = vmatprep.subr.bf16.mxu0 %v515
    %1197 = vmatpush1.bf16.msra.mxu0 %v514
    %1198 = vmatprep.subr.bf16.mxu0 %v519
    %1199 = vmatpush1.bf16.msra.mxu0 %v518
    %1200 = vmatprep.subr.bf16.mxu0 %v523
    %1201 = vmatpush1.bf16.msra.mxu0 %v522
    %1202 = vmatprep.subr.bf16.mxu0 %v527
    %1203 = vmatpush1.bf16.msra.mxu0 %v526
    %1204 = vmatprep.subr.bf16.mxu0 %v531
    %1205 = vmatpush1.bf16.msra.mxu0 %v530
    %1206 = vmatprep.subr.bf16.mxu0 %v535
    %1207 = vmatpush1.bf16.msra.mxu0 %v534
    %1208 = vmatprep.subr.bf16.mxu0 %v539
    %1209 = vmatpush1.bf16.msra.mxu0 %v538
    %1210 = vmatprep.subr.bf16.mxu0 %v543
    %1211 = vmatpush1.bf16.msra.mxu0 %v542
    %1212 = vmatprep.mubr.bf16.mxu0 %v1179
    %1213 = vmatmul.mubr.bf16.gmra.mrb[0].mxu0 %v1178
    %v1214 = vpop.f32.mrb[0].mxu0
    %v1215 = vadd.f32 %v273, %v1214
    %v1216 = vpop.f32.mrb[0].mxu0
    %v1217 = vadd.f32 %v277, %v1216
    %v1218 = vpop.f32.mrb[0].mxu0
    %v1219 = vpop.f32.mrb[0].mxu0
    %1220 = vdwg.mxu0
    %1221 = vmatprep.subr.bf16.mxu0 %v485
    %1222 = vmatpush1.bf16.msra.mxu0 %v484
    %1223 = vmatprep.subr.bf16.mxu0 %v489
    %1224 = vmatpush1.bf16.msra.mxu0 %v488
    %1225 = vmatprep.subr.bf16.mxu0 %v493
    %1226 = vmatpush1.bf16.msra.mxu0 %v492
    %1227 = vmatprep.subr.bf16.mxu0 %v497
    %1228 = vmatpush1.bf16.msra.mxu0 %v496
    %1229 = vmatprep.subr.bf16.mxu0 %v501
    %1230 = vmatpush1.bf16.msra.mxu0 %v500
    %1231 = vmatprep.subr.bf16.mxu0 %v505
    %1232 = vmatpush1.bf16.msra.mxu0 %v504
    %1233 = vmatprep.subr.bf16.mxu0 %v509
    %1234 = vmatpush1.bf16.msra.mxu0 %v508
    %1235 = vmatprep.subr.bf16.mxu0 %v513
    %1236 = vmatpush1.bf16.msra.mxu0 %v512
    %1237 = vmatprep.subr.bf16.mxu0 %v517
    %1238 = vmatpush1.bf16.msra.mxu0 %v516
    %1239 = vmatprep.subr.bf16.mxu0 %v521
    %1240 = vmatpush1.bf16.msra.mxu0 %v520
    %1241 = vmatprep.subr.bf16.mxu0 %v525
    %1242 = vmatpush1.bf16.msra.mxu0 %v524
    %1243 = vmatprep.subr.bf16.mxu0 %v529
    %1244 = vmatpush1.bf16.msra.mxu0 %v528
    %1245 = vmatprep.subr.bf16.mxu0 %v533
    %1246 = vmatpush1.bf16.msra.mxu0 %v532
    %1247 = vmatprep.subr.bf16.mxu0 %v537
    %1248 = vmatpush1.bf16.msra.mxu0 %v536
    %1249 = vmatprep.subr.bf16.mxu0 %v541
    %1250 = vmatpush1.bf16.msra.mxu0 %v540
    %1251 = vmatprep.subr.bf16.mxu0 %v545
    %1252 = vmatpush1.bf16.msra.mxu0 %v544
    %1253 = vmatprep.mubr.bf16.mxu0 %v1179
    %1254 = vmatmul.mubr.bf16.gmra.mrb[0].mxu0 %v1178
    %v1255 = vpop.f32.mrb[0].mxu0
    %v1256 = vadd.f32 %v281, %v1255
    %v1257 = vpop.f32.mrb[0].mxu0
    %v1258 = vadd.f32 %v285, %v1257
    %v1259 = vpop.f32.mrb[0].mxu0
    %v1260 = vpop.f32.mrb[0].mxu0
    %1261 = vdwg.mxu0
    %v1262 = vxor.u32 %v1215, 2147483648
    %v1263 = vxor.u32 %v1217, 2147483648
    %v1264 = vxor.u32 %v1256, 2147483648
    %v1265 = vmul.f32 %v1262, 1.442695
    %v1266 = vpow.pop %v1265
    %v1267 = vmul.f32 %v1263, 1.442695
    %v1268 = vpow.pop %v1267
    %v1269 = vmul.f32 %v1264, 1.442695
    %v1270 = vpow.pop %v1269
    %v1271 = vadd.f32 %v1266, 1.0
    %v1272 = vadd.f32 %v1268, 1.0
    %v1273 = vadd.f32 %v1270, 1.0
    %v1274 = vrcp.pop %v1271
    %v1275 = vmul.f32 1.0, %v1274
    %v1276 = vrcp.pop %v1272
    %v1277 = vmul.f32 1.0, %v1276
    %v1278 = vrcp.pop %v1273
    %v1279 = vmul.f32 1.0, %v1278
    %v1280 = vtanh.pop %v1258
    %v1281 = vmul.f32 %v1277, %v1177
    %v1282 = vmul.f32 %v1275, %v1280
    %v1283 = vadd.f32 %v1281, %v1282
    %v1284 = vtanh.pop %v1283
    %v1285 = vmul.f32 %v1279, %v1284
    %1286 = vst [vmem:[#allocation2] sm:$0xff] %v1285
    %1287 = vst [vmem:[#allocation3] sm:$0xff] %v1283
    %v1288 = vld [vmem:[%s718] sm:$0xff]
    %v1289 = vld [vmem:[%s720] sm:$0xff]
    %v1290 = vpack.c.bf16 %v1285, %v1285
    %v1291 = vpack.c.bf16 %v1288, %v1288
    %1292 = vmatprep.subr.bf16.mxu0 %v938
    %1293 = vmatpush1.bf16.msra.mxu0 %v937
    %1294 = vmatprep.subr.bf16.mxu0 %v942
    %1295 = vmatpush1.bf16.msra.mxu0 %v941
    %1296 = vmatprep.subr.bf16.mxu0 %v946
    %1297 = vmatpush1.bf16.msra.mxu0 %v945
    %1298 = vmatprep.subr.bf16.mxu0 %v950
    %1299 = vmatpush1.bf16.msra.mxu0 %v949
    %1300 = vmatprep.subr.bf16.mxu0 %v954
    %1301 = vmatpush1.bf16.msra.mxu0 %v953
    %1302 = vmatprep.subr.bf16.mxu0 %v958
    %1303 = vmatpush1.bf16.msra.mxu0 %v957
    %1304 = vmatprep.subr.bf16.mxu0 %v962
    %1305 = vmatpush1.bf16.msra.mxu0 %v961
    %1306 = vmatprep.subr.bf16.mxu0 %v966
    %1307 = vmatpush1.bf16.msra.mxu0 %v965
    %1308 = vmatprep.subr.bf16.mxu0 %v970
    %1309 = vmatpush1.bf16.msra.mxu0 %v969
    %1310 = vmatprep.subr.bf16.mxu0 %v974
    %1311 = vmatpush1.bf16.msra.mxu0 %v973
    %1312 = vmatprep.subr.bf16.mxu0 %v978
    %1313 = vmatpush1.bf16.msra.mxu0 %v977
    %1314 = vmatprep.subr.bf16.mxu0 %v982
    %1315 = vmatpush1.bf16.msra.mxu0 %v981
    %1316 = vmatprep.subr.bf16.mxu0 %v986
    %1317 = vmatpush1.bf16.msra.mxu0 %v985
    %1318 = vmatprep.subr.bf16.mxu0 %v990
    %1319 = vmatpush1.bf16.msra.mxu0 %v989
    %1320 = vmatprep.subr.bf16.mxu0 %v994
    %1321 = vmatpush1.bf16.msra.mxu0 %v993
    %1322 = vmatprep.subr.bf16.mxu0 %v998
    %1323 = vmatpush1.bf16.msra.mxu0 %v997
    %1324 = vmatprep.mubr.bf16.mxu0 %v1291
    %1325 = vmatmul.mubr.bf16.gmra.mrb[0].mxu0 %v1290
    %v1326 = vpop.f32.mrb[0].mxu0
    %v1327 = vadd.f32 %v728, %v1326
    %v1328 = vpop.f32.mrb[0].mxu0
    %v1329 = vadd.f32 %v732, %v1328
    %v1330 = vpop.f32.mrb[0].mxu0
    %v1331 = vpop.f32.mrb[0].mxu0
    %1332 = vdwg.mxu0
    %1333 = vmatprep.subr.bf16.mxu0 %v940
    %1334 = vmatpush1.bf16.msra.mxu0 %v939
    %1335 = vmatprep.subr.bf16.mxu0 %v944
    %1336 = vmatpush1.bf16.msra.mxu0 %v943
    %1337 = vmatprep.subr.bf16.mxu0 %v948
    %1338 = vmatpush1.bf16.msra.mxu0 %v947
    %1339 = vmatprep.subr.bf16.mxu0 %v952
    %1340 = vmatpush1.bf16.msra.mxu0 %v951
    %1341 = vmatprep.subr.bf16.mxu0 %v956
    %1342 = vmatpush1.bf16.msra.mxu0 %v955
    %1343 = vmatprep.subr.bf16.mxu0 %v960
    %1344 = vmatpush1.bf16.msra.mxu0 %v959
    %1345 = vmatprep.subr.bf16.mxu0 %v964
    %1346 = vmatpush1.bf16.msra.mxu0 %v963
    %1347 = vmatprep.subr.bf16.mxu0 %v968
    %1348 = vmatpush1.bf16.msra.mxu0 %v967
    %1349 = vmatprep.subr.bf16.mxu0 %v972
    %1350 = vmatpush1.bf16.msra.mxu0 %v971
    %1351 = vmatprep.subr.bf16.mxu0 %v976
    %1352 = vmatpush1.bf16.msra.mxu0 %v975
    %1353 = vmatprep.subr.bf16.mxu0 %v980
    %1354 = vmatpush1.bf16.msra.mxu0 %v979
    %1355 = vmatprep.subr.bf16.mxu0 %v984
    %1356 = vmatpush1.bf16.msra.mxu0 %v983
    %1357 = vmatprep.subr.bf16.mxu0 %v988
    %1358 = vmatpush1.bf16.msra.mxu0 %v987
    %1359 = vmatprep.subr.bf16.mxu0 %v992
    %1360 = vmatpush1.bf16.msra.mxu0 %v991
    %1361 = vmatprep.subr.bf16.mxu0 %v996
    %1362 = vmatpush1.bf16.msra.mxu0 %v995
    %1363 = vmatprep.subr.bf16.mxu0 %v1000
    %1364 = vmatpush1.bf16.msra.mxu0 %v999
    %1365 = vmatprep.mubr.bf16.mxu0 %v1291
    %1366 = vmatmul.mubr.bf16.gmra.mrb[0].mxu0 %v1290
    %v1367 = vpop.f32.mrb[0].mxu0
    %v1368 = vadd.f32 %v736, %v1367
    %v1369 = vpop.f32.mrb[0].mxu0
    %v1370 = vadd.f32 %v740, %v1369
    %v1371 = vpop.f32.mrb[0].mxu0
    %v1372 = vpop.f32.mrb[0].mxu0
    %1373 = vdwg.mxu0
    %v1374 = vxor.u32 %v1327, 2147483648
    %v1375 = vxor.u32 %v1329, 2147483648
    %v1376 = vxor.u32 %v1368, 2147483648
    %v1377 = vmul.f32 %v1374, 1.442695
    %v1378 = vpow.pop %v1377
    %v1379 = vmul.f32 %v1375, 1.442695
    %v1380 = vpow.pop %v1379
    %v1381 = vmul.f32 %v1376, 1.442695
    %v1382 = vpow.pop %v1381
    %v1383 = vadd.f32 %v1378, 1.0
    %v1384 = vadd.f32 %v1380, 1.0
    %v1385 = vadd.f32 %v1382, 1.0
    %v1386 = vrcp.pop %v1383
    %v1387 = vmul.f32 1.0, %v1386
    %v1388 = vrcp.pop %v1384
    %v1389 = vmul.f32 1.0, %v1388
    %v1390 = vrcp.pop %v1385
    %v1391 = vmul.f32 1.0, %v1390
    %v1392 = vtanh.pop %v1370
    %v1393 = vmul.f32 %v1389, %v1289
    %v1394 = vmul.f32 %v1387, %v1392
    %v1395 = vadd.f32 %v1393, %v1394
    %v1396 = vtanh.pop %v1395
    %v1397 = vmul.f32 %v1391, %v1396
    %1398 = vst [vmem:[%s718] sm:$0xff] %v1397
    %1399 = vst [vmem:[%s720] sm:$0xff] %v1395
    %s1400 = scalar_lea.vmem [#allocation16], 8
    %1401 = vst [vmem:[%s1400] sm:$0xff] %v1397
    %s1402 = scalar_lea.vmem [#allocation4], 16
    %v1403 = vld [vmem:[%s1402] sm:$0xff]
    %v1404 = vld [vmem:[#allocation2] sm:$0xff]
    %v1405 = vld [vmem:[#allocation3] sm:$0xff]
    %v1406 = vpack.c.bf16 %v1403, %v1403
    %v1407 = vpack.c.bf16 %v1404, %v1404
    %1408 = vmatprep.subr.bf16.mxu0 %v483
    %1409 = vmatpush1.bf16.msra.mxu0 %v482
    %1410 = vmatprep.subr.bf16.mxu0 %v487
    %1411 = vmatpush1.bf16.msra.mxu0 %v486
    %1412 = vmatprep.subr.bf16.mxu0 %v491
    %1413 = vmatpush1.bf16.msra.mxu0 %v490
    %1414 = vmatprep.subr.bf16.mxu0 %v495
    %1415 = vmatpush1.bf16.msra.mxu0 %v494
    %1416 = vmatprep.subr.bf16.mxu0 %v499
    %1417 = vmatpush1.bf16.msra.mxu0 %v498
    %1418 = vmatprep.subr.bf16.mxu0 %v503
    %1419 = vmatpush1.bf16.msra.mxu0 %v502
    %1420 = vmatprep.subr.bf16.mxu0 %v507
    %1421 = vmatpush1.bf16.msra.mxu0 %v506
    %1422 = vmatprep.subr.bf16.mxu0 %v511
    %1423 = vmatpush1.bf16.msra.mxu0 %v510
    %1424 = vmatprep.subr.bf16.mxu0 %v515
    %1425 = vmatpush1.bf16.msra.mxu0 %v514
    %1426 = vmatprep.subr.bf16.mxu0 %v519
    %1427 = vmatpush1.bf16.msra.mxu0 %v518
    %1428 = vmatprep.subr.bf16.mxu0 %v523
    %1429 = vmatpush1.bf16.msra.mxu0 %v522
    %1430 = vmatprep.subr.bf16.mxu0 %v527
    %1431 = vmatpush1.bf16.msra.mxu0 %v526
    %1432 = vmatprep.subr.bf16.mxu0 %v531
    %1433 = vmatpush1.bf16.msra.mxu0 %v530
    %1434 = vmatprep.subr.bf16.mxu0 %v535
    %1435 = vmatpush1.bf16.msra.mxu0 %v534
    %1436 = vmatprep.subr.bf16.mxu0 %v539
    %1437 = vmatpush1.bf16.msra.mxu0 %v538
    %1438 = vmatprep.subr.bf16.mxu0 %v543
    %1439 = vmatpush1.bf16.msra.mxu0 %v542
    %1440 = vmatprep.mubr.bf16.mxu0 %v1407
    %1441 = vmatmul.mubr.bf16.gmra.mrb[0].mxu0 %v1406
    %v1442 = vpop.f32.mrb[0].mxu0
    %v1443 = vadd.f32 %v273, %v1442
    %v1444 = vpop.f32.mrb[0].mxu0
    %v1445 = vadd.f32 %v277, %v1444
    %v1446 = vpop.f32.mrb[0].mxu0
    %v1447 = vpop.f32.mrb[0].mxu0
    %1448 = vdwg.mxu0
    %1449 = vmatprep.subr.bf16.mxu0 %v485
    %1450 = vmatpush1.bf16.msra.mxu0 %v484
    %1451 = vmatprep.subr.bf16.mxu0 %v489
    %1452 = vmatpush1.bf16.msra.mxu0 %v488
    %1453 = vmatprep.subr.bf16.mxu0 %v493
    %1454 = vmatpush1.bf16.msra.mxu0 %v492
    %1455 = vmatprep.subr.bf16.mxu0 %v497
    %1456 = vmatpush1.bf16.msra.mxu0 %v496
    %1457 = vmatprep.subr.bf16.mxu0 %v501
    %1458 = vmatpush1.bf16.msra.mxu0 %v500
    %1459 = vmatprep.subr.bf16.mxu0 %v505
    %1460 = vmatpush1.bf16.msra.mxu0 %v504
    %1461 = vmatprep.subr.bf16.mxu0 %v509
    %1462 = vmatpush1.bf16.msra.mxu0 %v508
    %1463 = vmatprep.subr.bf16.mxu0 %v513
    %1464 = vmatpush1.bf16.msra.mxu0 %v512
    %1465 = vmatprep.subr.bf16.mxu0 %v517
    %1466 = vmatpush1.bf16.msra.mxu0 %v516
    %1467 = vmatprep.subr.bf16.mxu0 %v521
    %1468 = vmatpush1.bf16.msra.mxu0 %v520
    %1469 = vmatprep.subr.bf16.mxu0 %v525
    %1470 = vmatpush1.bf16.msra.mxu0 %v524
    %1471 = vmatprep.subr.bf16.mxu0 %v529
    %1472 = vmatpush1.bf16.msra.mxu0 %v528
    %1473 = vmatprep.subr.bf16.mxu0 %v533
    %1474 = vmatpush1.bf16.msra.mxu0 %v532
    %1475 = vmatprep.subr.bf16.mxu0 %v537
    %1476 = vmatpush1.bf16.msra.mxu0 %v536
    %1477 = vmatprep.subr.bf16.mxu0 %v541
    %1478 = vmatpush1.bf16.msra.mxu0 %v540
    %1479 = vmatprep.subr.bf16.mxu0 %v545
    %1480 = vmatpush1.bf16.msra.mxu0 %v544
    %1481 = vmatprep.mubr.bf16.mxu0 %v1407
    %1482 = vmatmul.mubr.bf16.gmra.mrb[0].mxu0 %v1406
    %v1483 = vpop.f32.mrb[0].mxu0
    %v1484 = vadd.f32 %v281, %v1483
    %v1485 = vpop.f32.mrb[0].mxu0
    %v1486 = vadd.f32 %v285, %v1485
    %v1487 = vpop.f32.mrb[0].mxu0
    %v1488 = vpop.f32.mrb[0].mxu0
    %1489 = vdwg.mxu0
    %v1490 = vxor.u32 %v1443, 2147483648
    %v1491 = vxor.u32 %v1445, 2147483648
    %v1492 = vxor.u32 %v1484, 2147483648
    %v1493 = vmul.f32 %v1490, 1.442695
    %v1494 = vpow.pop %v1493
    %v1495 = vmul.f32 %v1491, 1.442695
    %v1496 = vpow.pop %v1495
    %v1497 = vmul.f32 %v1492, 1.442695
    %v1498 = vpow.pop %v1497
    %v1499 = vadd.f32 %v1494, 1.0
    %v1500 = vadd.f32 %v1496, 1.0
    %v1501 = vadd.f32 %v1498, 1.0
    %v1502 = vrcp.pop %v1499
    %v1503 = vmul.f32 1.0, %v1502
    %v1504 = vrcp.pop %v1500
    %v1505 = vmul.f32 1.0, %v1504
    %v1506 = vrcp.pop %v1501
    %v1507 = vmul.f32 1.0, %v1506
    %v1508 = vtanh.pop %v1486
    %v1509 = vmul.f32 %v1505, %v1405
    %v1510 = vmul.f32 %v1503, %v1508
    %v1511 = vadd.f32 %v1509, %v1510
    %v1512 = vtanh.pop %v1511
    %v1513 = vmul.f32 %v1507, %v1512
    %1514 = vst [vmem:[#allocation2] sm:$0xff] %v1513
    %1515 = vst [vmem:[#allocation3] sm:$0xff] %v1511
    %v1516 = vld [vmem:[%s718] sm:$0xff]
    %v1517 = vld [vmem:[%s720] sm:$0xff]
    %v1518 = vpack.c.bf16 %v1513, %v1513
    %v1519 = vpack.c.bf16 %v1516, %v1516
    %1520 = vmatprep.subr.bf16.mxu0 %v938
    %1521 = vmatpush1.bf16.msra.mxu0 %v937
    %1522 = vmatprep.subr.bf16.mxu0 %v942
    %1523 = vmatpush1.bf16.msra.mxu0 %v941
    %1524 = vmatprep.subr.bf16.mxu0 %v946
    %1525 = vmatpush1.bf16.msra.mxu0 %v945
    %1526 = vmatprep.subr.bf16.mxu0 %v950
    %1527 = vmatpush1.bf16.msra.mxu0 %v949
    %1528 = vmatprep.subr.bf16.mxu0 %v954
    %1529 = vmatpush1.bf16.msra.mxu0 %v953
    %1530 = vmatprep.subr.bf16.mxu0 %v958
    %1531 = vmatpush1.bf16.msra.mxu0 %v957
    %1532 = vmatprep.subr.bf16.mxu0 %v962
    %1533 = vmatpush1.bf16.msra.mxu0 %v961
    %1534 = vmatprep.subr.bf16.mxu0 %v966
    %1535 = vmatpush1.bf16.msra.mxu0 %v965
    %1536 = vmatprep.subr.bf16.mxu0 %v970
    %1537 = vmatpush1.bf16.msra.mxu0 %v969
    %1538 = vmatprep.subr.bf16.mxu0 %v974
    %1539 = vmatpush1.bf16.msra.mxu0 %v973
    %1540 = vmatprep.subr.bf16.mxu0 %v978
    %1541 = vmatpush1.bf16.msra.mxu0 %v977
    %1542 = vmatprep.subr.bf16.mxu0 %v982
    %1543 = vmatpush1.bf16.msra.mxu0 %v981
    %1544 = vmatprep.subr.bf16.mxu0 %v986
    %1545 = vmatpush1.bf16.msra.mxu0 %v985
    %1546 = vmatprep.subr.bf16.mxu0 %v990
    %1547 = vmatpush1.bf16.msra.mxu0 %v989
    %1548 = vmatprep.subr.bf16.mxu0 %v994
    %1549 = vmatpush1.bf16.msra.mxu0 %v993
    %1550 = vmatprep.subr.bf16.mxu0 %v998
    %1551 = vmatpush1.bf16.msra.mxu0 %v997
    %1552 = vmatprep.mubr.bf16.mxu0 %v1519
    %1553 = vmatmul.mubr.bf16.gmra.mrb[0].mxu0 %v1518
    %v1554 = vpop.f32.mrb[0].mxu0
    %v1555 = vadd.f32 %v728, %v1554
    %v1556 = vpop.f32.mrb[0].mxu0
    %v1557 = vadd.f32 %v732, %v1556
    %v1558 = vpop.f32.mrb[0].mxu0
    %v1559 = vpop.f32.mrb[0].mxu0
    %1560 = vdwg.mxu0
    %1561 = vmatprep.subr.bf16.mxu0 %v940
    %1562 = vmatpush1.bf16.msra.mxu0 %v939
    %1563 = vmatprep.subr.bf16.mxu0 %v944
    %1564 = vmatpush1.bf16.msra.mxu0 %v943
    %1565 = vmatprep.subr.bf16.mxu0 %v948
    %1566 = vmatpush1.bf16.msra.mxu0 %v947
    %1567 = vmatprep.subr.bf16.mxu0 %v952
    %1568 = vmatpush1.bf16.msra.mxu0 %v951
    %1569 = vmatprep.subr.bf16.mxu0 %v956
    %1570 = vmatpush1.bf16.msra.mxu0 %v955
    %1571 = vmatprep.subr.bf16.mxu0 %v960
    %1572 = vmatpush1.bf16.msra.mxu0 %v959
    %1573 = vmatprep.subr.bf16.mxu0 %v964
    %1574 = vmatpush1.bf16.msra.mxu0 %v963
    %1575 = vmatprep.subr.bf16.mxu0 %v968
    %1576 = vmatpush1.bf16.msra.mxu0 %v967
    %1577 = vmatprep.subr.bf16.mxu0 %v972
    %1578 = vmatpush1.bf16.msra.mxu0 %v971
    %1579 = vmatprep.subr.bf16.mxu0 %v976
    %1580 = vmatpush1.bf16.msra.mxu0 %v975
    %1581 = vmatprep.subr.bf16.mxu0 %v980
    %1582 = vmatpush1.bf16.msra.mxu0 %v979
    %1583 = vmatprep.subr.bf16.mxu0 %v984
    %1584 = vmatpush1.bf16.msra.mxu0 %v983
    %1585 = vmatprep.subr.bf16.mxu0 %v988
    %1586 = vmatpush1.bf16.msra.mxu0 %v987
    %1587 = vmatprep.subr.bf16.mxu0 %v992
    %1588 = vmatpush1.bf16.msra.mxu0 %v991
    %1589 = vmatprep.subr.bf16.mxu0 %v996
    %1590 = vmatpush1.bf16.msra.mxu0 %v995
    %1591 = vmatprep.subr.bf16.mxu0 %v1000
    %1592 = vmatpush1.bf16.msra.mxu0 %v999
    %1593 = vmatprep.mubr.bf16.mxu0 %v1519
    %1594 = vmatmul.mubr.bf16.gmra.mrb[0].mxu0 %v1518
    %v1595 = vpop.f32.mrb[0].mxu0
    %v1596 = vadd.f32 %v736, %v1595
    %v1597 = vpop.f32.mrb[0].mxu0
    %v1598 = vadd.f32 %v740, %v1597
    %v1599 = vpop.f32.mrb[0].mxu0
    %v1600 = vpop.f32.mrb[0].mxu0
    %1601 = vdwg.mxu0
    %v1602 = vxor.u32 %v1555, 2147483648
    %v1603 = vxor.u32 %v1557, 2147483648
    %v1604 = vxor.u32 %v1596, 2147483648
    %v1605 = vmul.f32 %v1602, 1.442695
    %v1606 = vpow.pop %v1605
    %v1607 = vmul.f32 %v1603, 1.442695
    %v1608 = vpow.pop %v1607
    %v1609 = vmul.f32 %v1604, 1.442695
    %v1610 = vpow.pop %v1609
    %v1611 = vadd.f32 %v1606, 1.0
    %v1612 = vadd.f32 %v1608, 1.0
    %v1613 = vadd.f32 %v1610, 1.0
    %v1614 = vrcp.pop %v1611
    %v1615 = vmul.f32 1.0, %v1614
    %v1616 = vrcp.pop %v1612
    %v1617 = vmul.f32 1.0, %v1616
    %v1618 = vrcp.pop %v1613
    %v1619 = vmul.f32 1.0, %v1618
    %v1620 = vtanh.pop %v1598
    %v1621 = vmul.f32 %v1617, %v1517
    %v1622 = vmul.f32 %v1615, %v1620
    %v1623 = vadd.f32 %v1621, %v1622
    %v1624 = vtanh.pop %v1623
    %v1625 = vmul.f32 %v1619, %v1624
    %1626 = vst [vmem:[%s718] sm:$0xff] %v1625
    %1627 = vst [vmem:[%s720] sm:$0xff] %v1623
    %s1628 = scalar_lea.vmem [#allocation16], 16
    %1629 = vst [vmem:[%s1628] sm:$0xff] %v1625
    %s1630 = scalar_lea.vmem [#allocation4], 24
    %v1631 = vld [vmem:[%s1630] sm:$0xff]
    %v1632 = vld [vmem:[#allocation2] sm:$0xff]
    %v1633 = vld [vmem:[#allocation3] sm:$0xff]
    %v1634 = vpack.c.bf16 %v1631, %v1631
    %v1635 = vpack.c.bf16 %v1632, %v1632
    %1636 = vmatprep.subr.bf16.mxu0 %v483
    %1637 = vmatpush1.bf16.msra.mxu0 %v482
    %1638 = vmatprep.subr.bf16.mxu0 %v487
    %1639 = vmatpush1.bf16.msra.mxu0 %v486
    %1640 = vmatprep.subr.bf16.mxu0 %v491
    %1641 = vmatpush1.bf16.msra.mxu0 %v490
    %1642 = vmatprep.subr.bf16.mxu0 %v495
    %1643 = vmatpush1.bf16.msra.mxu0 %v494
    %1644 = vmatprep.subr.bf16.mxu0 %v499
    %1645 = vmatpush1.bf16.msra.mxu0 %v498
    %1646 = vmatprep.subr.bf16.mxu0 %v503
    %1647 = vmatpush1.bf16.msra.mxu0 %v502
    %1648 = vmatprep.subr.bf16.mxu0 %v507
    %1649 = vmatpush1.bf16.msra.mxu0 %v506
    %1650 = vmatprep.subr.bf16.mxu0 %v511
    %1651 = vmatpush1.bf16.msra.mxu0 %v510
    %1652 = vmatprep.subr.bf16.mxu0 %v515
    %1653 = vmatpush1.bf16.msra.mxu0 %v514
    %1654 = vmatprep.subr.bf16.mxu0 %v519
    %1655 = vmatpush1.bf16.msra.mxu0 %v518
    %1656 = vmatprep.subr.bf16.mxu0 %v523
    %1657 = vmatpush1.bf16.msra.mxu0 %v522
    %1658 = vmatprep.subr.bf16.mxu0 %v527
    %1659 = vmatpush1.bf16.msra.mxu0 %v526
    %1660 = vmatprep.subr.bf16.mxu0 %v531
    %1661 = vmatpush1.bf16.msra.mxu0 %v530
    %1662 = vmatprep.subr.bf16.mxu0 %v535
    %1663 = vmatpush1.bf16.msra.mxu0 %v534
    %1664 = vmatprep.subr.bf16.mxu0 %v539
    %1665 = vmatpush1.bf16.msra.mxu0 %v538
    %1666 = vmatprep.subr.bf16.mxu0 %v543
    %1667 = vmatpush1.bf16.msra.mxu0 %v542
    %1668 = vmatprep.mubr.bf16.mxu0 %v1635
    %1669 = vmatmul.mubr.bf16.gmra.mrb[0].mxu0 %v1634
    %v1670 = vpop.f32.mrb[0].mxu0
    %v1671 = vadd.f32 %v273, %v1670
    %v1672 = vpop.f32.mrb[0].mxu0
    %v1673 = vadd.f32 %v277, %v1672
    %v1674 = vpop.f32.mrb[0].mxu0
    %v1675 = vpop.f32.mrb[0].mxu0
    %1676 = vdwg.mxu0
    %1677 = vmatprep.subr.bf16.mxu0 %v485
    %1678 = vmatpush1.bf16.msra.mxu0 %v484
    %1679 = vmatprep.subr.bf16.mxu0 %v489
    %1680 = vmatpush1.bf16.msra.mxu0 %v488
    %1681 = vmatprep.subr.bf16.mxu0 %v493
    %1682 = vmatpush1.bf16.msra.mxu0 %v492
    %1683 = vmatprep.subr.bf16.mxu0 %v497
    %1684 = vmatpush1.bf16.msra.mxu0 %v496
    %1685 = vmatprep.subr.bf16.mxu0 %v501
    %1686 = vmatpush1.bf16.msra.mxu0 %v500
    %1687 = vmatprep.subr.bf16.mxu0 %v505
    %1688 = vmatpush1.bf16.msra.mxu0 %v504
    %1689 = vmatprep.subr.bf16.mxu0 %v509
    %1690 = vmatpush1.bf16.msra.mxu0 %v508
    %1691 = vmatprep.subr.bf16.mxu0 %v513
    %1692 = vmatpush1.bf16.msra.mxu0 %v512
    %1693 = vmatprep.subr.bf16.mxu0 %v517
    %1694 = vmatpush1.bf16.msra.mxu0 %v516
    %1695 = vmatprep.subr.bf16.mxu0 %v521
    %1696 = vmatpush1.bf16.msra.mxu0 %v520
    %1697 = vmatprep.subr.bf16.mxu0 %v525
    %1698 = vmatpush1.bf16.msra.mxu0 %v524
    %1699 = vmatprep.subr.bf16.mxu0 %v529
    %1700 = vmatpush1.bf16.msra.mxu0 %v528
    %1701 = vmatprep.subr.bf16.mxu0 %v533
    %1702 = vmatpush1.bf16.msra.mxu0 %v532
    %1703 = vmatprep.subr.bf16.mxu0 %v537
    %1704 = vmatpush1.bf16.msra.mxu0 %v536
    %1705 = vmatprep.subr.bf16.mxu0 %v541
    %1706 = vmatpush1.bf16.msra.mxu0 %v540
    %1707 = vmatprep.subr.bf16.mxu0 %v545
    %1708 = vmatpush1.bf16.msra.mxu0 %v544
    %1709 = vmatprep.mubr.bf16.mxu0 %v1635
    %1710 = vmatmul.mubr.bf16.gmra.mrb[0].mxu0 %v1634
    %v1711 = vpop.f32.mrb[0].mxu0
    %v1712 = vadd.f32 %v281, %v1711
    %v1713 = vpop.f32.mrb[0].mxu0
    %v1714 = vadd.f32 %v285, %v1713
    %v1715 = vpop.f32.mrb[0].mxu0
    %v1716 = vpop.f32.mrb[0].mxu0
    %1717 = vdwg.mxu0
    %v1718 = vxor.u32 %v1671, 2147483648
    %v1719 = vxor.u32 %v1673, 2147483648
    %v1720 = vxor.u32 %v1712, 2147483648
    %v1721 = vmul.f32 %v1718, 1.442695
    %v1722 = vpow.pop %v1721
    %v1723 = vmul.f32 %v1719, 1.442695
    %v1724 = vpow.pop %v1723
    %v1725 = vmul.f32 %v1720, 1.442695
    %v1726 = vpow.pop %v1725
    %v1727 = vadd.f32 %v1722, 1.0
    %v1728 = vadd.f32 %v1724, 1.0
    %v1729 = vadd.f32 %v1726, 1.0
    %v1730 = vrcp.pop %v1727
    %v1731 = vmul.f32 1.0, %v1730
    %v1732 = vrcp.pop %v1728
    %v1733 = vmul.f32 1.0, %v1732
    %v1734 = vrcp.pop %v1729
    %v1735 = vmul.f32 1.0, %v1734
    %v1736 = vtanh.pop %v1714
    %v1737 = vmul.f32 %v1733, %v1633
    %v1738 = vmul.f32 %v1731, %v1736
    %v1739 = vadd.f32 %v1737, %v1738
    %v1740 = vtanh.pop %v1739
    %v1741 = vmul.f32 %v1735, %v1740
    %1742 = vst [vmem:[#allocation2] sm:$0xff] %v1741
    %1743 = vst [vmem:[#allocation3] sm:$0xff] %v1739
    %v1744 = vld [vmem:[%s718] sm:$0xff]
    %v1745 = vld [vmem:[%s720] sm:$0xff]
    %v1746 = vpack.c.bf16 %v1741, %v1741
    %v1747 = vpack.c.bf16 %v1744, %v1744
    %1748 = vmatprep.subr.bf16.mxu0 %v938
    %1749 = vmatpush1.bf16.msra.mxu0 %v937
    %1750 = vmatprep.subr.bf16.mxu0 %v942
    %1751 = vmatpush1.bf16.msra.mxu0 %v941
    %1752 = vmatprep.subr.bf16.mxu0 %v946
    %1753 = vmatpush1.bf16.msra.mxu0 %v945
    %1754 = vmatprep.subr.bf16.mxu0 %v950
    %1755 = vmatpush1.bf16.msra.mxu0 %v949
    %1756 = vmatprep.subr.bf16.mxu0 %v954
    %1757 = vmatpush1.bf16.msra.mxu0 %v953
    %1758 = vmatprep.subr.bf16.mxu0 %v958
    %1759 = vmatpush1.bf16.msra.mxu0 %v957
    %1760 = vmatprep.subr.bf16.mxu0 %v962
    %1761 = vmatpush1.bf16.msra.mxu0 %v961
    %1762 = vmatprep.subr.bf16.mxu0 %v966
    %1763 = vmatpush1.bf16.msra.mxu0 %v965
    %1764 = vmatprep.subr.bf16.mxu0 %v970
    %1765 = vmatpush1.bf16.msra.mxu0 %v969
    %1766 = vmatprep.subr.bf16.mxu0 %v974
    %1767 = vmatpush1.bf16.msra.mxu0 %v973
    %1768 = vmatprep.subr.bf16.mxu0 %v978
    %1769 = vmatpush1.bf16.msra.mxu0 %v977
    %1770 = vmatprep.subr.bf16.mxu0 %v982
    %1771 = vmatpush1.bf16.msra.mxu0 %v981
    %1772 = vmatprep.subr.bf16.mxu0 %v986
    %1773 = vmatpush1.bf16.msra.mxu0 %v985
    %1774 = vmatprep.subr.bf16.mxu0 %v990
    %1775 = vmatpush1.bf16.msra.mxu0 %v989
    %1776 = vmatprep.subr.bf16.mxu0 %v994
    %1777 = vmatpush1.bf16.msra.mxu0 %v993
    %1778 = vmatprep.subr.bf16.mxu0 %v998
    %1779 = vmatpush1.bf16.msra.mxu0 %v997
    %1780 = vmatprep.mubr.bf16.mxu0 %v1747
    %1781 = vmatmul.mubr.bf16.gmra.mrb[0].mxu0 %v1746
    %v1782 = vpop.f32.mrb[0].mxu0
    %v1783 = vadd.f32 %v728, %v1782
    %v1784 = vpop.f32.mrb[0].mxu0
    %v1785 = vadd.f32 %v732, %v1784
    %v1786 = vpop.f32.mrb[0].mxu0
    %v1787 = vpop.f32.mrb[0].mxu0
    %1788 = vdwg.mxu0
    %1789 = vmatprep.subr.bf16.mxu0 %v940
    %1790 = vmatpush1.bf16.msra.mxu0 %v939
    %1791 = vmatprep.subr.bf16.mxu0 %v944
    %1792 = vmatpush1.bf16.msra.mxu0 %v943
    %1793 = vmatprep.subr.bf16.mxu0 %v948
    %1794 = vmatpush1.bf16.msra.mxu0 %v947
    %1795 = vmatprep.subr.bf16.mxu0 %v952
    %1796 = vmatpush1.bf16.msra.mxu0 %v951
    %1797 = vmatprep.subr.bf16.mxu0 %v956
    %1798 = vmatpush1.bf16.msra.mxu0 %v955
    %1799 = vmatprep.subr.bf16.mxu0 %v960
    %1800 = vmatpush1.bf16.msra.mxu0 %v959
    %1801 = vmatprep.subr.bf16.mxu0 %v964
    %1802 = vmatpush1.bf16.msra.mxu0 %v963
    %1803 = vmatprep.subr.bf16.mxu0 %v968
    %1804 = vmatpush1.bf16.msra.mxu0 %v967
    %1805 = vmatprep.subr.bf16.mxu0 %v972
    %1806 = vmatpush1.bf16.msra.mxu0 %v971
    %1807 = vmatprep.subr.bf16.mxu0 %v976
    %1808 = vmatpush1.bf16.msra.mxu0 %v975
    %1809 = vmatprep.subr.bf16.mxu0 %v980
    %1810 = vmatpush1.bf16.msra.mxu0 %v979
    %1811 = vmatprep.subr.bf16.mxu0 %v984
    %1812 = vmatpush1.bf16.msra.mxu0 %v983
    %1813 = vmatprep.subr.bf16.mxu0 %v988
    %1814 = vmatpush1.bf16.msra.mxu0 %v987
    %1815 = vmatprep.subr.bf16.mxu0 %v992
    %1816 = vmatpush1.bf16.msra.mxu0 %v991
    %1817 = vmatprep.subr.bf16.mxu0 %v996
    %1818 = vmatpush1.bf16.msra.mxu0 %v995
    %1819 = vmatprep.subr.bf16.mxu0 %v1000
    %1820 = vmatpush1.bf16.msra.mxu0 %v999
    %1821 = vmatprep.mubr.bf16.mxu0 %v1747
    %1822 = vmatmul.mubr.bf16.gmra.mrb[0].mxu0 %v1746
    %v1823 = vpop.f32.mrb[0].mxu0
    %v1824 = vadd.f32 %v736, %v1823
    %v1825 = vpop.f32.mrb[0].mxu0
    %v1826 = vadd.f32 %v740, %v1825
    %v1827 = vpop.f32.mrb[0].mxu0
    %v1828 = vpop.f32.mrb[0].mxu0
    %1829 = vdwg.mxu0
    %v1830 = vxor.u32 %v1783, 2147483648
    %v1831 = vxor.u32 %v1785, 2147483648
    %v1832 = vxor.u32 %v1824, 2147483648
    %v1833 = vmul.f32 %v1830, 1.442695
    %v1834 = vpow.pop %v1833
    %v1835 = vmul.f32 %v1831, 1.442695
    %v1836 = vpow.pop %v1835
    %v1837 = vmul.f32 %v1832, 1.442695
    %v1838 = vpow.pop %v1837
    %v1839 = vadd.f32 %v1834, 1.0
    %v1840 = vadd.f32 %v1836, 1.0
    %v1841 = vadd.f32 %v1838, 1.0
    %v1842 = vrcp.pop %v1839
    %v1843 = vmul.f32 1.0, %v1842
    %v1844 = vrcp.pop %v1840
    %v1845 = vmul.f32 1.0, %v1844
    %v1846 = vrcp.pop %v1841
    %v1847 = vmul.f32 1.0, %v1846
    %v1848 = vtanh.pop %v1826
    %v1849 = vmul.f32 %v1845, %v1745
    %v1850 = vmul.f32 %v1843, %v1848
    %v1851 = vadd.f32 %v1849, %v1850
    %v1852 = vtanh.pop %v1851
    %v1853 = vmul.f32 %v1847, %v1852
    %1854 = vst [vmem:[%s718] sm:$0xff] %v1853
    %1855 = vst [vmem:[%s720] sm:$0xff] %v1851
    %s1856 = scalar_lea.vmem [#allocation16], 24
    %1857 = vst [vmem:[%s1856] sm:$0xff] %v1853
    %s1858 = scalar_lea.vmem [#allocation4], 32
    %v1859 = vld [vmem:[%s1858] sm:$0xff]
    %v1860 = vld [vmem:[#allocation2] sm:$0xff]
    %v1861 = vld [vmem:[#allocation3] sm:$0xff]
    %v1862 = vpack.c.bf16 %v1859, %v1859
    %v1863 = vpack.c.bf16 %v1860, %v1860
    %1864 = vmatprep.subr.bf16.mxu0 %v483
    %1865 = vmatpush1.bf16.msra.mxu0 %v482
    %1866 = vmatprep.subr.bf16.mxu0 %v487
    %1867 = vmatpush1.bf16.msra.mxu0 %v486
    %1868 = vmatprep.subr.bf16.mxu0 %v491
    %1869 = vmatpush1.bf16.msra.mxu0 %v490
    %1870 = vmatprep.subr.bf16.mxu0 %v495
    %1871 = vmatpush1.bf16.msra.mxu0 %v494
    %1872 = vmatprep.subr.bf16.mxu0 %v499
    %1873 = vmatpush1.bf16.msra.mxu0 %v498
    %1874 = vmatprep.subr.bf16.mxu0 %v503
    %1875 = vmatpush1.bf16.msra.mxu0 %v502
    %1876 = vmatprep.subr.bf16.mxu0 %v507
    %1877 = vmatpush1.bf16.msra.mxu0 %v506
    %1878 = vmatprep.subr.bf16.mxu0 %v511
    %1879 = vmatpush1.bf16.msra.mxu0 %v510
    %1880 = vmatprep.subr.bf16.mxu0 %v515
    %1881 = vmatpush1.bf16.msra.mxu0 %v514
    %1882 = vmatprep.subr.bf16.mxu0 %v519
    %1883 = vmatpush1.bf16.msra.mxu0 %v518
    %1884 = vmatprep.subr.bf16.mxu0 %v523
    %1885 = vmatpush1.bf16.msra.mxu0 %v522
    %1886 = vmatprep.subr.bf16.mxu0 %v527
    %1887 = vmatpush1.bf16.msra.mxu0 %v526
    %1888 = vmatprep.subr.bf16.mxu0 %v531
    %1889 = vmatpush1.bf16.msra.mxu0 %v530
    %1890 = vmatprep.subr.bf16.mxu0 %v535
    %1891 = vmatpush1.bf16.msra.mxu0 %v534
    %1892 = vmatprep.subr.bf16.mxu0 %v539
    %1893 = vmatpush1.bf16.msra.mxu0 %v538
    %1894 = vmatprep.subr.bf16.mxu0 %v543
    %1895 = vmatpush1.bf16.msra.mxu0 %v542
    %1896 = vmatprep.mubr.bf16.mxu0 %v1863
    %1897 = vmatmul.mubr.bf16.gmra.mrb[0].mxu0 %v1862
    %v1898 = vpop.f32.mrb[0].mxu0
    %v1899 = vadd.f32 %v273, %v1898
    %v1900 = vpop.f32.mrb[0].mxu0
    %v1901 = vadd.f32 %v277, %v1900
    %v1902 = vpop.f32.mrb[0].mxu0
    %v1903 = vpop.f32.mrb[0].mxu0
    %1904 = vdwg.mxu0
    %1905 = vmatprep.subr.bf16.mxu0 %v485
    %1906 = vmatpush1.bf16.msra.mxu0 %v484
    %1907 = vmatprep.subr.bf16.mxu0 %v489
    %1908 = vmatpush1.bf16.msra.mxu0 %v488
    %1909 = vmatprep.subr.bf16.mxu0 %v493
    %1910 = vmatpush1.bf16.msra.mxu0 %v492
    %1911 = vmatprep.subr.bf16.mxu0 %v497
    %1912 = vmatpush1.bf16.msra.mxu0 %v496
    %1913 = vmatprep.subr.bf16.mxu0 %v501
    %1914 = vmatpush1.bf16.msra.mxu0 %v500
    %1915 = vmatprep.subr.bf16.mxu0 %v505
    %1916 = vmatpush1.bf16.msra.mxu0 %v504
    %1917 = vmatprep.subr.bf16.mxu0 %v509
    %1918 = vmatpush1.bf16.msra.mxu0 %v508
    %1919 = vmatprep.subr.bf16.mxu0 %v513
    %1920 = vmatpush1.bf16.msra.mxu0 %v512
    %1921 = vmatprep.subr.bf16.mxu0 %v517
    %1922 = vmatpush1.bf16.msra.mxu0 %v516
    %1923 = vmatprep.subr.bf16.mxu0 %v521
    %1924 = vmatpush1.bf16.msra.mxu0 %v520
    %1925 = vmatprep.subr.bf16.mxu0 %v525
    %1926 = vmatpush1.bf16.msra.mxu0 %v524
    %1927 = vmatprep.subr.bf16.mxu0 %v529
    %1928 = vmatpush1.bf16.msra.mxu0 %v528
    %1929 = vmatprep.subr.bf16.mxu0 %v533
    %1930 = vmatpush1.bf16.msra.mxu0 %v532
    %1931 = vmatprep.subr.bf16.mxu0 %v537
    %1932 = vmatpush1.bf16.msra.mxu0 %v536
    %1933 = vmatprep.subr.bf16.mxu0 %v541
    %1934 = vmatpush1.bf16.msra.mxu0 %v540
    %1935 = vmatprep.subr.bf16.mxu0 %v545
    %1936 = vmatpush1.bf16.msra.mxu0 %v544
    %1937 = vmatprep.mubr.bf16.mxu0 %v1863
    %1938 = vmatmul.mubr.bf16.gmra.mrb[0].mxu0 %v1862
    %v1939 = vpop.f32.mrb[0].mxu0
    %v1940 = vadd.f32 %v281, %v1939
    %v1941 = vpop.f32.mrb[0].mxu0
    %v1942 = vadd.f32 %v285, %v1941
    %v1943 = vpop.f32.mrb[0].mxu0
    %v1944 = vpop.f32.mrb[0].mxu0
    %1945 = vdwg.mxu0
    %v1946 = vxor.u32 %v1899, 2147483648
    %v1947 = vxor.u32 %v1901, 2147483648
    %v1948 = vxor.u32 %v1940, 2147483648
    %v1949 = vmul.f32 %v1946, 1.442695
    %v1950 = vpow.pop %v1949
    %v1951 = vmul.f32 %v1947, 1.442695
    %v1952 = vpow.pop %v1951
    %v1953 = vmul.f32 %v1948, 1.442695
    %v1954 = vpow.pop %v1953
    %v1955 = vadd.f32 %v1950, 1.0
    %v1956 = vadd.f32 %v1952, 1.0
    %v1957 = vadd.f32 %v1954, 1.0
    %v1958 = vrcp.pop %v1955
    %v1959 = vmul.f32 1.0, %v1958
    %v1960 = vrcp.pop %v1956
    %v1961 = vmul.f32 1.0, %v1960
    %v1962 = vrcp.pop %v1957
    %v1963 = vmul.f32 1.0, %v1962
    %v1964 = vtanh.pop %v1942
    %v1965 = vmul.f32 %v1961, %v1861
    %v1966 = vmul.f32 %v1959, %v1964
    %v1967 = vadd.f32 %v1965, %v1966
    %v1968 = vtanh.pop %v1967
    %v1969 = vmul.f32 %v1963, %v1968
    %1970 = vst [vmem:[#allocation2] sm:$0xff] %v1969
    %1971 = vst [vmem:[#allocation3] sm:$0xff] %v1967
    %v1972 = vld [vmem:[%s718] sm:$0xff]
    %v1973 = vld [vmem:[%s720] sm:$0xff]
    %v1974 = vpack.c.bf16 %v1969, %v1969
    %v1975 = vpack.c.bf16 %v1972, %v1972
    %1976 = vmatprep.subr.bf16.mxu0 %v938
    %1977 = vmatpush1.bf16.msra.mxu0 %v937
    %1978 = vmatprep.subr.bf16.mxu0 %v942
    %1979 = vmatpush1.bf16.msra.mxu0 %v941
    %1980 = vmatprep.subr.bf16.mxu0 %v946
    %1981 = vmatpush1.bf16.msra.mxu0 %v945
    %1982 = vmatprep.subr.bf16.mxu0 %v950
    %1983 = vmatpush1.bf16.msra.mxu0 %v949
    %1984 = vmatprep.subr.bf16.mxu0 %v954
    %1985 = vmatpush1.bf16.msra.mxu0 %v953
    %1986 = vmatprep.subr.bf16.mxu0 %v958
    %1987 = vmatpush1.bf16.msra.mxu0 %v957
    %1988 = vmatprep.subr.bf16.mxu0 %v962
    %1989 = vmatpush1.bf16.msra.mxu0 %v961
    %1990 = vmatprep.subr.bf16.mxu0 %v966
    %1991 = vmatpush1.bf16.msra.mxu0 %v965
    %1992 = vmatprep.subr.bf16.mxu0 %v970
    %1993 = vmatpush1.bf16.msra.mxu0 %v969
    %1994 = vmatprep.subr.bf16.mxu0 %v974
    %1995 = vmatpush1.bf16.msra.mxu0 %v973
    %1996 = vmatprep.subr.bf16.mxu0 %v978
    %1997 = vmatpush1.bf16.msra.mxu0 %v977
    %1998 = vmatprep.subr.bf16.mxu0 %v982
    %1999 = vmatpush1.bf16.msra.mxu0 %v981
    %2000 = vmatprep.subr.bf16.mxu0 %v986
    %2001 = vmatpush1.bf16.msra.mxu0 %v985
    %2002 = vmatprep.subr.bf16.mxu0 %v990
    %2003 = vmatpush1.bf16.msra.mxu0 %v989
    %2004 = vmatprep.subr.bf16.mxu0 %v994
    %2005 = vmatpush1.bf16.msra.mxu0 %v993
    %2006 = vmatprep.subr.bf16.mxu0 %v998
    %2007 = vmatpush1.bf16.msra.mxu0 %v997
    %2008 = vmatprep.mubr.bf16.mxu0 %v1975
    %2009 = vmatmul.mubr.bf16.gmra.mrb[0].mxu0 %v1974
    %v2010 = vpop.f32.mrb[0].mxu0
    %v2011 = vadd.f32 %v728, %v2010
    %v2012 = vpop.f32.mrb[0].mxu0
    %v2013 = vadd.f32 %v732, %v2012
    %v2014 = vpop.f32.mrb[0].mxu0
    %v2015 = vpop.f32.mrb[0].mxu0
    %2016 = vdwg.mxu0
    %2017 = vmatprep.subr.bf16.mxu0 %v940
    %2018 = vmatpush1.bf16.msra.mxu0 %v939
    %2019 = vmatprep.subr.bf16.mxu0 %v944
    %2020 = vmatpush1.bf16.msra.mxu0 %v943
    %2021 = vmatprep.subr.bf16.mxu0 %v948
    %2022 = vmatpush1.bf16.msra.mxu0 %v947
    %2023 = vmatprep.subr.bf16.mxu0 %v952
    %2024 = vmatpush1.bf16.msra.mxu0 %v951
    %2025 = vmatprep.subr.bf16.mxu0 %v956
    %2026 = vmatpush1.bf16.msra.mxu0 %v955
    %2027 = vmatprep.subr.bf16.mxu0 %v960
    %2028 = vmatpush1.bf16.msra.mxu0 %v959
    %2029 = vmatprep.subr.bf16.mxu0 %v964
    %2030 = vmatpush1.bf16.msra.mxu0 %v963
    %2031 = vmatprep.subr.bf16.mxu0 %v968
    %2032 = vmatpush1.bf16.msra.mxu0 %v967
    %2033 = vmatprep.subr.bf16.mxu0 %v972
    %2034 = vmatpush1.bf16.msra.mxu0 %v971
    %2035 = vmatprep.subr.bf16.mxu0 %v976
    %2036 = vmatpush1.bf16.msra.mxu0 %v975
    %2037 = vmatprep.subr.bf16.mxu0 %v980
    %2038 = vmatpush1.bf16.msra.mxu0 %v979
    %2039 = vmatprep.subr.bf16.mxu0 %v984
    %2040 = vmatpush1.bf16.msra.mxu0 %v983
    %2041 = vmatprep.subr.bf16.mxu0 %v988
    %2042 = vmatpush1.bf16.msra.mxu0 %v987
    %2043 = vmatprep.subr.bf16.mxu0 %v992
    %2044 = vmatpush1.bf16.msra.mxu0 %v991
    %2045 = vmatprep.subr.bf16.mxu0 %v996
    %2046 = vmatpush1.bf16.msra.mxu0 %v995
    %2047 = vmatprep.subr.bf16.mxu0 %v1000
    %2048 = vmatpush1.bf16.msra.mxu0 %v999
    %2049 = vmatprep.mubr.bf16.mxu0 %v1975
    %2050 = vmatmul.mubr.bf16.gmra.mrb[0].mxu0 %v1974
    %v2051 = vpop.f32.mrb[0].mxu0
    %v2052 = vadd.f32 %v736, %v2051
    %v2053 = vpop.f32.mrb[0].mxu0
    %v2054 = vadd.f32 %v740, %v2053
    %v2055 = vpop.f32.mrb[0].mxu0
    %v2056 = vpop.f32.mrb[0].mxu0
    %2057 = vdwg.mxu0
    %v2058 = vxor.u32 %v2011, 2147483648
    %v2059 = vxor.u32 %v2013, 2147483648
    %v2060 = vxor.u32 %v2052, 2147483648
    %v2061 = vmul.f32 %v2058, 1.442695
    %v2062 = vpow.pop %v2061
    %v2063 = vmul.f32 %v2059, 1.442695
    %v2064 = vpow.pop %v2063
    %v2065 = vmul.f32 %v2060, 1.442695
    %v2066 = vpow.pop %v2065
    %v2067 = vadd.f32 %v2062, 1.0
    %v2068 = vadd.f32 %v2064, 1.0
    %v2069 = vadd.f32 %v2066, 1.0
    %v2070 = vrcp.pop %v2067
    %v2071 = vmul.f32 1.0, %v2070
    %v2072 = vrcp.pop %v2068
    %v2073 = vmul.f32 1.0, %v2072
    %v2074 = vrcp.pop %v2069
    %v2075 = vmul.f32 1.0, %v2074
    %v2076 = vtanh.pop %v2054
    %v2077 = vmul.f32 %v2073, %v1973
    %v2078 = vmul.f32 %v2071, %v2076
    %v2079 = vadd.f32 %v2077, %v2078
    %v2080 = vtanh.pop %v2079
    %v2081 = vmul.f32 %v2075, %v2080
    %2082 = vst [vmem:[%s718] sm:$0xff] %v2081
    %2083 = vst [vmem:[%s720] sm:$0xff] %v2079
    %s2084 = scalar_lea.vmem [#allocation16], 32
    %2085 = vst [vmem:[%s2084] sm:$0xff] %v2081
    %s2086 = scalar_lea.vmem [#allocation4], 40
    %v2087 = vld [vmem:[%s2086] sm:$0xff]
    %v2088 = vld [vmem:[#allocation2] sm:$0xff]
    %v2089 = vld [vmem:[#allocation3] sm:$0xff]
    %v2090 = vpack.c.bf16 %v2087, %v2087
    %v2091 = vpack.c.bf16 %v2088, %v2088
    %2092 = vmatprep.subr.bf16.mxu0 %v483
    %2093 = vmatpush1.bf16.msra.mxu0 %v482
    %2094 = vmatprep.subr.bf16.mxu0 %v487
    %2095 = vmatpush1.bf16.msra.mxu0 %v486
    %2096 = vmatprep.subr.bf16.mxu0 %v491
    %2097 = vmatpush1.bf16.msra.mxu0 %v490
    %2098 = vmatprep.subr.bf16.mxu0 %v495
    %2099 = vmatpush1.bf16.msra.mxu0 %v494
    %2100 = vmatprep.subr.bf16.mxu0 %v499
    %2101 = vmatpush1.bf16.msra.mxu0 %v498
    %2102 = vmatprep.subr.bf16.mxu0 %v503
    %2103 = vmatpush1.bf16.msra.mxu0 %v502
    %2104 = vmatprep.subr.bf16.mxu0 %v507
    %2105 = vmatpush1.bf16.msra.mxu0 %v506
    %2106 = vmatprep.subr.bf16.mxu0 %v511
    %2107 = vmatpush1.bf16.msra.mxu0 %v510
    %2108 = vmatprep.subr.bf16.mxu0 %v515
    %2109 = vmatpush1.bf16.msra.mxu0 %v514
    %2110 = vmatprep.subr.bf16.mxu0 %v519
    %2111 = vmatpush1.bf16.msra.mxu0 %v518
    %2112 = vmatprep.subr.bf16.mxu0 %v523
    %2113 = vmatpush1.bf16.msra.mxu0 %v522
    %2114 = vmatprep.subr.bf16.mxu0 %v527
    %2115 = vmatpush1.bf16.msra.mxu0 %v526
    %2116 = vmatprep.subr.bf16.mxu0 %v531
    %2117 = vmatpush1.bf16.msra.mxu0 %v530
    %2118 = vmatprep.subr.bf16.mxu0 %v535
    %2119 = vmatpush1.bf16.msra.mxu0 %v534
    %2120 = vmatprep.subr.bf16.mxu0 %v539
    %2121 = vmatpush1.bf16.msra.mxu0 %v538
    %2122 = vmatprep.subr.bf16.mxu0 %v543
    %2123 = vmatpush1.bf16.msra.mxu0 %v542
    %2124 = vmatprep.mubr.bf16.mxu0 %v2091
    %2125 = vmatmul.mubr.bf16.gmra.mrb[0].mxu0 %v2090
    %v2126 = vpop.f32.mrb[0].mxu0
    %v2127 = vadd.f32 %v273, %v2126
    %v2128 = vpop.f32.mrb[0].mxu0
    %v2129 = vadd.f32 %v277, %v2128
    %v2130 = vpop.f32.mrb[0].mxu0
    %v2131 = vpop.f32.mrb[0].mxu0
    %2132 = vdwg.mxu0
    %2133 = vmatprep.subr.bf16.mxu0 %v485
    %2134 = vmatpush1.bf16.msra.mxu0 %v484
    %2135 = vmatprep.subr.bf16.mxu0 %v489
    %2136 = vmatpush1.bf16.msra.mxu0 %v488
    %2137 = vmatprep.subr.bf16.mxu0 %v493
    %2138 = vmatpush1.bf16.msra.mxu0 %v492
    %2139 = vmatprep.subr.bf16.mxu0 %v497
    %2140 = vmatpush1.bf16.msra.mxu0 %v496
    %2141 = vmatprep.subr.bf16.mxu0 %v501
    %2142 = vmatpush1.bf16.msra.mxu0 %v500
    %2143 = vmatprep.subr.bf16.mxu0 %v505
    %2144 = vmatpush1.bf16.msra.mxu0 %v504
    %2145 = vmatprep.subr.bf16.mxu0 %v509
    %2146 = vmatpush1.bf16.msra.mxu0 %v508
    %2147 = vmatprep.subr.bf16.mxu0 %v513
    %2148 = vmatpush1.bf16.msra.mxu0 %v512
    %2149 = vmatprep.subr.bf16.mxu0 %v517
    %2150 = vmatpush1.bf16.msra.mxu0 %v516
    %2151 = vmatprep.subr.bf16.mxu0 %v521
    %2152 = vmatpush1.bf16.msra.mxu0 %v520
    %2153 = vmatprep.subr.bf16.mxu0 %v525
    %2154 = vmatpush1.bf16.msra.mxu0 %v524
    %2155 = vmatprep.subr.bf16.mxu0 %v529
    %2156 = vmatpush1.bf16.msra.mxu0 %v528
    %2157 = vmatprep.subr.bf16.mxu0 %v533
    %2158 = vmatpush1.bf16.msra.mxu0 %v532
    %2159 = vmatprep.subr.bf16.mxu0 %v537
    %2160 = vmatpush1.bf16.msra.mxu0 %v536
    %2161 = vmatprep.subr.bf16.mxu0 %v541
    %2162 = vmatpush1.bf16.msra.mxu0 %v540
    %2163 = vmatprep.subr.bf16.mxu0 %v545
    %2164 = vmatpush1.bf16.msra.mxu0 %v544
    %2165 = vmatprep.mubr.bf16.mxu0 %v2091
    %2166 = vmatmul.mubr.bf16.gmra.mrb[0].mxu0 %v2090
    %v2167 = vpop.f32.mrb[0].mxu0
    %v2168 = vadd.f32 %v281, %v2167
    %v2169 = vpop.f32.mrb[0].mxu0
    %v2170 = vadd.f32 %v285, %v2169
    %v2171 = vpop.f32.mrb[0].mxu0
    %v2172 = vpop.f32.mrb[0].mxu0
    %2173 = vdwg.mxu0
    %v2174 = vxor.u32 %v2127, 2147483648
    %v2175 = vxor.u32 %v2129, 2147483648
    %v2176 = vxor.u32 %v2168, 2147483648
    %v2177 = vmul.f32 %v2174, 1.442695
    %v2178 = vpow.pop %v2177
    %v2179 = vmul.f32 %v2175, 1.442695
    %v2180 = vpow.pop %v2179
    %v2181 = vmul.f32 %v2176, 1.442695
    %v2182 = vpow.pop %v2181
    %v2183 = vadd.f32 %v2178, 1.0
    %v2184 = vadd.f32 %v2180, 1.0
    %v2185 = vadd.f32 %v2182, 1.0
    %v2186 = vrcp.pop %v2183
    %v2187 = vmul.f32 1.0, %v2186
    %v2188 = vrcp.pop %v2184
    %v2189 = vmul.f32 1.0, %v2188
    %v2190 = vrcp.pop %v2185
    %v2191 = vmul.f32 1.0, %v2190
    %v2192 = vtanh.pop %v2170
    %v2193 = vmul.f32 %v2189, %v2089
    %v2194 = vmul.f32 %v2187, %v2192
    %v2195 = vadd.f32 %v2193, %v2194
    %v2196 = vtanh.pop %v2195
    %v2197 = vmul.f32 %v2191, %v2196
    %2198 = vst [vmem:[#allocation2] sm:$0xff] %v2197
    %2199 = vst [vmem:[#allocation3] sm:$0xff] %v2195
    %v2200 = vld [vmem:[%s718] sm:$0xff]
    %v2201 = vld [vmem:[%s720] sm:$0xff]
    %v2202 = vpack.c.bf16 %v2197, %v2197
    %v2203 = vpack.c.bf16 %v2200, %v2200
    %2204 = vmatprep.subr.bf16.mxu0 %v938
    %2205 = vmatpush1.bf16.msra.mxu0 %v937
    %2206 = vmatprep.subr.bf16.mxu0 %v942
    %2207 = vmatpush1.bf16.msra.mxu0 %v941
    %2208 = vmatprep.subr.bf16.mxu0 %v946
    %2209 = vmatpush1.bf16.msra.mxu0 %v945
    %2210 = vmatprep.subr.bf16.mxu0 %v950
    %2211 = vmatpush1.bf16.msra.mxu0 %v949
    %2212 = vmatprep.subr.bf16.mxu0 %v954
    %2213 = vmatpush1.bf16.msra.mxu0 %v953
    %2214 = vmatprep.subr.bf16.mxu0 %v958
    %2215 = vmatpush1.bf16.msra.mxu0 %v957
    %2216 = vmatprep.subr.bf16.mxu0 %v962
    %2217 = vmatpush1.bf16.msra.mxu0 %v961
    %2218 = vmatprep.subr.bf16.mxu0 %v966
    %2219 = vmatpush1.bf16.msra.mxu0 %v965
    %2220 = vmatprep.subr.bf16.mxu0 %v970
    %2221 = vmatpush1.bf16.msra.mxu0 %v969
    %2222 = vmatprep.subr.bf16.mxu0 %v974
    %2223 = vmatpush1.bf16.msra.mxu0 %v973
    %2224 = vmatprep.subr.bf16.mxu0 %v978
    %2225 = vmatpush1.bf16.msra.mxu0 %v977
    %2226 = vmatprep.subr.bf16.mxu0 %v982
    %2227 = vmatpush1.bf16.msra.mxu0 %v981
    %2228 = vmatprep.subr.bf16.mxu0 %v986
    %2229 = vmatpush1.bf16.msra.mxu0 %v985
    %2230 = vmatprep.subr.bf16.mxu0 %v990
    %2231 = vmatpush1.bf16.msra.mxu0 %v989
    %2232 = vmatprep.subr.bf16.mxu0 %v994
    %2233 = vmatpush1.bf16.msra.mxu0 %v993
    %2234 = vmatprep.subr.bf16.mxu0 %v998
    %2235 = vmatpush1.bf16.msra.mxu0 %v997
    %2236 = vmatprep.mubr.bf16.mxu0 %v2203
    %2237 = vmatmul.mubr.bf16.gmra.mrb[0].mxu0 %v2202
    %v2238 = vpop.f32.mrb[0].mxu0
    %v2239 = vadd.f32 %v728, %v2238
    %v2240 = vpop.f32.mrb[0].mxu0
    %v2241 = vadd.f32 %v732, %v2240
    %v2242 = vpop.f32.mrb[0].mxu0
    %v2243 = vpop.f32.mrb[0].mxu0
    %2244 = vdwg.mxu0
    %2245 = vmatprep.subr.bf16.mxu0 %v940
    %2246 = vmatpush1.bf16.msra.mxu0 %v939
    %2247 = vmatprep.subr.bf16.mxu0 %v944
    %2248 = vmatpush1.bf16.msra.mxu0 %v943
    %2249 = vmatprep.subr.bf16.mxu0 %v948
    %2250 = vmatpush1.bf16.msra.mxu0 %v947
    %2251 = vmatprep.subr.bf16.mxu0 %v952
    %2252 = vmatpush1.bf16.msra.mxu0 %v951
    %2253 = vmatprep.subr.bf16.mxu0 %v956
    %2254 = vmatpush1.bf16.msra.mxu0 %v955
    %2255 = vmatprep.subr.bf16.mxu0 %v960
    %2256 = vmatpush1.bf16.msra.mxu0 %v959
    %2257 = vmatprep.subr.bf16.mxu0 %v964
    %2258 = vmatpush1.bf16.msra.mxu0 %v963
    %2259 = vmatprep.subr.bf16.mxu0 %v968
    %2260 = vmatpush1.bf16.msra.mxu0 %v967
    %2261 = vmatprep.subr.bf16.mxu0 %v972
    %2262 = vmatpush1.bf16.msra.mxu0 %v971
    %2263 = vmatprep.subr.bf16.mxu0 %v976
    %2264 = vmatpush1.bf16.msra.mxu0 %v975
    %2265 = vmatprep.subr.bf16.mxu0 %v980
    %2266 = vmatpush1.bf16.msra.mxu0 %v979
    %2267 = vmatprep.subr.bf16.mxu0 %v984
    %2268 = vmatpush1.bf16.msra.mxu0 %v983
    %2269 = vmatprep.subr.bf16.mxu0 %v988
    %2270 = vmatpush1.bf16.msra.mxu0 %v987
    %2271 = vmatprep.subr.bf16.mxu0 %v992
    %2272 = vmatpush1.bf16.msra.mxu0 %v991
    %2273 = vmatprep.subr.bf16.mxu0 %v996
    %2274 = vmatpush1.bf16.msra.mxu0 %v995
    %2275 = vmatprep.subr.bf16.mxu0 %v1000
    %2276 = vmatpush1.bf16.msra.mxu0 %v999
    %2277 = vmatprep.mubr.bf16.mxu0 %v2203
    %2278 = vmatmul.mubr.bf16.gmra.mrb[0].mxu0 %v2202
    %v2279 = vpop.f32.mrb[0].mxu0
    %v2280 = vadd.f32 %v736, %v2279
    %v2281 = vpop.f32.mrb[0].mxu0
    %v2282 = vadd.f32 %v740, %v2281
    %v2283 = vpop.f32.mrb[0].mxu0
    %v2284 = vpop.f32.mrb[0].mxu0
    %2285 = vdwg.mxu0
    %v2286 = vxor.u32 %v2239, 2147483648
    %v2287 = vxor.u32 %v2241, 2147483648
    %v2288 = vxor.u32 %v2280, 2147483648
    %v2289 = vmul.f32 %v2286, 1.442695
    %v2290 = vpow.pop %v2289
    %v2291 = vmul.f32 %v2287, 1.442695
    %v2292 = vpow.pop %v2291
    %v2293 = vmul.f32 %v2288, 1.442695
    %v2294 = vpow.pop %v2293
    %v2295 = vadd.f32 %v2290, 1.0
    %v2296 = vadd.f32 %v2292, 1.0
    %v2297 = vadd.f32 %v2294, 1.0
    %v2298 = vrcp.pop %v2295
    %v2299 = vmul.f32 1.0, %v2298
    %v2300 = vrcp.pop %v2296
    %v2301 = vmul.f32 1.0, %v2300
    %v2302 = vrcp.pop %v2297
    %v2303 = vmul.f32 1.0, %v2302
    %v2304 = vtanh.pop %v2282
    %v2305 = vmul.f32 %v2301, %v2201
    %v2306 = vmul.f32 %v2299, %v2304
    %v2307 = vadd.f32 %v2305, %v2306
    %v2308 = vtanh.pop %v2307
    %v2309 = vmul.f32 %v2303, %v2308
    %2310 = vst [vmem:[%s718] sm:$0xff] %v2309
    %2311 = vst [vmem:[%s720] sm:$0xff] %v2307
    %s2312 = scalar_lea.vmem [#allocation16], 40
    %2313 = vst [vmem:[%s2312] sm:$0xff] %v2309
    %s2314 = scalar_lea.vmem [#allocation4], 48
    %v2315 = vld [vmem:[%s2314] sm:$0xff]
    %v2316 = vld [vmem:[#allocation2] sm:$0xff]
    %v2317 = vld [vmem:[#allocation3] sm:$0xff]
    %v2318 = vpack.c.bf16 %v2315, %v2315
    %v2319 = vpack.c.bf16 %v2316, %v2316
    %2320 = vmatprep.subr.bf16.mxu0 %v483
    %2321 = vmatpush1.bf16.msra.mxu0 %v482
    %2322 = vmatprep.subr.bf16.mxu0 %v487
    %2323 = vmatpush1.bf16.msra.mxu0 %v486
    %2324 = vmatprep.subr.bf16.mxu0 %v491
    %2325 = vmatpush1.bf16.msra.mxu0 %v490
    %2326 = vmatprep.subr.bf16.mxu0 %v495
    %2327 = vmatpush1.bf16.msra.mxu0 %v494
    %2328 = vmatprep.subr.bf16.mxu0 %v499
    %2329 = vmatpush1.bf16.msra.mxu0 %v498
    %2330 = vmatprep.subr.bf16.mxu0 %v503
    %2331 = vmatpush1.bf16.msra.mxu0 %v502
    %2332 = vmatprep.subr.bf16.mxu0 %v507
    %2333 = vmatpush1.bf16.msra.mxu0 %v506
    %2334 = vmatprep.subr.bf16.mxu0 %v511
    %2335 = vmatpush1.bf16.msra.mxu0 %v510
    %2336 = vmatprep.subr.bf16.mxu0 %v515
    %2337 = vmatpush1.bf16.msra.mxu0 %v514
    %2338 = vmatprep.subr.bf16.mxu0 %v519
    %2339 = vmatpush1.bf16.msra.mxu0 %v518
    %2340 = vmatprep.subr.bf16.mxu0 %v523
    %2341 = vmatpush1.bf16.msra.mxu0 %v522
    %2342 = vmatprep.subr.bf16.mxu0 %v527
    %2343 = vmatpush1.bf16.msra.mxu0 %v526
    %2344 = vmatprep.subr.bf16.mxu0 %v531
    %2345 = vmatpush1.bf16.msra.mxu0 %v530
    %2346 = vmatprep.subr.bf16.mxu0 %v535
    %2347 = vmatpush1.bf16.msra.mxu0 %v534
    %2348 = vmatprep.subr.bf16.mxu0 %v539
    %2349 = vmatpush1.bf16.msra.mxu0 %v538
    %2350 = vmatprep.subr.bf16.mxu0 %v543
    %2351 = vmatpush1.bf16.msra.mxu0 %v542
    %2352 = vmatprep.mubr.bf16.mxu0 %v2319
    %2353 = vmatmul.mubr.bf16.gmra.mrb[0].mxu0 %v2318
    %v2354 = vpop.f32.mrb[0].mxu0
    %v2355 = vadd.f32 %v273, %v2354
    %v2356 = vpop.f32.mrb[0].mxu0
    %v2357 = vadd.f32 %v277, %v2356
    %v2358 = vpop.f32.mrb[0].mxu0
    %v2359 = vpop.f32.mrb[0].mxu0
    %2360 = vdwg.mxu0
    %2361 = vmatprep.subr.bf16.mxu0 %v485
    %2362 = vmatpush1.bf16.msra.mxu0 %v484
    %2363 = vmatprep.subr.bf16.mxu0 %v489
    %2364 = vmatpush1.bf16.msra.mxu0 %v488
    %2365 = vmatprep.subr.bf16.mxu0 %v493
    %2366 = vmatpush1.bf16.msra.mxu0 %v492
    %2367 = vmatprep.subr.bf16.mxu0 %v497
    %2368 = vmatpush1.bf16.msra.mxu0 %v496
    %2369 = vmatprep.subr.bf16.mxu0 %v501
    %2370 = vmatpush1.bf16.msra.mxu0 %v500
    %2371 = vmatprep.subr.bf16.mxu0 %v505
    %2372 = vmatpush1.bf16.msra.mxu0 %v504
    %2373 = vmatprep.subr.bf16.mxu0 %v509
    %2374 = vmatpush1.bf16.msra.mxu0 %v508
    %2375 = vmatprep.subr.bf16.mxu0 %v513
    %2376 = vmatpush1.bf16.msra.mxu0 %v512
    %2377 = vmatprep.subr.bf16.mxu0 %v517
    %2378 = vmatpush1.bf16.msra.mxu0 %v516
    %2379 = vmatprep.subr.bf16.mxu0 %v521
    %2380 = vmatpush1.bf16.msra.mxu0 %v520
    %2381 = vmatprep.subr.bf16.mxu0 %v525
    %2382 = vmatpush1.bf16.msra.mxu0 %v524
    %2383 = vmatprep.subr.bf16.mxu0 %v529
    %2384 = vmatpush1.bf16.msra.mxu0 %v528
    %2385 = vmatprep.subr.bf16.mxu0 %v533
    %2386 = vmatpush1.bf16.msra.mxu0 %v532
    %2387 = vmatprep.subr.bf16.mxu0 %v537
    %2388 = vmatpush1.bf16.msra.mxu0 %v536
    %2389 = vmatprep.subr.bf16.mxu0 %v541
    %2390 = vmatpush1.bf16.msra.mxu0 %v540
    %2391 = vmatprep.subr.bf16.mxu0 %v545
    %2392 = vmatpush1.bf16.msra.mxu0 %v544
    %2393 = vmatprep.mubr.bf16.mxu0 %v2319
    %2394 = vmatmul.mubr.bf16.gmra.mrb[0].mxu0 %v2318
    %v2395 = vpop.f32.mrb[0].mxu0
    %v2396 = vadd.f32 %v281, %v2395
    %v2397 = vpop.f32.mrb[0].mxu0
    %v2398 = vadd.f32 %v285, %v2397
    %v2399 = vpop.f32.mrb[0].mxu0
    %v2400 = vpop.f32.mrb[0].mxu0
    %2401 = vdwg.mxu0
    %v2402 = vxor.u32 %v2355, 2147483648
    %v2403 = vxor.u32 %v2357, 2147483648
    %v2404 = vxor.u32 %v2396, 2147483648
    %v2405 = vmul.f32 %v2402, 1.442695
    %v2406 = vpow.pop %v2405
    %v2407 = vmul.f32 %v2403, 1.442695
    %v2408 = vpow.pop %v2407
    %v2409 = vmul.f32 %v2404, 1.442695
    %v2410 = vpow.pop %v2409
    %v2411 = vadd.f32 %v2406, 1.0
    %v2412 = vadd.f32 %v2408, 1.0
    %v2413 = vadd.f32 %v2410, 1.0
    %v2414 = vrcp.pop %v2411
    %v2415 = vmul.f32 1.0, %v2414
    %v2416 = vrcp.pop %v2412
    %v2417 = vmul.f32 1.0, %v2416
    %v2418 = vrcp.pop %v2413
    %v2419 = vmul.f32 1.0, %v2418
    %v2420 = vtanh.pop %v2398
    %v2421 = vmul.f32 %v2417, %v2317
    %v2422 = vmul.f32 %v2415, %v2420
    %v2423 = vadd.f32 %v2421, %v2422
    %v2424 = vtanh.pop %v2423
    %v2425 = vmul.f32 %v2419, %v2424
    %2426 = vst [vmem:[#allocation2] sm:$0xff] %v2425
    %2427 = vst [vmem:[#allocation3] sm:$0xff] %v2423
    %v2428 = vld [vmem:[%s718] sm:$0xff]
    %v2429 = vld [vmem:[%s720] sm:$0xff]
    %v2430 = vpack.c.bf16 %v2425, %v2425
    %v2431 = vpack.c.bf16 %v2428, %v2428
    %2432 = vmatprep.subr.bf16.mxu0 %v938
    %2433 = vmatpush1.bf16.msra.mxu0 %v937
    %2434 = vmatprep.subr.bf16.mxu0 %v942
    %2435 = vmatpush1.bf16.msra.mxu0 %v941
    %2436 = vmatprep.subr.bf16.mxu0 %v946
    %2437 = vmatpush1.bf16.msra.mxu0 %v945
    %2438 = vmatprep.subr.bf16.mxu0 %v950
    %2439 = vmatpush1.bf16.msra.mxu0 %v949
    %2440 = vmatprep.subr.bf16.mxu0 %v954
    %2441 = vmatpush1.bf16.msra.mxu0 %v953
    %2442 = vmatprep.subr.bf16.mxu0 %v958
    %2443 = vmatpush1.bf16.msra.mxu0 %v957
    %2444 = vmatprep.subr.bf16.mxu0 %v962
    %2445 = vmatpush1.bf16.msra.mxu0 %v961
    %2446 = vmatprep.subr.bf16.mxu0 %v966
    %2447 = vmatpush1.bf16.msra.mxu0 %v965
    %2448 = vmatprep.subr.bf16.mxu0 %v970
    %2449 = vmatpush1.bf16.msra.mxu0 %v969
    %2450 = vmatprep.subr.bf16.mxu0 %v974
    %2451 = vmatpush1.bf16.msra.mxu0 %v973
    %2452 = vmatprep.subr.bf16.mxu0 %v978
    %2453 = vmatpush1.bf16.msra.mxu0 %v977
    %2454 = vmatprep.subr.bf16.mxu0 %v982
    %2455 = vmatpush1.bf16.msra.mxu0 %v981
    %2456 = vmatprep.subr.bf16.mxu0 %v986
    %2457 = vmatpush1.bf16.msra.mxu0 %v985
    %2458 = vmatprep.subr.bf16.mxu0 %v990
    %2459 = vmatpush1.bf16.msra.mxu0 %v989
    %2460 = vmatprep.subr.bf16.mxu0 %v994
    %2461 = vmatpush1.bf16.msra.mxu0 %v993
    %2462 = vmatprep.subr.bf16.mxu0 %v998
    %2463 = vmatpush1.bf16.msra.mxu0 %v997
    %2464 = vmatprep.mubr.bf16.mxu0 %v2431
    %2465 = vmatmul.mubr.bf16.gmra.mrb[0].mxu0 %v2430
    %v2466 = vpop.f32.mrb[0].mxu0
    %v2467 = vadd.f32 %v728, %v2466
    %v2468 = vpop.f32.mrb[0].mxu0
    %v2469 = vadd.f32 %v732, %v2468
    %v2470 = vpop.f32.mrb[0].mxu0
    %v2471 = vpop.f32.mrb[0].mxu0
    %2472 = vdwg.mxu0
    %2473 = vmatprep.subr.bf16.mxu0 %v940
    %2474 = vmatpush1.bf16.msra.mxu0 %v939
    %2475 = vmatprep.subr.bf16.mxu0 %v944
    %2476 = vmatpush1.bf16.msra.mxu0 %v943
    %2477 = vmatprep.subr.bf16.mxu0 %v948
    %2478 = vmatpush1.bf16.msra.mxu0 %v947
    %2479 = vmatprep.subr.bf16.mxu0 %v952
    %2480 = vmatpush1.bf16.msra.mxu0 %v951
    %2481 = vmatprep.subr.bf16.mxu0 %v956
    %2482 = vmatpush1.bf16.msra.mxu0 %v955
    %2483 = vmatprep.subr.bf16.mxu0 %v960
    %2484 = vmatpush1.bf16.msra.mxu0 %v959
    %2485 = vmatprep.subr.bf16.mxu0 %v964
    %2486 = vmatpush1.bf16.msra.mxu0 %v963
    %2487 = vmatprep.subr.bf16.mxu0 %v968
    %2488 = vmatpush1.bf16.msra.mxu0 %v967
    %2489 = vmatprep.subr.bf16.mxu0 %v972
    %2490 = vmatpush1.bf16.msra.mxu0 %v971
    %2491 = vmatprep.subr.bf16.mxu0 %v976
    %2492 = vmatpush1.bf16.msra.mxu0 %v975
    %2493 = vmatprep.subr.bf16.mxu0 %v980
    %2494 = vmatpush1.bf16.msra.mxu0 %v979
    %2495 = vmatprep.subr.bf16.mxu0 %v984
    %2496 = vmatpush1.bf16.msra.mxu0 %v983
    %2497 = vmatprep.subr.bf16.mxu0 %v988
    %2498 = vmatpush1.bf16.msra.mxu0 %v987
    %2499 = vmatprep.subr.bf16.mxu0 %v992
    %2500 = vmatpush1.bf16.msra.mxu0 %v991
    %2501 = vmatprep.subr.bf16.mxu0 %v996
    %2502 = vmatpush1.bf16.msra.mxu0 %v995
    %2503 = vmatprep.subr.bf16.mxu0 %v1000
    %2504 = vmatpush1.bf16.msra.mxu0 %v999
    %2505 = vmatprep.mubr.bf16.mxu0 %v2431
    %2506 = vmatmul.mubr.bf16.gmra.mrb[0].mxu0 %v2430
    %v2507 = vpop.f32.mrb[0].mxu0
    %v2508 = vadd.f32 %v736, %v2507
    %v2509 = vpop.f32.mrb[0].mxu0
    %v2510 = vadd.f32 %v740, %v2509
    %v2511 = vpop.f32.mrb[0].mxu0
    %v2512 = vpop.f32.mrb[0].mxu0
    %2513 = vdwg.mxu0
    %v2514 = vxor.u32 %v2467, 2147483648
    %v2515 = vxor.u32 %v2469, 2147483648
    %v2516 = vxor.u32 %v2508, 2147483648
    %v2517 = vmul.f32 %v2514, 1.442695
    %v2518 = vpow.pop %v2517
    %v2519 = vmul.f32 %v2515, 1.442695
    %v2520 = vpow.pop %v2519
    %v2521 = vmul.f32 %v2516, 1.442695
    %v2522 = vpow.pop %v2521
    %v2523 = vadd.f32 %v2518, 1.0
    %v2524 = vadd.f32 %v2520, 1.0
    %v2525 = vadd.f32 %v2522, 1.0
    %v2526 = vrcp.pop %v2523
    %v2527 = vmul.f32 1.0, %v2526
    %v2528 = vrcp.pop %v2524
    %v2529 = vmul.f32 1.0, %v2528
    %v2530 = vrcp.pop %v2525
    %v2531 = vmul.f32 1.0, %v2530
    %v2532 = vtanh.pop %v2510
    %v2533 = vmul.f32 %v2529, %v2429
    %v2534 = vmul.f32 %v2527, %v2532
    %v2535 = vadd.f32 %v2533, %v2534
    %v2536 = vtanh.pop %v2535
    %v2537 = vmul.f32 %v2531, %v2536
    %2538 = vst [vmem:[%s718] sm:$0xff] %v2537
    %2539 = vst [vmem:[%s720] sm:$0xff] %v2535
    %s2540 = scalar_lea.vmem [#allocation16], 48
    %2541 = vst [vmem:[%s2540] sm:$0xff] %v2537
    %s2542 = scalar_lea.vmem [#allocation4], 56
    %v2543 = vld [vmem:[%s2542] sm:$0xff]
    %v2544 = vld [vmem:[#allocation2] sm:$0xff]
    %v2545 = vld [vmem:[#allocation3] sm:$0xff]
    %v2546 = vpack.c.bf16 %v2543, %v2543
    %v2547 = vpack.c.bf16 %v2544, %v2544
    %2548 = vmatprep.subr.bf16.mxu0 %v483
    %2549 = vmatpush1.bf16.msra.mxu0 %v482
    %2550 = vmatprep.subr.bf16.mxu0 %v487
    %2551 = vmatpush1.bf16.msra.mxu0 %v486
    %2552 = vmatprep.subr.bf16.mxu0 %v491
    %2553 = vmatpush1.bf16.msra.mxu0 %v490
    %2554 = vmatprep.subr.bf16.mxu0 %v495
    %2555 = vmatpush1.bf16.msra.mxu0 %v494
    %2556 = vmatprep.subr.bf16.mxu0 %v499
    %2557 = vmatpush1.bf16.msra.mxu0 %v498
    %2558 = vmatprep.subr.bf16.mxu0 %v503
    %2559 = vmatpush1.bf16.msra.mxu0 %v502
    %2560 = vmatprep.subr.bf16.mxu0 %v507
    %2561 = vmatpush1.bf16.msra.mxu0 %v506
    %2562 = vmatprep.subr.bf16.mxu0 %v511
    %2563 = vmatpush1.bf16.msra.mxu0 %v510
    %2564 = vmatprep.subr.bf16.mxu0 %v515
    %2565 = vmatpush1.bf16.msra.mxu0 %v514
    %2566 = vmatprep.subr.bf16.mxu0 %v519
    %2567 = vmatpush1.bf16.msra.mxu0 %v518
    %2568 = vmatprep.subr.bf16.mxu0 %v523
    %2569 = vmatpush1.bf16.msra.mxu0 %v522
    %2570 = vmatprep.subr.bf16.mxu0 %v527
    %2571 = vmatpush1.bf16.msra.mxu0 %v526
    %2572 = vmatprep.subr.bf16.mxu0 %v531
    %2573 = vmatpush1.bf16.msra.mxu0 %v530
    %2574 = vmatprep.subr.bf16.mxu0 %v535
    %2575 = vmatpush1.bf16.msra.mxu0 %v534
    %2576 = vmatprep.subr.bf16.mxu0 %v539
    %2577 = vmatpush1.bf16.msra.mxu0 %v538
    %2578 = vmatprep.subr.bf16.mxu0 %v543
    %2579 = vmatpush1.bf16.msra.mxu0 %v542
    %2580 = vmatprep.mubr.bf16.mxu0 %v2547
    %2581 = vmatmul.mubr.bf16.gmra.mrb[0].mxu0 %v2546
    %v2582 = vpop.f32.mrb[0].mxu0
    %v2583 = vadd.f32 %v273, %v2582
    %v2584 = vpop.f32.mrb[0].mxu0
    %v2585 = vadd.f32 %v277, %v2584
    %v2586 = vpop.f32.mrb[0].mxu0
    %v2587 = vpop.f32.mrb[0].mxu0
    %2588 = vdwg.mxu0
    %2589 = vmatprep.subr.bf16.mxu0 %v485
    %2590 = vmatpush1.bf16.msra.mxu0 %v484
    %2591 = vmatprep.subr.bf16.mxu0 %v489
    %2592 = vmatpush1.bf16.msra.mxu0 %v488
    %2593 = vmatprep.subr.bf16.mxu0 %v493
    %2594 = vmatpush1.bf16.msra.mxu0 %v492
    %2595 = vmatprep.subr.bf16.mxu0 %v497
    %2596 = vmatpush1.bf16.msra.mxu0 %v496
    %2597 = vmatprep.subr.bf16.mxu0 %v501
    %2598 = vmatpush1.bf16.msra.mxu0 %v500
    %2599 = vmatprep.subr.bf16.mxu0 %v505
    %2600 = vmatpush1.bf16.msra.mxu0 %v504
    %2601 = vmatprep.subr.bf16.mxu0 %v509
    %2602 = vmatpush1.bf16.msra.mxu0 %v508
    %2603 = vmatprep.subr.bf16.mxu0 %v513
    %2604 = vmatpush1.bf16.msra.mxu0 %v512
    %2605 = vmatprep.subr.bf16.mxu0 %v517
    %2606 = vmatpush1.bf16.msra.mxu0 %v516
    %2607 = vmatprep.subr.bf16.mxu0 %v521
    %2608 = vmatpush1.bf16.msra.mxu0 %v520
    %2609 = vmatprep.subr.bf16.mxu0 %v525
    %2610 = vmatpush1.bf16.msra.mxu0 %v524
    %2611 = vmatprep.subr.bf16.mxu0 %v529
    %2612 = vmatpush1.bf16.msra.mxu0 %v528
    %2613 = vmatprep.subr.bf16.mxu0 %v533
    %2614 = vmatpush1.bf16.msra.mxu0 %v532
    %2615 = vmatprep.subr.bf16.mxu0 %v537
    %2616 = vmatpush1.bf16.msra.mxu0 %v536
    %2617 = vmatprep.subr.bf16.mxu0 %v541
    %2618 = vmatpush1.bf16.msra.mxu0 %v540
    %2619 = vmatprep.subr.bf16.mxu0 %v545
    %2620 = vmatpush1.bf16.msra.mxu0 %v544
    %2621 = vmatprep.mubr.bf16.mxu0 %v2547
    %2622 = vmatmul.mubr.bf16.gmra.mrb[0].mxu0 %v2546
    %v2623 = vpop.f32.mrb[0].mxu0
    %v2624 = vadd.f32 %v281, %v2623
    %v2625 = vpop.f32.mrb[0].mxu0
    %v2626 = vadd.f32 %v285, %v2625
    %v2627 = vpop.f32.mrb[0].mxu0
    %v2628 = vpop.f32.mrb[0].mxu0
    %2629 = vdwg.mxu0
    %v2630 = vxor.u32 %v2583, 2147483648
    %v2631 = vxor.u32 %v2585, 2147483648
    %v2632 = vxor.u32 %v2624, 2147483648
    %v2633 = vmul.f32 %v2630, 1.442695
    %v2634 = vpow.pop %v2633
    %v2635 = vmul.f32 %v2631, 1.442695
    %v2636 = vpow.pop %v2635
    %v2637 = vmul.f32 %v2632, 1.442695
    %v2638 = vpow.pop %v2637
    %v2639 = vadd.f32 %v2634, 1.0
    %v2640 = vadd.f32 %v2636, 1.0
    %v2641 = vadd.f32 %v2638, 1.0
    %v2642 = vrcp.pop %v2639
    %v2643 = vmul.f32 1.0, %v2642
    %v2644 = vrcp.pop %v2640
    %v2645 = vmul.f32 1.0, %v2644
    %v2646 = vrcp.pop %v2641
    %v2647 = vmul.f32 1.0, %v2646
    %v2648 = vtanh.pop %v2626
    %v2649 = vmul.f32 %v2645, %v2545
    %v2650 = vmul.f32 %v2643, %v2648
    %v2651 = vadd.f32 %v2649, %v2650
    %v2652 = vtanh.pop %v2651
    %v2653 = vmul.f32 %v2647, %v2652
    %2654 = vst [vmem:[#allocation2] sm:$0xff] %v2653
    %2655 = vst [vmem:[#allocation3] sm:$0xff] %v2651
    %v2656 = vld [vmem:[%s718] sm:$0xff]
    %v2657 = vld [vmem:[%s720] sm:$0xff]
    %v2658 = vpack.c.bf16 %v2653, %v2653
    %v2659 = vpack.c.bf16 %v2656, %v2656
    %2660 = vmatprep.subr.bf16.mxu0 %v938
    %2661 = vmatpush1.bf16.msra.mxu0 %v937
    %2662 = vmatprep.subr.bf16.mxu0 %v942
    %2663 = vmatpush1.bf16.msra.mxu0 %v941
    %2664 = vmatprep.subr.bf16.mxu0 %v946
    %2665 = vmatpush1.bf16.msra.mxu0 %v945
    %2666 = vmatprep.subr.bf16.mxu0 %v950
    %2667 = vmatpush1.bf16.msra.mxu0 %v949
    %2668 = vmatprep.subr.bf16.mxu0 %v954
    %2669 = vmatpush1.bf16.msra.mxu0 %v953
    %2670 = vmatprep.subr.bf16.mxu0 %v958
    %2671 = vmatpush1.bf16.msra.mxu0 %v957
    %2672 = vmatprep.subr.bf16.mxu0 %v962
    %2673 = vmatpush1.bf16.msra.mxu0 %v961
    %2674 = vmatprep.subr.bf16.mxu0 %v966
    %2675 = vmatpush1.bf16.msra.mxu0 %v965
    %2676 = vmatprep.subr.bf16.mxu0 %v970
    %2677 = vmatpush1.bf16.msra.mxu0 %v969
    %2678 = vmatprep.subr.bf16.mxu0 %v974
    %2679 = vmatpush1.bf16.msra.mxu0 %v973
    %2680 = vmatprep.subr.bf16.mxu0 %v978
    %2681 = vmatpush1.bf16.msra.mxu0 %v977
    %2682 = vmatprep.subr.bf16.mxu0 %v982
    %2683 = vmatpush1.bf16.msra.mxu0 %v981
    %2684 = vmatprep.subr.bf16.mxu0 %v986
    %2685 = vmatpush1.bf16.msra.mxu0 %v985
    %2686 = vmatprep.subr.bf16.mxu0 %v990
    %2687 = vmatpush1.bf16.msra.mxu0 %v989
    %2688 = vmatprep.subr.bf16.mxu0 %v994
    %2689 = vmatpush1.bf16.msra.mxu0 %v993
    %2690 = vmatprep.subr.bf16.mxu0 %v998
    %2691 = vmatpush1.bf16.msra.mxu0 %v997
    %2692 = vmatprep.mubr.bf16.mxu0 %v2659
    %2693 = vmatmul.mubr.bf16.gmra.mrb[0].mxu0 %v2658
    %v2694 = vpop.f32.mrb[0].mxu0
    %v2695 = vadd.f32 %v728, %v2694
    %v2696 = vpop.f32.mrb[0].mxu0
    %v2697 = vadd.f32 %v732, %v2696
    %v2698 = vpop.f32.mrb[0].mxu0
    %v2699 = vpop.f32.mrb[0].mxu0
    %2700 = vdwg.mxu0
    %2701 = vmatprep.subr.bf16.mxu0 %v940
    %2702 = vmatpush1.bf16.msra.mxu0 %v939
    %2703 = vmatprep.subr.bf16.mxu0 %v944
    %2704 = vmatpush1.bf16.msra.mxu0 %v943
    %2705 = vmatprep.subr.bf16.mxu0 %v948
    %2706 = vmatpush1.bf16.msra.mxu0 %v947
    %2707 = vmatprep.subr.bf16.mxu0 %v952
    %2708 = vmatpush1.bf16.msra.mxu0 %v951
    %2709 = vmatprep.subr.bf16.mxu0 %v956
    %2710 = vmatpush1.bf16.msra.mxu0 %v955
    %2711 = vmatprep.subr.bf16.mxu0 %v960
    %2712 = vmatpush1.bf16.msra.mxu0 %v959
    %2713 = vmatprep.subr.bf16.mxu0 %v964
    %2714 = vmatpush1.bf16.msra.mxu0 %v963
    %2715 = vmatprep.subr.bf16.mxu0 %v968
    %2716 = vmatpush1.bf16.msra.mxu0 %v967
    %2717 = vmatprep.subr.bf16.mxu0 %v972
    %2718 = vmatpush1.bf16.msra.mxu0 %v971
    %2719 = vmatprep.subr.bf16.mxu0 %v976
    %2720 = vmatpush1.bf16.msra.mxu0 %v975
    %2721 = vmatprep.subr.bf16.mxu0 %v980
    %2722 = vmatpush1.bf16.msra.mxu0 %v979
    %2723 = vmatprep.subr.bf16.mxu0 %v984
    %2724 = vmatpush1.bf16.msra.mxu0 %v983
    %2725 = vmatprep.subr.bf16.mxu0 %v988
    %2726 = vmatpush1.bf16.msra.mxu0 %v987
    %2727 = vmatprep.subr.bf16.mxu0 %v992
    %2728 = vmatpush1.bf16.msra.mxu0 %v991
    %2729 = vmatprep.subr.bf16.mxu0 %v996
    %2730 = vmatpush1.bf16.msra.mxu0 %v995
    %2731 = vmatprep.subr.bf16.mxu0 %v1000
    %2732 = vmatpush1.bf16.msra.mxu0 %v999
    %2733 = vmatprep.mubr.bf16.mxu0 %v2659
    %2734 = vmatmul.mubr.bf16.gmra.mrb[0].mxu0 %v2658
    %v2735 = vpop.f32.mrb[0].mxu0
    %v2736 = vadd.f32 %v736, %v2735
    %v2737 = vpop.f32.mrb[0].mxu0
    %v2738 = vadd.f32 %v740, %v2737
    %v2739 = vpop.f32.mrb[0].mxu0
    %v2740 = vpop.f32.mrb[0].mxu0
    %2741 = vdwg.mxu0
    %v2742 = vxor.u32 %v2695, 2147483648
    %v2743 = vxor.u32 %v2697, 2147483648
    %v2744 = vxor.u32 %v2736, 2147483648
    %v2745 = vmul.f32 %v2742, 1.442695
    %v2746 = vpow.pop %v2745
    %v2747 = vmul.f32 %v2743, 1.442695
    %v2748 = vpow.pop %v2747
    %v2749 = vmul.f32 %v2744, 1.442695
    %v2750 = vpow.pop %v2749
    %v2751 = vadd.f32 %v2746, 1.0
    %v2752 = vadd.f32 %v2748, 1.0
    %v2753 = vadd.f32 %v2750, 1.0
    %v2754 = vrcp.pop %v2751
    %v2755 = vmul.f32 1.0, %v2754
    %v2756 = vrcp.pop %v2752
    %v2757 = vmul.f32 1.0, %v2756
    %v2758 = vrcp.pop %v2753
    %v2759 = vmul.f32 1.0, %v2758
    %v2760 = vtanh.pop %v2738
    %v2761 = vmul.f32 %v2757, %v2657
    %v2762 = vmul.f32 %v2755, %v2760
    %v2763 = vadd.f32 %v2761, %v2762
    %v2764 = vtanh.pop %v2763
    %v2765 = vmul.f32 %v2759, %v2764
    %2766 = vst [vmem:[%s718] sm:$0xff] %v2765
    %2767 = vst [vmem:[%s720] sm:$0xff] %v2763
    %s2768 = scalar_lea.vmem [#allocation16], 56
    %2769 = vst [vmem:[%s2768] sm:$0xff] %v2765
    // Predicated region
    $region62: #{tpu_custom_call.1} parent=1 // pred_check
      %p2770 = pneg %p122
    $region63: #{tpu_custom_call.1} parent=1 // pred_check_branch
      %2772 = sbr.rel (%p2770) target = $region65
    $region64: #{tpu_custom_call.1} parent=1 // pred_region
      %v2773 = vld [vmem:[#allocation2] sm:$0xff]
      %v2774 = vld [vmem:[#allocation2 + $0x8] sm:$0xff]
      %2775 = vst [vmem:[#allocation17] sm:$0xff] %v2773
      %2776 = vst [vmem:[#allocation17 + $0x8] sm:$0xff] %v2774
      %v2777 = vld [vmem:[#allocation3] sm:$0xff]
      %v2778 = vld [vmem:[#allocation3 + $0x8] sm:$0xff]
      %2779 = vst [vmem:[#allocation19] sm:$0xff] %v2777
      %2780 = vst [vmem:[#allocation19 + $0x8] sm:$0xff] %v2778
    $region65: #{tpu_custom_call.1} parent=1 // pred_fallthru
      _
    // Predicated region
    $region66: #{tpu_custom_call.1} parent=1 // pred_check
      _
    $region67: #{tpu_custom_call.1} parent=1 // pred_check_branch
      %2782 = sbr.rel (0) target = $region69
    $region68: #{tpu_custom_call.1} parent=1 // pred_region
      %s2784 = ssub.s32 1024, 1024
      %2785 = vsyncadd [#allocation6], %s2784
      %s2786 = sshll.u32 [#allocation16], 4
      %s2787 = int_to_ptr.vmem [resolvable:$true] %s2786
      %2792 = dma.vmem_to_hbm [thread:$0]  %s2787, 1024, %s7, [#allocation6], 128, 128, 8
    $region69: #{tpu_custom_call.1} parent=1 // pred_fallthru
      _
    // Predicated region
    $region70: #{tpu_custom_call.1} parent=1 // pred_check
      _
    $region71: #{tpu_custom_call.1} parent=1 // pred_check_branch
      %2794 = sbr.rel (0) target = $region73
    $region72: #{tpu_custom_call.1} parent=1 // pred_region
      %s2796 = ssub.s32 256, 256
      %2797 = vsyncadd [#allocation18], %s2796
      %s2798 = sshll.u32 [#allocation17], 4
      %s2799 = int_to_ptr.vmem [resolvable:$true] %s2798
      %2804 = dma.vmem_to_hbm [thread:$0]  %s2799, 256, %s8, [#allocation18], 128, 128, 8
    $region73: #{tpu_custom_call.1} parent=1 // pred_fallthru
      _
    // Predicated region
    $region74: #{tpu_custom_call.1} parent=1 // pred_check
      _
    $region75: #{tpu_custom_call.1} parent=1 // pred_check_branch
      %2806 = sbr.rel (0) target = $region77
    $region76: #{tpu_custom_call.1} parent=1 // pred_region
      %s2808 = ssub.s32 256, 256
      %2809 = vsyncadd [#allocation18], %s2808
      %s2810 = sshll.u32 [#allocation19], 4
      %s2811 = int_to_ptr.vmem [resolvable:$true] %s2810
      %2816 = dma.vmem_to_hbm [thread:$0]  %s2811, 256, %s9, [#allocation18], 128, 128, 8
    $region77: #{tpu_custom_call.1} parent=1 // pred_fallthru
      _
    // Predicated region
    $region78: #{tpu_custom_call.1} parent=1 // pred_check
      _
    $region79: #{tpu_custom_call.1} parent=1 // pred_check_branch
      %2818 = sbr.rel (0) target = $region81
    $region80: #{tpu_custom_call.1} parent=1 // pred_region
      %2819 = dma.done [#allocation6], 1024
    $region81: #{tpu_custom_call.1} parent=1 // pred_fallthru
      _
    // Predicated region
    $region82: #{tpu_custom_call.1} parent=1 // pred_check
      _
    $region83: #{tpu_custom_call.1} parent=1 // pred_check_branch
      %2821 = sbr.rel (0) target = $region85
    $region84: #{tpu_custom_call.1} parent=1 // pred_region
      %2822 = dma.done [#allocation18], 256
    $region85: #{tpu_custom_call.1} parent=1 // pred_fallthru
      _
    // Predicated region
    $region86: #{tpu_custom_call.1} parent=1 // pred_check
      _
    $region87: #{tpu_custom_call.1} parent=1 // pred_check_branch
      %2824 = sbr.rel (0) target = $region89
    $region88: #{tpu_custom_call.1} parent=1 // pred_region
      %2825 = dma.done [#allocation18], 256
    $region89: #{tpu_custom_call.1} parent=1 // pred_fallthru
      _
    %2826 = vsyncpa [#allocation5], 1
    %2827 = vsyncpa [#allocation8], 1
    %2828 = vsyncpa [#allocation11], 1
    %2829 = vsyncpa [#allocation14], 1
    %2830 = vsyncpa [#allocation6], 1
    %2831 = vsyncpa [#allocation18], 1

</llo_original>
